<compile_context>
chip_gen: v6e
topology: v6e:2x2x1
jax: 0.10.0
libtpu: 0.0.40
codegen_flags: <defaults>
</compile_context>

<pallas_src>
import functools

import jax
import jax.numpy as jnp
from jax.experimental import pallas as pl
from jax.experimental.pallas import tpu as pltpu

EP_RADIUS = [2.0, 4.0, 8.0, 16.0]
EP_NSAMPLE = [4, 8, 16, 32]
SUM_S = sum(EP_NSAMPLE)

LANE = 128                       # lane width: every weight is a (128,128) block
COMPUTE_DTYPE = jnp.bfloat16     # MXU operand dtype (accumulation stays f32)

# weight-blob block indices (each block is 128 rows of the packed blob)
W_ENC1, W_ENC2, W_ENC3, W_M2_1, W_M2_2, W_M2_3 = 0, 1, 2, 3, 4, 5
W_FP1L, W_FP1G, W_FP2, W_FP3, W_FPF = 6, 7, 8, 9, 10
N_WBLOCKS = 11
# bias-blob row indices
B_ENC1, B_ENC2, B_ENC3, B_M2_1, B_M2_2, B_M2_3 = 0, 1, 2, 3, 4, 5
B_FP1, B_FP2, B_FP3, B_FPF = 6, 7, 8, 9
N_BROWS = 16                     # padded to a multiple of 8


def _round8(x):
    return -(-x // 8) * 8


def _choose_tile(n):
    """Point-tile size: multiple of 8, aim for >=4 grid steps per batch, cap 128."""
    n8 = _round8(max(n, 8))
    t = (n8 // 4) // 8 * 8
    return max(8, min(128, t if t > 0 else 8))


# ----------------------------------------------------------------------------
# Fused kernel: all 4 scales + FlowPredictor, grid = (B, n_tiles)
# ----------------------------------------------------------------------------
def _fused_flow_kernel(g_ref, w_ref, b_ref, o_ref, h1_ref, pmax_ref, *,
                       tile_n, n_tiles, seg_offsets, nsamples, c3):
    """g_ref:(1, 60*T, 128) bf16 grouped rows for the current point tile.
    w_ref:(11*128, 128) bf16 packed block-diagonal weights.  b_ref:(16,128) f32
    biases.  o_ref:(1, N_pad, 128) lane-dense output (flow in cols 0:3).
    h1_ref:(N_pad,128) f32 FlowPredictor layer-1 local term.  pmax_ref:(1,128)
    f32 running global max of the encoder features."""
    t = pl.program_id(1)
    T = tile_n

    @pl.when(t == 0)
    def _():
        pmax_ref[...] = jnp.zeros_like(pmax_ref)

    def W(i):                                         # (128,128) bf16 weight block
        return w_ref[i * LANE:(i + 1) * LANE, :]

    def bias(i):                                      # (1,128) f32 bias row
        return b_ref[i:i + 1, :]

    def dense(x, wi, bi):                             # matmul (bf16) + bias + ReLU (f32)
        y = jnp.dot(x.astype(COMPUTE_DTYPE), W(wi),
                    preferred_element_type=jnp.float32)
        return jnp.maximum(y + bias(bi), 0.0)

    # ---- shared MLP over all neighbor rows of all 4 scales (merged weights) ----
    x = g_ref[0]                                      # (60*T, 128) bf16
    h = dense(x, W_ENC1, B_ENC1)
    h = dense(h, W_ENC2, B_ENC2)
    h = dense(h, W_ENC3, B_ENC3)                      # (60*T,128); scale si cols [si*c3,(si+1)*c3)

    # ---- per-scale neighbor max (pairwise tree), combined into disjoint lane blocks ----
    lane = jax.lax.broadcasted_iota(jnp.int32, (T, LANE), 1)
    pooled = jnp.zeros((T, LANE), jnp.float32)
    for si, (row0, S) in enumerate(zip(seg_offsets, nsamples)):
        m = h[row0:row0 + S * T]
        s = S
        while s > 1:                                  # S is a power of two
            s //= 2
            m = jnp.maximum(m[:s * T], m[s * T:2 * s * T])
        blk = (lane >= si * c3) & (lane < (si + 1) * c3)
        pooled = jnp.where(blk, m, pooled)            # (T,128), cols >= 4*c3 stay 0

    # ---- MLP2 (block-diagonal over scales); output == per-scale concat ----
    z = dense(pooled, W_M2_1, B_M2_1)
    z = dense(z, W_M2_2, B_M2_2)
    z = dense(z, W_M2_3, B_M2_3)                      # prop features (T,128)

    # ---- FlowPredictor: local half of layer 1 + running global max ----
    h1 = jnp.dot(z.astype(COMPUTE_DTYPE), W(W_FP1L),
                 preferred_element_type=jnp.float32)  # (T,128) f32
    start = pl.multiple_of(t * T, 8)
    h1_ref[pl.ds(start, T), :] = h1
    pmax_ref[...] = jnp.maximum(pmax_ref[...], jnp.max(z, axis=0, keepdims=True))

    # ---- finalize on the last point tile of this batch ----
    @pl.when(t == n_tiles - 1)
    def _():
        g1 = jnp.dot(pmax_ref[...].astype(COMPUTE_DTYPE), W(W_FP1G),
                     preferred_element_type=jnp.float32)          # (1,128)
        hh = jnp.maximum(h1_ref[...] + g1 + bias(B_FP1), 0.0)     # (N_pad,128)
        hh = dense(hh, W_FP2, B_FP2)
        hh = dense(hh, W_FP3, B_FP3)
        out = jnp.dot(hh.astype(COMPUTE_DTYPE), W(W_FPF),
                      preferred_element_type=jnp.float32) + bias(B_FPF)
        o_ref[0] = out                                            # cols 3..127 are exactly 0


def fused_flow_decoder(slab, wblob, bblob, *, tile_n, n_tiles, n_pad, c3):
    B = slab.shape[0]
    R = SUM_S * tile_n                               # grouped rows per point tile
    wrows, brows = wblob.shape[0], bblob.shape[0]

    seg_offsets, off = [], 0
    for s in EP_NSAMPLE:
        seg_offsets.append(off)
        off += s * tile_n

    kernel = functools.partial(
        _fused_flow_kernel, tile_n=tile_n, n_tiles=n_tiles,
        seg_offsets=tuple(seg_offsets), nsamples=tuple(EP_NSAMPLE), c3=c3)

    # Advisory cost estimate (matmul FLOPs dominate; no transcendentals).
    flops = int(B * (n_tiles * 2 * LANE * LANE * (3 * R + 4 * tile_n)
                     + 2 * LANE * LANE * 4 * n_pad))
    bytes_accessed = int(slab.size * 2 + wblob.size * 2 + bblob.size * 4
                         + B * n_pad * LANE * 4)

    # VMEM budget: double-buffered slab block + weights + output block + scratch
    # + headroom for f32 intermediates; keep well under v7x's 64 MiB.
    vmem_est = (2 * R * LANE * 2 + wrows * LANE * 2 + brows * LANE * 4
                + 2 * n_pad * LANE * 4 + n_pad * LANE * 4
                + 4 * R * LANE * 4)
    vmem_limit = int(min(max(vmem_est + (8 << 20), 32 << 20), 48 << 20))

    return pl.pallas_call(
        kernel,
        out_shape=jax.ShapeDtypeStruct((B, n_pad, LANE), jnp.float32),
        grid=(B, n_tiles),
        in_specs=[pl.BlockSpec((1, R, LANE), lambda b, t: (b, t, 0)),
                  pl.BlockSpec((wrows, LANE), lambda b, t: (0, 0)),
                  pl.BlockSpec((brows, LANE), lambda b, t: (0, 0))],
        out_specs=pl.BlockSpec((1, n_pad, LANE), lambda b, t: (b, 0, 0)),
        scratch_shapes=[pltpu.VMEM((n_pad, LANE), jnp.float32),
                        pltpu.VMEM((1, LANE), jnp.float32)],
        compiler_params=pltpu.CompilerParams(
            dimension_semantics=("parallel", "arbitrary"),
            vmem_limit_bytes=vmem_limit),
        cost_estimate=pl.CostEstimate(flops=flops, transcendentals=0,
                                      bytes_accessed=bytes_accessed),
    )(slab, wblob, bblob)


# ----------------------------------------------------------------------------
# Ball-query grouping (data-dependent neighbor search; stays in XLA)
# ----------------------------------------------------------------------------
# TODO(synk): move the neighbor gather in-kernel (scalar-prefetched indices +
# resident feature table) so HBM traffic is O(feats) instead of O(feats*sum(S)).
def query_and_group(xyz, feats, radius, nsample):
    """xyz:(B,N,3), feats:(B,N,C) -> (B, S, N, 3+C) with relative xyz.
    pointnet2 ball_query semantics: first `nsample` in-radius indices (index
    order), padded with the first found neighbor (self is always in-radius)."""
    B, N, _ = xyz.shape
    d2 = jnp.sum((xyz[:, :, None, :] - xyz[:, None, :, :]) ** 2, axis=-1)
    key = jnp.where(d2 < radius * radius,
                    jnp.arange(N, dtype=jnp.int32)[None, None, :], N)
    neg_small, _ = jax.lax.top_k(-key, nsample)          # S smallest keys, asc.
    idx = -neg_small                                     # (B,N,S)
    idx = jnp.where(idx < N, idx, idx[..., :1])          # pad with first found

    gather = jax.vmap(lambda a, i: a[i])                 # (N,C),(N,S)->(N,S,C)
    g_xyz = gather(xyz, idx) - xyz[:, :, None, :]        # relative coords
    g_feat = gather(feats, idx)
    grouped = jnp.concatenate([g_xyz, g_feat], axis=-1)  # (B,N,S,3+C)
    return jnp.transpose(grouped, (0, 2, 1, 3))          # (B,S,N,3+C)


# ----------------------------------------------------------------------------
# Synthetic parameters (eval-mode BN folded), packed into merged lane blocks
# ----------------------------------------------------------------------------
def init_flow_decoder_params(key, fc):
    # TODO(synk): fall back to per-scale (un-merged) weight blocks when fc_inch > 32.
    assert fc % 8 == 0 and 4 * fc <= LANE, "merged-lane packing assumes fc_inch <= 32"
    c1, c2, c3 = fc, fc // 2, fc // 8
    cin = 2 * fc + 6
    assert cin <= LANE
    cp = 4 * c3                                          # MultiScaleEncoder output channels
    sf1, sf2, sf3 = cp, cp // 2, cp // 4                 # FlowPredictor mlp widths

    keys = iter(jax.random.split(key, 40))

    def cbn(ci, co, conv_bias=True, bn=True):            # conv1x1 (+ folded eval BN)
        kw, kb = jax.random.split(next(keys))
        w = jax.random.normal(kw, (ci, co), jnp.float32) / jnp.sqrt(ci)
        b = (jax.random.normal(kb, (co,), jnp.float32) * 0.01) if conv_bias \
            else jnp.zeros((co,), jnp.float32)
        if bn:                                           # default running stats
            s = 1.0 / jnp.sqrt(1.0 + 1e-5)
            w, b = w * s, b * s
        return w, b

    W = [jnp.zeros((LANE, LANE), jnp.float32) for _ in range(N_WBLOCKS)]
    Bv = [jnp.zeros((LANE,), jnp.float32) for _ in range(10)]

    for si in range(len(EP_RADIUS)):
        w1, b1 = cbn(cin, c1)
        w2, b2 = cbn(c1, c2)
        w3, b3 = cbn(c2, c3)
        W[W_ENC1] = W[W_ENC1].at[:cin, si * c1:(si + 1) * c1].set(w1)
        Bv[B_ENC1] = Bv[B_ENC1].at[si * c1:(si + 1) * c1].set(b1)
        W[W_ENC2] = W[W_ENC2].at[si * c1:(si + 1) * c1, si * c2:(si + 1) * c2].set(w2)
        Bv[B_ENC2] = Bv[B_ENC2].at[si * c2:(si + 1) * c2].set(b2)
        W[W_ENC3] = W[W_ENC3].at[si * c2:(si + 1) * c2, si * c3:(si + 1) * c3].set(w3)
        Bv[B_ENC3] = Bv[B_ENC3].at[si * c3:(si + 1) * c3].set(b3)
        for li, (wi, bi) in enumerate(zip((W_M2_1, W_M2_2, W_M2_3),
                                          (B_M2_1, B_M2_2, B_M2_3))):
            v, d = cbn(c3, c3)
            W[wi] = W[wi].at[si * c3:(si + 1) * c3, si * c3:(si + 1) * c3].set(v)
            Bv[bi] = Bv[bi].at[si * c3:(si + 1) * c3].set(d)

    # FlowPredictor: first conv split into local (per-point) + global (max) halves.
    w1f, b1f = cbn(2 * cp, sf1, conv_bias=False)
    W[W_FP1L] = W[W_FP1L].at[:cp, :sf1].set(w1f[:cp])
    W[W_FP1G] = W[W_FP1G].at[:cp, :sf1].set(w1f[cp:])
    Bv[B_FP1] = Bv[B_FP1].at[:sf1].set(b1f)
    w2f, b2f = cbn(sf1, sf2, conv_bias=False)
    W[W_FP2] = W[W_FP2].at[:sf1, :sf2].set(w2f)
    Bv[B_FP2] = Bv[B_FP2].at[:sf2].set(b2f)
    w3f, b3f = cbn(sf2, sf3, conv_bias=False)
    W[W_FP3] = W[W_FP3].at[:sf2, :sf3].set(w3f)
    Bv[B_FP3] = Bv[B_FP3].at[:sf3].set(b3f)
    wf, bf = cbn(sf3, 3, conv_bias=True, bn=False)       # final Conv1d, bias=True
    W[W_FPF] = W[W_FPF].at[:sf3, :3].set(wf)
    Bv[B_FPF] = Bv[B_FPF].at[:3].set(bf)

    wblob = jnp.concatenate(W, axis=0).astype(COMPUTE_DTYPE)     # (1408,128) bf16
    bblob = jnp.zeros((N_BROWS, LANE), jnp.float32)
    for i, b in enumerate(Bv):
        bblob = bblob.at[i].set(b)
    return wblob, bblob


# ----------------------------------------------------------------------------
# FlowDecoder forward (PyTorch layout: pc1 (B,3,N), features (B,C,N) -> (B,3,N))
# ----------------------------------------------------------------------------
def flow_decoder_forward(wblob, bblob, pc1, feature1, pc1_features, cor_features):
    xyz = jnp.transpose(pc1, (0, 2, 1))                                   # (B,N,3)
    emb = jnp.transpose(jnp.concatenate([feature1, pc1_features, cor_features],
                                        axis=1), (0, 2, 1))               # (B,N,2fc+3)
    B, N, cfe = emb.shape
    cin = cfe + 3
    fc = (cfe - 3) // 2
    c3 = fc // 8

    tile = _choose_tile(N)
    n_pad = -(-N // tile) * tile
    n_tiles = n_pad // tile

    # Build the tile-major grouped slab: rows ordered (tile, scale, neighbor,
    # point-in-tile), channels zero-padded to 128, bf16 (MXU operand only).
    # Extra points are edge replicas of a real point -> global max unaffected.
    parts = []
    for radius, nsample in zip(EP_RADIUS, EP_NSAMPLE):
        g = query_and_group(xyz, emb, radius, nsample)                    # (B,S,N,cin)
        g = jnp.pad(g, ((0, 0), (0, 0), (0, n_pad - N), (0, 0)), mode="edge")
        g = g.reshape(B, nsample, n_tiles, tile, cin)
        parts.append(jnp.transpose(g, (0, 2, 1, 3, 4)))                   # (B,T_n,S,tile,cin)
    slab = jnp.concatenate(parts, axis=2)                                 # (B,T_n,60,tile,cin)
    slab = slab.reshape(B, n_tiles * SUM_S * tile, cin)
    slab = jnp.pad(slab, ((0, 0), (0, 0), (0, LANE - cin))).astype(COMPUTE_DTYPE)

    out = fused_flow_decoder(slab, wblob, bblob, tile_n=tile, n_tiles=n_tiles,
                             n_pad=n_pad, c3=c3)                          # (B,N_pad,128)
    return jnp.transpose(out[:, :N, :3], (0, 2, 1))                       # (B,3,N)


if __name__ == "__main__":
    B, N, FC = 2, 64, 32
    key = jax.random.PRNGKey(0)
    k1, k2, k3, k4, kp = jax.random.split(key, 5)
    pc1 = jax.random.uniform(k1, (B, 3, N), jnp.float32, minval=0.0, maxval=6.0)
    feature1 = jax.random.normal(k2, (B, 3, N), jnp.float32)
    pc1_features = jax.random.normal(k3, (B, FC, N), jnp.float32)
    cor_features = jax.random.normal(k4, (B, FC, N), jnp.float32)

    wblob, bblob = init_flow_decoder_params(kp, FC)

    fwd = jax.jit(flow_decoder_forward)
    out = fwd(wblob, bblob, pc1, feature1, pc1_features, cor_features)
    jax.block_until_ready(out)

    assert out.shape == (B, 3, N), out.shape
    assert bool(jnp.all(jnp.isfinite(out)))
    print("KERNEL_OK")
</pallas_src>

<mosaic_0001>
module attributes {stable_mosaic.version = 11 : i64} {
  func.func @_fused_flow_kernel(%arg0: i32, %arg1: i32, %arg2: memref<1x960x128xbf16, #tpu.memory_space<vmem>>, %arg3: memref<1408x128xbf16, #tpu.memory_space<vmem>>, %arg4: memref<16x128xf32, #tpu.memory_space<vmem>>, %arg5: memref<1x64x128xf32, #tpu.memory_space<vmem>>, %arg6: memref<64x128xf32, #tpu.memory_space<vmem>>, %arg7: memref<1x128xf32, #tpu.memory_space<vmem>>) attributes {dimension_semantics = [#tpu.dimension_semantics<parallel>, #tpu.dimension_semantics<arbitrary>], iteration_bounds = array<i64: 2, 4>, scalar_prefetch = 0 : i64, scratch_operands = 2 : i64, tpu.core_type = #tpu.core_type<tc>, window_params = [{transform_indices = @transform_0, window_bounds = array<i64: 1, 960, 128>}, {pipeline_mode = #tpu.pipeline_mode<synchronous>, transform_indices = @transform_1, window_bounds = array<i64: 1408, 128>}, {pipeline_mode = #tpu.pipeline_mode<synchronous>, transform_indices = @transform_2, window_bounds = array<i64: 16, 128>}, {transform_indices = @transform_3, window_bounds = array<i64: 1, 64, 128>}]} {
    %c0_i32 = arith.constant 0 : i32
    %0 = arith.cmpi eq, %arg1, %c0_i32 : i32
    %1 = arith.extui %0 : i1 to i32
    %c0_i32_0 = arith.constant 0 : i32
    %2 = arith.cmpi ne, %1, %c0_i32_0 : i32
    scf.if %2 {
      %cst_43 = arith.constant 0.000000e+00 : f32
      %139 = vector.broadcast %cst_43 : f32 to vector<1x128xf32>
      %c0_44 = arith.constant 0 : index
      %c0_45 = arith.constant 0 : index
      %140 = vector.load %arg7[%c0_44, %c0_45] : memref<1x128xf32, #tpu.memory_space<vmem>>, vector<1x128xf32>
      tpu.vector_store %arg7[%c0_44, %c0_45], %139 {strides = array<i32>} : memref<1x128xf32, #tpu.memory_space<vmem>>, vector<1x128xf32>,
    } else {
    }
    %c0 = arith.constant 0 : index
    %c0_1 = arith.constant 0 : index
    %c0_2 = arith.constant 0 : index
    %3 = vector.load %arg2[%c0, %c0_1, %c0_2] : memref<1x960x128xbf16, #tpu.memory_space<vmem>>, vector<1x960x128xbf16>
    %4 = vector.shape_cast %3 : vector<1x960x128xbf16> to vector<960x128xbf16>
    %c0_3 = arith.constant 0 : index
    %c0_4 = arith.constant 0 : index
    %5 = vector.load %arg3[%c0_3, %c0_4] : memref<1408x128xbf16, #tpu.memory_space<vmem>>, vector<128x128xbf16>
    %cst = arith.constant dense<0.000000e+00> : vector<960x128xf32>
    %6 = tpu.matmul %4, %5, %cst {dimension_numbers = #tpu.dot_dimension_numbers<[1], [0], [0], [1], [0, 0, 1, 1], [], []>} : vector<960x128xbf16>, vector<128x128xbf16>, vector<960x128xf32> -> vector<960x128xf32>
    %c0_5 = arith.constant 0 : index
    %c0_6 = arith.constant 0 : index
    %7 = vector.load %arg4[%c0_5, %c0_6] : memref<16x128xf32, #tpu.memory_space<vmem>>, vector<1x128xf32>
    %8 = vector.broadcast %7 : vector<1x128xf32> to vector<960x128xf32>
    %9 = arith.addf %6, %8 : vector<960x128xf32>
    %cst_7 = arith.constant 0.000000e+00 : f32
    %10 = vector.broadcast %cst_7 : f32 to vector<960x128xf32>
    %11 = arith.maximumf %9, %10 : vector<960x128xf32>
    %12 = arith.truncf %11 : vector<960x128xf32> to vector<960x128xbf16>
    %c128 = arith.constant 128 : index
    %c0_8 = arith.constant 0 : index
    %13 = vector.load %arg3[%c128, %c0_8] : memref<1408x128xbf16, #tpu.memory_space<vmem>>, vector<128x128xbf16>
    %cst_9 = arith.constant dense<0.000000e+00> : vector<960x128xf32>
    %14 = tpu.matmul %12, %13, %cst_9 {dimension_numbers = #tpu.dot_dimension_numbers<[1], [0], [0], [1], [0, 0, 1, 1], [], []>} : vector<960x128xbf16>, vector<128x128xbf16>, vector<960x128xf32> -> vector<960x128xf32>
    %c1 = arith.constant 1 : index
    %c0_10 = arith.constant 0 : index
    %15 = vector.load %arg4[%c1, %c0_10] : memref<16x128xf32, #tpu.memory_space<vmem>>, vector<1x128xf32>
    %16 = vector.broadcast %15 : vector<1x128xf32> to vector<960x128xf32>
    %17 = arith.addf %14, %16 : vector<960x128xf32>
    %cst_11 = arith.constant 0.000000e+00 : f32
    %18 = vector.broadcast %cst_11 : f32 to vector<960x128xf32>
    %19 = arith.maximumf %17, %18 : vector<960x128xf32>
    %20 = arith.truncf %19 : vector<960x128xf32> to vector<960x128xbf16>
    %c256 = arith.constant 256 : index
    %c0_12 = arith.constant 0 : index
    %21 = vector.load %arg3[%c256, %c0_12] : memref<1408x128xbf16, #tpu.memory_space<vmem>>, vector<128x128xbf16>
    %cst_13 = arith.constant dense<0.000000e+00> : vector<960x128xf32>
    %22 = tpu.matmul %20, %21, %cst_13 {dimension_numbers = #tpu.dot_dimension_numbers<[1], [0], [0], [1], [0, 0, 1, 1], [], []>} : vector<960x128xbf16>, vector<128x128xbf16>, vector<960x128xf32> -> vector<960x128xf32>
    %c2 = arith.constant 2 : index
    %c0_14 = arith.constant 0 : index
    %23 = vector.load %arg4[%c2, %c0_14] : memref<16x128xf32, #tpu.memory_space<vmem>>, vector<1x128xf32>
    %24 = vector.broadcast %23 : vector<1x128xf32> to vector<960x128xf32>
    %25 = arith.addf %22, %24 : vector<960x128xf32>
    %cst_15 = arith.constant 0.000000e+00 : f32
    %26 = vector.broadcast %cst_15 : f32 to vector<960x128xf32>
    %27 = arith.maximumf %25, %26 : vector<960x128xf32>
    %28 = tpu.iota {dimensions = array<i32: 1>} : vector<16x128xi32>
    %cst_16 = arith.constant 0.000000e+00 : f32
    %29 = vector.broadcast %cst_16 : f32 to vector<16x128xf32>
    %30 = vector.extract_strided_slice %27 {offsets = [0, 0], sizes = [64, 128], strides = [1, 1]} : vector<960x128xf32> to vector<64x128xf32>
    %31 = vector.extract_strided_slice %30 {offsets = [0, 0], sizes = [32, 128], strides = [1, 1]} : vector<64x128xf32> to vector<32x128xf32>
    %32 = vector.extract_strided_slice %30 {offsets = [32, 0], sizes = [32, 128], strides = [1, 1]} : vector<64x128xf32> to vector<32x128xf32>
    %33 = arith.maximumf %31, %32 : vector<32x128xf32>
    %34 = vector.extract_strided_slice %33 {offsets = [0, 0], sizes = [16, 128], strides = [1, 1]} : vector<32x128xf32> to vector<16x128xf32>
    %35 = vector.extract_strided_slice %33 {offsets = [16, 0], sizes = [16, 128], strides = [1, 1]} : vector<32x128xf32> to vector<16x128xf32>
    %36 = arith.maximumf %34, %35 : vector<16x128xf32>
    %c0_i32_17 = arith.constant 0 : i32
    %37 = vector.broadcast %c0_i32_17 : i32 to vector<16x128xi32>
    %38 = arith.cmpi sge, %28, %37 : vector<16x128xi32>
    %c4_i32 = arith.constant 4 : i32
    %39 = vector.broadcast %c4_i32 : i32 to vector<16x128xi32>
    %40 = arith.cmpi slt, %28, %39 : vector<16x128xi32>
    %41 = arith.andi %38, %40 : vector<16x128xi1>
    %42 = arith.select %41, %36, %29 : vector<16x128xi1>, vector<16x128xf32>
    %43 = vector.extract_strided_slice %27 {offsets = [64, 0], sizes = [128, 128], strides = [1, 1]} : vector<960x128xf32> to vector<128x128xf32>
    %44 = vector.extract_strided_slice %43 {offsets = [0, 0], sizes = [64, 128], strides = [1, 1]} : vector<128x128xf32> to vector<64x128xf32>
    %45 = vector.extract_strided_slice %43 {offsets = [64, 0], sizes = [64, 128], strides = [1, 1]} : vector<128x128xf32> to vector<64x128xf32>
    %46 = arith.maximumf %44, %45 : vector<64x128xf32>
    %47 = vector.extract_strided_slice %46 {offsets = [0, 0], sizes = [32, 128], strides = [1, 1]} : vector<64x128xf32> to vector<32x128xf32>
    %48 = vector.extract_strided_slice %46 {offsets = [32, 0], sizes = [32, 128], strides = [1, 1]} : vector<64x128xf32> to vector<32x128xf32>
    %49 = arith.maximumf %47, %48 : vector<32x128xf32>
    %50 = vector.extract_strided_slice %49 {offsets = [0, 0], sizes = [16, 128], strides = [1, 1]} : vector<32x128xf32> to vector<16x128xf32>
    %51 = vector.extract_strided_slice %49 {offsets = [16, 0], sizes = [16, 128], strides = [1, 1]} : vector<32x128xf32> to vector<16x128xf32>
    %52 = arith.maximumf %50, %51 : vector<16x128xf32>
    %c4_i32_18 = arith.constant 4 : i32
    %53 = vector.broadcast %c4_i32_18 : i32 to vector<16x128xi32>
    %54 = arith.cmpi sge, %28, %53 : vector<16x128xi32>
    %c8_i32 = arith.constant 8 : i32
    %55 = vector.broadcast %c8_i32 : i32 to vector<16x128xi32>
    %56 = arith.cmpi slt, %28, %55 : vector<16x128xi32>
    %57 = arith.andi %54, %56 : vector<16x128xi1>
    %58 = arith.select %57, %52, %42 : vector<16x128xi1>, vector<16x128xf32>
    %59 = vector.extract_strided_slice %27 {offsets = [192, 0], sizes = [256, 128], strides = [1, 1]} : vector<960x128xf32> to vector<256x128xf32>
    %60 = vector.extract_strided_slice %59 {offsets = [0, 0], sizes = [128, 128], strides = [1, 1]} : vector<256x128xf32> to vector<128x128xf32>
    %61 = vector.extract_strided_slice %59 {offsets = [128, 0], sizes = [128, 128], strides = [1, 1]} : vector<256x128xf32> to vector<128x128xf32>
    %62 = arith.maximumf %60, %61 : vector<128x128xf32>
    %63 = vector.extract_strided_slice %62 {offsets = [0, 0], sizes = [64, 128], strides = [1, 1]} : vector<128x128xf32> to vector<64x128xf32>
    %64 = vector.extract_strided_slice %62 {offsets = [64, 0], sizes = [64, 128], strides = [1, 1]} : vector<128x128xf32> to vector<64x128xf32>
    %65 = arith.maximumf %63, %64 : vector<64x128xf32>
    %66 = vector.extract_strided_slice %65 {offsets = [0, 0], sizes = [32, 128], strides = [1, 1]} : vector<64x128xf32> to vector<32x128xf32>
    %67 = vector.extract_strided_slice %65 {offsets = [32, 0], sizes = [32, 128], strides = [1, 1]} : vector<64x128xf32> to vector<32x128xf32>
    %68 = arith.maximumf %66, %67 : vector<32x128xf32>
    %69 = vector.extract_strided_slice %68 {offsets = [0, 0], sizes = [16, 128], strides = [1, 1]} : vector<32x128xf32> to vector<16x128xf32>
    %70 = vector.extract_strided_slice %68 {offsets = [16, 0], sizes = [16, 128], strides = [1, 1]} : vector<32x128xf32> to vector<16x128xf32>
    %71 = arith.maximumf %69, %70 : vector<16x128xf32>
    %c8_i32_19 = arith.constant 8 : i32
    %72 = vector.broadcast %c8_i32_19 : i32 to vector<16x128xi32>
    %73 = arith.cmpi sge, %28, %72 : vector<16x128xi32>
    %c12_i32 = arith.constant 12 : i32
    %74 = vector.broadcast %c12_i32 : i32 to vector<16x128xi32>
    %75 = arith.cmpi slt, %28, %74 : vector<16x128xi32>
    %76 = arith.andi %73, %75 : vector<16x128xi1>
    %77 = arith.select %76, %71, %58 : vector<16x128xi1>, vector<16x128xf32>
    %78 = vector.extract_strided_slice %27 {offsets = [448, 0], sizes = [512, 128], strides = [1, 1]} : vector<960x128xf32> to vector<512x128xf32>
    %79 = vector.extract_strided_slice %78 {offsets = [0, 0], sizes = [256, 128], strides = [1, 1]} : vector<512x128xf32> to vector<256x128xf32>
    %80 = vector.extract_strided_slice %78 {offsets = [256, 0], sizes = [256, 128], strides = [1, 1]} : vector<512x128xf32> to vector<256x128xf32>
    %81 = arith.maximumf %79, %80 : vector<256x128xf32>
    %82 = vector.extract_strided_slice %81 {offsets = [0, 0], sizes = [128, 128], strides = [1, 1]} : vector<256x128xf32> to vector<128x128xf32>
    %83 = vector.extract_strided_slice %81 {offsets = [128, 0], sizes = [128, 128], strides = [1, 1]} : vector<256x128xf32> to vector<128x128xf32>
    %84 = arith.maximumf %82, %83 : vector<128x128xf32>
    %85 = vector.extract_strided_slice %84 {offsets = [0, 0], sizes = [64, 128], strides = [1, 1]} : vector<128x128xf32> to vector<64x128xf32>
    %86 = vector.extract_strided_slice %84 {offsets = [64, 0], sizes = [64, 128], strides = [1, 1]} : vector<128x128xf32> to vector<64x128xf32>
    %87 = arith.maximumf %85, %86 : vector<64x128xf32>
    %88 = vector.extract_strided_slice %87 {offsets = [0, 0], sizes = [32, 128], strides = [1, 1]} : vector<64x128xf32> to vector<32x128xf32>
    %89 = vector.extract_strided_slice %87 {offsets = [32, 0], sizes = [32, 128], strides = [1, 1]} : vector<64x128xf32> to vector<32x128xf32>
    %90 = arith.maximumf %88, %89 : vector<32x128xf32>
    %91 = vector.extract_strided_slice %90 {offsets = [0, 0], sizes = [16, 128], strides = [1, 1]} : vector<32x128xf32> to vector<16x128xf32>
    %92 = vector.extract_strided_slice %90 {offsets = [16, 0], sizes = [16, 128], strides = [1, 1]} : vector<32x128xf32> to vector<16x128xf32>
    %93 = arith.maximumf %91, %92 : vector<16x128xf32>
    %c12_i32_20 = arith.constant 12 : i32
    %94 = vector.broadcast %c12_i32_20 : i32 to vector<16x128xi32>
    %95 = arith.cmpi sge, %28, %94 : vector<16x128xi32>
    %c16_i32 = arith.constant 16 : i32
    %96 = vector.broadcast %c16_i32 : i32 to vector<16x128xi32>
    %97 = arith.cmpi slt, %28, %96 : vector<16x128xi32>
    %98 = arith.andi %95, %97 : vector<16x128xi1>
    %99 = arith.select %98, %93, %77 : vector<16x128xi1>, vector<16x128xf32>
    %100 = arith.truncf %99 : vector<16x128xf32> to vector<16x128xbf16>
    %c384 = arith.constant 384 : index
    %c0_21 = arith.constant 0 : index
    %101 = vector.load %arg3[%c384, %c0_21] : memref<1408x128xbf16, #tpu.memory_space<vmem>>, vector<128x128xbf16>
    %cst_22 = arith.constant dense<0.000000e+00> : vector<16x128xf32>
    %102 = tpu.matmul %100, %101, %cst_22 {dimension_numbers = #tpu.dot_dimension_numbers<[1], [0], [0], [1], [0, 0, 1, 1], [], []>} : vector<16x128xbf16>, vector<128x128xbf16>, vector<16x128xf32> -> vector<16x128xf32>
    %c3 = arith.constant 3 : index
    %c0_23 = arith.constant 0 : index
    %103 = vector.load %arg4[%c3, %c0_23] : memref<16x128xf32, #tpu.memory_space<vmem>>, vector<1x128xf32>
    %104 = vector.broadcast %103 : vector<1x128xf32> to vector<16x128xf32>
    %105 = arith.addf %102, %104 : vector<16x128xf32>
    %cst_24 = arith.constant 0.000000e+00 : f32
    %106 = vector.broadcast %cst_24 : f32 to vector<16x128xf32>
    %107 = arith.maximumf %105, %106 : vector<16x128xf32>
    %108 = arith.truncf %107 : vector<16x128xf32> to vector<16x128xbf16>
    %c512 = arith.constant 512 : index
    %c0_25 = arith.constant 0 : index
    %109 = vector.load %arg3[%c512, %c0_25] : memref<1408x128xbf16, #tpu.memory_space<vmem>>, vector<128x128xbf16>
    %cst_26 = arith.constant dense<0.000000e+00> : vector<16x128xf32>
    %110 = tpu.matmul %108, %109, %cst_26 {dimension_numbers = #tpu.dot_dimension_numbers<[1], [0], [0], [1], [0, 0, 1, 1], [], []>} : vector<16x128xbf16>, vector<128x128xbf16>, vector<16x128xf32> -> vector<16x128xf32>
    %c4 = arith.constant 4 : index
    %c0_27 = arith.constant 0 : index
    %111 = vector.load %arg4[%c4, %c0_27] : memref<16x128xf32, #tpu.memory_space<vmem>>, vector<1x128xf32>
    %112 = vector.broadcast %111 : vector<1x128xf32> to vector<16x128xf32>
    %113 = arith.addf %110, %112 : vector<16x128xf32>
    %cst_28 = arith.constant 0.000000e+00 : f32
    %114 = vector.broadcast %cst_28 : f32 to vector<16x128xf32>
    %115 = arith.maximumf %113, %114 : vector<16x128xf32>
    %116 = arith.truncf %115 : vector<16x128xf32> to vector<16x128xbf16>
    %c640 = arith.constant 640 : index
    %c0_29 = arith.constant 0 : index
    %117 = vector.load %arg3[%c640, %c0_29] : memref<1408x128xbf16, #tpu.memory_space<vmem>>, vector<128x128xbf16>
    %cst_30 = arith.constant dense<0.000000e+00> : vector<16x128xf32>
    %118 = tpu.matmul %116, %117, %cst_30 {dimension_numbers = #tpu.dot_dimension_numbers<[1], [0], [0], [1], [0, 0, 1, 1], [], []>} : vector<16x128xbf16>, vector<128x128xbf16>, vector<16x128xf32> -> vector<16x128xf32>
    %c5 = arith.constant 5 : index
    %c0_31 = arith.constant 0 : index
    %119 = vector.load %arg4[%c5, %c0_31] : memref<16x128xf32, #tpu.memory_space<vmem>>, vector<1x128xf32>
    %120 = vector.broadcast %119 : vector<1x128xf32> to vector<16x128xf32>
    %121 = arith.addf %118, %120 : vector<16x128xf32>
    %cst_32 = arith.constant 0.000000e+00 : f32
    %122 = vector.broadcast %cst_32 : f32 to vector<16x128xf32>
    %123 = arith.maximumf %121, %122 : vector<16x128xf32>
    %124 = arith.truncf %123 : vector<16x128xf32> to vector<16x128xbf16>
    %c768 = arith.constant 768 : index
    %c0_33 = arith.constant 0 : index
    %125 = vector.load %arg3[%c768, %c0_33] : memref<1408x128xbf16, #tpu.memory_space<vmem>>, vector<128x128xbf16>
    %cst_34 = arith.constant dense<0.000000e+00> : vector<16x128xf32>
    %126 = tpu.matmul %124, %125, %cst_34 {dimension_numbers = #tpu.dot_dimension_numbers<[1], [0], [0], [1], [0, 0, 1, 1], [], []>} : vector<16x128xbf16>, vector<128x128xbf16>, vector<16x128xf32> -> vector<16x128xf32>
    %c16_i32_35 = arith.constant 16 : i32
    %127 = arith.muli %arg1, %c16_i32_35 : i32
    %128 = tpu.assume_multiple %127, 8 : i32
    %129 = arith.index_cast %128 : i32 to index
    %c0_36 = arith.constant 0 : index
    %130 = vector.load %arg6[%129, %c0_36] : memref<64x128xf32, #tpu.memory_space<vmem>>, vector<16x128xf32>
    tpu.vector_store %arg6[%129, %c0_36], %126 {strides = array<i32>} : memref<64x128xf32, #tpu.memory_space<vmem>>, vector<16x128xf32>,
    %c0_37 = arith.constant 0 : index
    %c0_38 = arith.constant 0 : index
    %131 = vector.load %arg7[%c0_37, %c0_38] : memref<1x128xf32, #tpu.memory_space<vmem>>, vector<1x128xf32>
    %cst_39 = arith.constant dense<0xFF800000> : vector<128xf32>
    %132 = vector.multi_reduction <maximumf>, %123, %cst_39 [0] : vector<16x128xf32> to vector<128xf32>
    %133 = vector.shape_cast %132 : vector<128xf32> to vector<1x128xf32>
    %134 = arith.maximumf %131, %133 : vector<1x128xf32>
    %c0_40 = arith.constant 0 : index
    %c0_41 = arith.constant 0 : index
    %135 = vector.load %arg7[%c0_40, %c0_41] : memref<1x128xf32, #tpu.memory_space<vmem>>, vector<1x128xf32>
    tpu.vector_store %arg7[%c0_40, %c0_41], %134 {strides = array<i32>} : memref<1x128xf32, #tpu.memory_space<vmem>>, vector<1x128xf32>,
    %c3_i32 = arith.constant 3 : i32
    %136 = arith.cmpi eq, %arg1, %c3_i32 : i32
    %137 = arith.extui %136 : i1 to i32
    %c0_i32_42 = arith.constant 0 : i32
    %138 = arith.cmpi ne, %137, %c0_i32_42 : i32
    scf.if %138 {
      %c0_43 = arith.constant 0 : index
      %c0_44 = arith.constant 0 : index
      %139 = vector.load %arg7[%c0_43, %c0_44] : memref<1x128xf32, #tpu.memory_space<vmem>>, vector<1x128xf32>
      %140 = arith.truncf %139 : vector<1x128xf32> to vector<1x128xbf16>
      %c896 = arith.constant 896 : index
      %c0_45 = arith.constant 0 : index
      %141 = vector.load %arg3[%c896, %c0_45] : memref<1408x128xbf16, #tpu.memory_space<vmem>>, vector<128x128xbf16>
      %cst_46 = arith.constant dense<0.000000e+00> : vector<1x128xf32>
      %142 = tpu.matmul %140, %141, %cst_46 {dimension_numbers = #tpu.dot_dimension_numbers<[1], [0], [0], [1], [0, 0, 1, 1], [], []>} : vector<1x128xbf16>, vector<128x128xbf16>, vector<1x128xf32> -> vector<1x128xf32>
      %c0_47 = arith.constant 0 : index
      %c0_48 = arith.constant 0 : index
      %143 = vector.load %arg6[%c0_47, %c0_48] : memref<64x128xf32, #tpu.memory_space<vmem>>, vector<64x128xf32>
      %144 = vector.broadcast %142 : vector<1x128xf32> to vector<64x128xf32>
      %145 = arith.addf %143, %144 : vector<64x128xf32>
      %c6 = arith.constant 6 : index
      %c0_49 = arith.constant 0 : index
      %146 = vector.load %arg4[%c6, %c0_49] : memref<16x128xf32, #tpu.memory_space<vmem>>, vector<1x128xf32>
      %147 = vector.broadcast %146 : vector<1x128xf32> to vector<64x128xf32>
      %148 = arith.addf %145, %147 : vector<64x128xf32>
      %cst_50 = arith.constant 0.000000e+00 : f32
      %149 = vector.broadcast %cst_50 : f32 to vector<64x128xf32>
      %150 = arith.maximumf %148, %149 : vector<64x128xf32>
      %151 = arith.truncf %150 : vector<64x128xf32> to vector<64x128xbf16>
      %c1024 = arith.constant 1024 : index
      %c0_51 = arith.constant 0 : index
      %152 = vector.load %arg3[%c1024, %c0_51] : memref<1408x128xbf16, #tpu.memory_space<vmem>>, vector<128x128xbf16>
      %cst_52 = arith.constant dense<0.000000e+00> : vector<64x128xf32>
      %153 = tpu.matmul %151, %152, %cst_52 {dimension_numbers = #tpu.dot_dimension_numbers<[1], [0], [0], [1], [0, 0, 1, 1], [], []>} : vector<64x128xbf16>, vector<128x128xbf16>, vector<64x128xf32> -> vector<64x128xf32>
      %c7 = arith.constant 7 : index
      %c0_53 = arith.constant 0 : index
      %154 = vector.load %arg4[%c7, %c0_53] : memref<16x128xf32, #tpu.memory_space<vmem>>, vector<1x128xf32>
      %155 = vector.broadcast %154 : vector<1x128xf32> to vector<64x128xf32>
      %156 = arith.addf %153, %155 : vector<64x128xf32>
      %cst_54 = arith.constant 0.000000e+00 : f32
      %157 = vector.broadcast %cst_54 : f32 to vector<64x128xf32>
      %158 = arith.maximumf %156, %157 : vector<64x128xf32>
      %159 = arith.truncf %158 : vector<64x128xf32> to vector<64x128xbf16>
      %c1152 = arith.constant 1152 : index
      %c0_55 = arith.constant 0 : index
      %160 = vector.load %arg3[%c1152, %c0_55] : memref<1408x128xbf16, #tpu.memory_space<vmem>>, vector<128x128xbf16>
      %cst_56 = arith.constant dense<0.000000e+00> : vector<64x128xf32>
      %161 = tpu.matmul %159, %160, %cst_56 {dimension_numbers = #tpu.dot_dimension_numbers<[1], [0], [0], [1], [0, 0, 1, 1], [], []>} : vector<64x128xbf16>, vector<128x128xbf16>, vector<64x128xf32> -> vector<64x128xf32>
      %c8 = arith.constant 8 : index
      %c0_57 = arith.constant 0 : index
      %162 = vector.load %arg4[%c8, %c0_57] : memref<16x128xf32, #tpu.memory_space<vmem>>, vector<1x128xf32>
      %163 = vector.broadcast %162 : vector<1x128xf32> to vector<64x128xf32>
      %164 = arith.addf %161, %163 : vector<64x128xf32>
      %cst_58 = arith.constant 0.000000e+00 : f32
      %165 = vector.broadcast %cst_58 : f32 to vector<64x128xf32>
      %166 = arith.maximumf %164, %165 : vector<64x128xf32>
      %167 = arith.truncf %166 : vector<64x128xf32> to vector<64x128xbf16>
      %c1280 = arith.constant 1280 : index
      %c0_59 = arith.constant 0 : index
      %168 = vector.load %arg3[%c1280, %c0_59] : memref<1408x128xbf16, #tpu.memory_space<vmem>>, vector<128x128xbf16>
      %cst_60 = arith.constant dense<0.000000e+00> : vector<64x128xf32>
      %169 = tpu.matmul %167, %168, %cst_60 {dimension_numbers = #tpu.dot_dimension_numbers<[1], [0], [0], [1], [0, 0, 1, 1], [], []>} : vector<64x128xbf16>, vector<128x128xbf16>, vector<64x128xf32> -> vector<64x128xf32>
      %c9 = arith.constant 9 : index
      %c0_61 = arith.constant 0 : index
      %170 = vector.load %arg4[%c9, %c0_61] : memref<16x128xf32, #tpu.memory_space<vmem>>, vector<1x128xf32>
      %171 = vector.broadcast %170 : vector<1x128xf32> to vector<64x128xf32>
      %172 = arith.addf %169, %171 : vector<64x128xf32>
      %c0_62 = arith.constant 0 : index
      %c0_63 = arith.constant 0 : index
      %c0_64 = arith.constant 0 : index
      %173 = vector.load %arg5[%c0_62, %c0_63, %c0_64] : memref<1x64x128xf32, #tpu.memory_space<vmem>>, vector<1x64x128xf32>
      %174 = vector.shape_cast %173 : vector<1x64x128xf32> to vector<64x128xf32>
      %175 = vector.shape_cast %172 : vector<64x128xf32> to vector<1x64x128xf32>
      tpu.vector_store %arg5[%c0_62, %c0_63, %c0_64], %175 {strides = array<i32>} : memref<1x64x128xf32, #tpu.memory_space<vmem>>, vector<1x64x128xf32>,
    } else {
    }
    return
  }
  func.func @transform_0(%arg0: i32, %arg1: i32) -> (i32, i32, i32) {
    %c0_i32 = arith.constant 0 : i32
    %c0_i32_0 = arith.constant 0 : i32
    return %arg0, %arg1, %c0_i32 : i32, i32, i32
  }
  func.func @transform_1(%arg0: i32, %arg1: i32) -> (i32, i32) {
    %c0_i32 = arith.constant 0 : i32
    %c0_i32_0 = arith.constant 0 : i32
    %c0_i32_1 = arith.constant 0 : i32
    return %c0_i32, %c0_i32_0 : i32, i32
  }
  func.func @transform_2(%arg0: i32, %arg1: i32) -> (i32, i32) {
    %c0_i32 = arith.constant 0 : i32
    %c0_i32_0 = arith.constant 0 : i32
    %c0_i32_1 = arith.constant 0 : i32
    return %c0_i32, %c0_i32_0 : i32, i32
  }
  func.func @transform_3(%arg0: i32, %arg1: i32) -> (i32, i32, i32) {
    %c0_i32 = arith.constant 0 : i32
    %c0_i32_0 = arith.constant 0 : i32
    %c0_i32_1 = arith.constant 0 : i32
    return %arg0, %c0_i32, %c0_i32_0 : i32, i32, i32
  }
}

</mosaic_0001>

<llo_original>
// kernel: flow_decoder_forward.1
$region0: #{flow_decoder_forward.1}
  #allocation0 [shape = 'u32[]', space=smem, size = 0x4, offset = 0x4, fixed_abs, tag = 'smem constant byte address 0x4 - core index']
  #allocation1 [shape = 'u32[144,128]{1,0:T(1,128)}', space=vmem, size = 0x12000, scoped, tag = 'internal scratch']
  #allocation2 [shape = 'f32[64,128]{1,0:T(8,128)}', space=vmem, size = 0x8000, scoped, tag = 'scratch operand']
  #allocation3 [shape = 'f32[1,128]{1,0:T(1,128)}', space=vmem, size = 0x200, scoped, tag = 'scratch operand']
  %s0 = inlined_call_operand.vmem [shape: bf16[2,3840,128], index: 0, kind: input, shape index: {}]
  %s1 = inlined_call_operand.vmem [shape: bf16[1408,128], index: 1, kind: input, shape index: {}]
  %s2 = inlined_call_operand.vmem [shape: f32[16,128], index: 2, kind: input, shape index: {}]
  %s3 = inlined_call_operand.vmem [shape: f32[2,64,128], index: 3, kind: output, shape index: {}]
  %s4 = sld [smem:[#allocation0]]
  $region53: #{flow_decoder_forward.1} parent=0
    _
  %s6 = ssub.s32 1, %s4
  %s7 = scalar_select 0, %s6, %s4
  loop: start=0, step=1, limit=10
  $region2: #{flow_decoder_forward.1} parent=0 // loop_pre_header
    _
  $region3: #{flow_decoder_forward.1} parent=0 // loop_header
    %s9 = sphi 0, %s13
    %p10 = scmp.ge.s32.totalorder %s9, 10
    %s16 = sphi 0, %s28
    %s17 = sphi 0, %s24
    %s18 = sphi 0, %s16
    %s19 = sphi 0, %s17
    %s20 = sphi 0, %s18
    %s21 = sphi 0, %s19
    %s33 = sphi 0, %s35
    %s36 = sphi 0, %s33
    %s37 = sphi 0, %s36
    %s53 = sphi 0, %s37
    %s57 = sphi 0, %s57
    %s59 = sphi 0, %s57
    %s60 = sphi 0, %s59
    %s74 = sphi 0, %s60
    %s78 = sphi 0, %s78
    %s80 = sphi 0, %s78
    %s81 = sphi 0, %s80
    %s95 = sphi 0, %s81
    %s101 = sphi 0, %s103
    %s104 = sphi 0, %s101
    %s105 = sphi 0, %s104
    %s121 = sphi 0, %s105
  $region4: #{flow_decoder_forward.1} parent=0 // loop_header_branch
    %12 = sbr.rel (%p10) target = $region8
  $region5: #{flow_decoder_forward.1} parent=0 // loop_body
    %s14 = ssub.s32 %s9, 1
    %s15 = ssub.s32 %s9, 2
    %s22 = sadd.s32 1, %s17
    %p23 = scmp.ge.s32.totalorder %s22, 4
    %s24 = scalar_select %p23, 0, %s22
    %s25 = sadd.s32 1, %s16
    %s26 = scalar_select %p23, %s25, %s16
    %p27 = scmp.ge.s32.totalorder %s26, 2
    %s28 = scalar_select %p27, 0, %s26
    %s29 = ssub.s32 %s16, %s28
    %s30 = ssub.s32 %s17, %s24
    %s31 = sor.u32 %s29, %s30
    %p32 = scmp.eq.s32.totalorder %s31, 0
    %s34 = sadd.s32 %s33, 1
    %s35 = scalar_select %p32, %s33, %s34
    %p38 = pneg %p32
    %p39 = scmp.eq.s32.totalorder %s9, 7
    %p40 = por %p38, %p39
    %p41 = scmp.ne.s32.totalorder %s33, %s36
    %p42 = scmp.eq.s32.totalorder %s9, 0
    %p43 = por %p41, %p42
    %p44 = scmp.ne.s32.totalorder %s33, %s36
    %p45 = scmp.eq.s32.totalorder %s14, 7
    %p46 = por %p44, %p45
    %p47 = scmp.ne.s32.totalorder %s36, %s37
    %p48 = scmp.eq.s32.totalorder %s14, 0
    %p49 = por %p47, %p48
    %p50 = scmp.ne.s32.totalorder %s36, %s37
    %p51 = scmp.eq.s32.totalorder %s15, 7
    %p52 = por %p50, %p51
    %p54 = scmp.ne.s32.totalorder %s37, %s53
    %p55 = scmp.eq.s32.totalorder %s15, 0
    %p56 = por %p54, %p55
    %s58 = sadd.s32 %s57, 1
    %p61 = scmp.eq.s32.totalorder %s9, 7
    %p62 = scmp.ne.s32.totalorder %s57, %s59
    %p63 = scmp.eq.s32.totalorder %s9, 0
    %p64 = por %p62, %p63
    %p65 = scmp.ne.s32.totalorder %s57, %s59
    %p66 = scmp.eq.s32.totalorder %s14, 7
    %p67 = por %p65, %p66
    %p68 = scmp.ne.s32.totalorder %s59, %s60
    %p69 = scmp.eq.s32.totalorder %s14, 0
    %p70 = por %p68, %p69
    %p71 = scmp.ne.s32.totalorder %s59, %s60
    %p72 = scmp.eq.s32.totalorder %s15, 7
    %p73 = por %p71, %p72
    %p75 = scmp.ne.s32.totalorder %s60, %s74
    %p76 = scmp.eq.s32.totalorder %s15, 0
    %p77 = por %p75, %p76
    %s79 = sadd.s32 %s78, 1
    %p82 = scmp.eq.s32.totalorder %s9, 7
    %p83 = scmp.ne.s32.totalorder %s78, %s80
    %p84 = scmp.eq.s32.totalorder %s9, 0
    %p85 = por %p83, %p84
    %p86 = scmp.ne.s32.totalorder %s78, %s80
    %p87 = scmp.eq.s32.totalorder %s14, 7
    %p88 = por %p86, %p87
    %p89 = scmp.ne.s32.totalorder %s80, %s81
    %p90 = scmp.eq.s32.totalorder %s14, 0
    %p91 = por %p89, %p90
    %p92 = scmp.ne.s32.totalorder %s80, %s81
    %p93 = scmp.eq.s32.totalorder %s15, 7
    %p94 = por %p92, %p93
    %p96 = scmp.ne.s32.totalorder %s81, %s95
    %p97 = scmp.eq.s32.totalorder %s15, 0
    %p98 = por %p96, %p97
    %s99 = ssub.s32 %s16, %s28
    %p100 = scmp.eq.s32.totalorder %s99, 0
    %s102 = sadd.s32 %s101, 1
    %s103 = scalar_select %p100, %s101, %s102
    %p106 = pneg %p100
    %p107 = scmp.eq.s32.totalorder %s9, 7
    %p108 = por %p106, %p107
    %p109 = scmp.ne.s32.totalorder %s101, %s104
    %p110 = scmp.eq.s32.totalorder %s9, 0
    %p111 = por %p109, %p110
    %p112 = scmp.ne.s32.totalorder %s101, %s104
    %p113 = scmp.eq.s32.totalorder %s14, 7
    %p114 = por %p112, %p113
    %p115 = scmp.ne.s32.totalorder %s104, %s105
    %p116 = scmp.eq.s32.totalorder %s14, 0
    %p117 = por %p115, %p116
    %p118 = scmp.ne.s32.totalorder %s104, %s105
    %p119 = scmp.eq.s32.totalorder %s15, 7
    %p120 = por %p118, %p119
    %p122 = scmp.ne.s32.totalorder %s105, %s121
    %p123 = scmp.eq.s32.totalorder %s15, 0
    %p124 = por %p122, %p123
    %p125 = scmp.le.s32.totalorder 1, %s9
    %p126 = scmp.lt.s32.totalorder %s9, 9
    %p127 = pnand %p125, %p126
    %p128 = pneg %p127
    // Predicated region
    $region9: #{flow_decoder_forward.1} parent=5 // pred_check
      _
    $region10: #{flow_decoder_forward.1} parent=5 // pred_check_branch
      %130 = sbr.rel (%p127) target = $region12
    $region11: #{flow_decoder_forward.1} parent=5 // pred_region
      %s131 = ssub.s32 %s9, 1
      // Predicated region
      $region13: #{flow_decoder_forward.1} parent=11 // pred_check
        %p132 = pneg %p70
      $region14: #{flow_decoder_forward.1} parent=11 // pred_check_branch
        %134 = sbr.rel (%p132) target = $region16
      $region15: #{flow_decoder_forward.1} parent=11 // pred_region
        _
      $region16: #{flow_decoder_forward.1} parent=11 // pred_fallthru
        _
      // Predicated region
      $region17: #{flow_decoder_forward.1} parent=11 // pred_check
        %p135 = pneg %p91
      $region18: #{flow_decoder_forward.1} parent=11 // pred_check_branch
        %137 = sbr.rel (%p135) target = $region20
      $region19: #{flow_decoder_forward.1} parent=11 // pred_region
        _
      $region20: #{flow_decoder_forward.1} parent=11 // pred_fallthru
        _
    $region12: #{flow_decoder_forward.1} parent=5 // pred_fallthru
      _
    %p138 = scmp.lt.s32.totalorder %s9, 8
    // Predicated region
    $region21: #{flow_decoder_forward.1} parent=5 // pred_check
      %p139 = pneg %p138
    $region22: #{flow_decoder_forward.1} parent=5 // pred_check_branch
      %141 = sbr.rel (%p139) target = $region24
    $region23: #{flow_decoder_forward.1} parent=5 // pred_region
      // Predicated region
      $region25: #{flow_decoder_forward.1} parent=23 // pred_check
        %p142 = pneg %p43
      $region26: #{flow_decoder_forward.1} parent=23 // pred_check_branch
        %144 = sbr.rel (%p142) target = $region28
      $region27: #{flow_decoder_forward.1} parent=23 // pred_region
        %s145 = smul.u32 120, %s17
        %p146 = scmp.lt.s32.totalorder %s16, 1
        %s147 = scalar_select %p146, %s16, 1
        %p148 = scmp.lt.s32.totalorder %s145, 479
        %s149 = scalar_select %p148, %s145, 479
        %s150 = smul.addr %s147, 480
        %s151 = sadd.s32 %s149, %s150
        %s152 = smul.addr %s151, 4
        %s153 = scalar_lea.vmem %s0, %s152
        %s154 = smul.u32 120, %s17
      $region28: #{flow_decoder_forward.1} parent=23 // pred_fallthru
        _
    $region24: #{flow_decoder_forward.1} parent=5 // pred_fallthru
      _
    %p155 = scmp.le.s32.totalorder 1, %s9
    %p156 = scmp.lt.s32.totalorder %s9, 9
    %p157 = pnand %p155, %p156
    %p158 = pneg %p157
    // Predicated region
    $region29: #{flow_decoder_forward.1} parent=5 // pred_check
      _
    $region30: #{flow_decoder_forward.1} parent=5 // pred_check_branch
      %160 = sbr.rel (%p157) target = $region32
    $region31: #{flow_decoder_forward.1} parent=5 // pred_region
      %s161 = ssub.s32 %s9, 1
      %s162 = smul.u32 120, %s19
      %p163 = scmp.lt.s32.totalorder %s18, 1
      %s164 = scalar_select %p163, %s18, 1
      %p165 = scmp.lt.s32.totalorder %s162, 479
      %s166 = scalar_select %p165, %s162, 479
      %s167 = smul.addr %s164, 480
      %s168 = sadd.s32 %s166, %s167
      %s169 = smul.addr %s168, 4
      %s170 = scalar_lea.vmem %s0, %s169
      %p171 = pneg %p49
      %p172 = pneg %p46
      %p173 = pneg %p70
      %p174 = pneg %p67
      %p175 = pneg %p91
      %p176 = pneg %p88
      %p177 = pneg %p117
      %p178 = pneg %p114
      %p179 = scmp.lt.s32.totalorder %s18, 1
      %s180 = scalar_select %p179, %s18, 1
      %s181 = smul.addr %s180, 8
      %s182 = smul.addr %s181, 8
      %s183 = scalar_lea.vmem %s3, %s182
      %s184 = smul.u32 120, %s19
      %p185 = scmp.lt.s32.totalorder %s18, 1
      %s186 = scalar_select %p185, %s18, 1
      %p187 = scmp.lt.s32.totalorder %s184, 479
      %s188 = scalar_select %p187, %s184, 479
      %s189 = smul.addr %s186, 480
      %s190 = sadd.s32 %s188, %s189
      %s191 = smul.addr %s190, 4
      %s192 = scalar_lea.vmem %s0, %s191
      %s193 = smul.u32 120, %s19
      %p194 = scmp.lt.s32.totalorder %s18, 1
      %s195 = scalar_select %p194, %s18, 1
      %s196 = smul.addr %s195, 8
      %s197 = smul.addr %s196, 8
      %s198 = scalar_lea.vmem %s3, %s197
      %p200 = scmp.eq.s32.totalorder %s19, 0
      // Predicated region
      $region33: #{flow_decoder_forward.1} parent=31 // pred_check
        %p201 = pneg %p200
      $region34: #{flow_decoder_forward.1} parent=31 // pred_check_branch
        %203 = sbr.rel (%p201) target = $region36
      $region35: #{flow_decoder_forward.1} parent=31 // pred_region
        %204 = vst [vmem:[#allocation3] sm:$0x1] 0.0
      $region36: #{flow_decoder_forward.1} parent=31 // pred_fallthru
        _
      %v205 = vld [vmem:[%s192] sm:$0xf]
      %v206 = vld [vmem:[%s192 + $0x4] sm:$0xf]
      %v207 = vld [vmem:[%s192 + $0x8] sm:$0xf]
      %v208 = vld [vmem:[%s192 + $0xc] sm:$0xf]
      %v209 = vld [vmem:[%s192 + $0x10] sm:$0xf]
      %v210 = vld [vmem:[%s192 + $0x14] sm:$0xf]
      %v211 = vld [vmem:[%s192 + $0x18] sm:$0xf]
      %v212 = vld [vmem:[%s192 + $0x1c] sm:$0xf]
      %v213 = vld [vmem:[%s192 + $0x20] sm:$0xf]
      %v214 = vld [vmem:[%s192 + $0x24] sm:$0xf]
      %v215 = vld [vmem:[%s192 + $0x28] sm:$0xf]
      %v216 = vld [vmem:[%s192 + $0x2c] sm:$0xf]
      %v217 = vld [vmem:[%s192 + $0x30] sm:$0xf]
      %v218 = vld [vmem:[%s192 + $0x34] sm:$0xf]
      %v219 = vld [vmem:[%s192 + $0x38] sm:$0xf]
      %v220 = vld [vmem:[%s192 + $0x3c] sm:$0xf]
      %v221 = vld [vmem:[%s192 + $0x40] sm:$0xf]
      %v222 = vld [vmem:[%s192 + $0x44] sm:$0xf]
      %v223 = vld [vmem:[%s192 + $0x48] sm:$0xf]
      %v224 = vld [vmem:[%s192 + $0x4c] sm:$0xf]
      %v225 = vld [vmem:[%s192 + $0x50] sm:$0xf]
      %v226 = vld [vmem:[%s192 + $0x54] sm:$0xf]
      %v227 = vld [vmem:[%s192 + $0x58] sm:$0xf]
      %v228 = vld [vmem:[%s192 + $0x5c] sm:$0xf]
      %v229 = vld [vmem:[%s192 + $0x60] sm:$0xf]
      %v230 = vld [vmem:[%s192 + $0x64] sm:$0xf]
      %v231 = vld [vmem:[%s192 + $0x68] sm:$0xf]
      %v232 = vld [vmem:[%s192 + $0x6c] sm:$0xf]
      %v233 = vld [vmem:[%s192 + $0x70] sm:$0xf]
      %v234 = vld [vmem:[%s192 + $0x74] sm:$0xf]
      %v235 = vld [vmem:[%s192 + $0x78] sm:$0xf]
      %v236 = vld [vmem:[%s192 + $0x7c] sm:$0xf]
      %v237 = vld [vmem:[%s192 + $0x80] sm:$0xf]
      %v238 = vld [vmem:[%s192 + $0x84] sm:$0xf]
      %v239 = vld [vmem:[%s192 + $0x88] sm:$0xf]
      %v240 = vld [vmem:[%s192 + $0x8c] sm:$0xf]
      %v241 = vld [vmem:[%s192 + $0x90] sm:$0xf]
      %v242 = vld [vmem:[%s192 + $0x94] sm:$0xf]
      %v243 = vld [vmem:[%s192 + $0x98] sm:$0xf]
      %v244 = vld [vmem:[%s192 + $0x9c] sm:$0xf]
      %v245 = vld [vmem:[%s192 + $0xa0] sm:$0xf]
      %v246 = vld [vmem:[%s192 + $0xa4] sm:$0xf]
      %v247 = vld [vmem:[%s192 + $0xa8] sm:$0xf]
      %v248 = vld [vmem:[%s192 + $0xac] sm:$0xf]
      %v249 = vld [vmem:[%s192 + $0xb0] sm:$0xf]
      %v250 = vld [vmem:[%s192 + $0xb4] sm:$0xf]
      %v251 = vld [vmem:[%s192 + $0xb8] sm:$0xf]
      %v252 = vld [vmem:[%s192 + $0xbc] sm:$0xf]
      %v253 = vld [vmem:[%s192 + $0xc0] sm:$0xf]
      %v254 = vld [vmem:[%s192 + $0xc4] sm:$0xf]
      %v255 = vld [vmem:[%s192 + $0xc8] sm:$0xf]
      %v256 = vld [vmem:[%s192 + $0xcc] sm:$0xf]
      %v257 = vld [vmem:[%s192 + $0xd0] sm:$0xf]
      %v258 = vld [vmem:[%s192 + $0xd4] sm:$0xf]
      %v259 = vld [vmem:[%s192 + $0xd8] sm:$0xf]
      %v260 = vld [vmem:[%s192 + $0xdc] sm:$0xf]
      %v261 = vld [vmem:[%s192 + $0xe0] sm:$0xf]
      %v262 = vld [vmem:[%s192 + $0xe4] sm:$0xf]
      %v263 = vld [vmem:[%s192 + $0xe8] sm:$0xf]
      %v264 = vld [vmem:[%s192 + $0xec] sm:$0xf]
      %v265 = vld [vmem:[%s192 + $0xf0] sm:$0xf]
      %v266 = vld [vmem:[%s192 + $0xf4] sm:$0xf]
      %v267 = vld [vmem:[%s192 + $0xf8] sm:$0xf]
      %v268 = vld [vmem:[%s192 + $0xfc] sm:$0xf]
      %v269 = vld [vmem:[%s192 + $0x100] sm:$0xf]
      %v270 = vld [vmem:[%s192 + $0x104] sm:$0xf]
      %v271 = vld [vmem:[%s192 + $0x108] sm:$0xf]
      %v272 = vld [vmem:[%s192 + $0x10c] sm:$0xf]
      %v273 = vld [vmem:[%s192 + $0x110] sm:$0xf]
      %v274 = vld [vmem:[%s192 + $0x114] sm:$0xf]
      %v275 = vld [vmem:[%s192 + $0x118] sm:$0xf]
      %v276 = vld [vmem:[%s192 + $0x11c] sm:$0xf]
      %v277 = vld [vmem:[%s192 + $0x120] sm:$0xf]
      %v278 = vld [vmem:[%s192 + $0x124] sm:$0xf]
      %v279 = vld [vmem:[%s192 + $0x128] sm:$0xf]
      %v280 = vld [vmem:[%s192 + $0x12c] sm:$0xf]
      %v281 = vld [vmem:[%s192 + $0x130] sm:$0xf]
      %v282 = vld [vmem:[%s192 + $0x134] sm:$0xf]
      %v283 = vld [vmem:[%s192 + $0x138] sm:$0xf]
      %v284 = vld [vmem:[%s192 + $0x13c] sm:$0xf]
      %v285 = vld [vmem:[%s192 + $0x140] sm:$0xf]
      %v286 = vld [vmem:[%s192 + $0x144] sm:$0xf]
      %v287 = vld [vmem:[%s192 + $0x148] sm:$0xf]
      %v288 = vld [vmem:[%s192 + $0x14c] sm:$0xf]
      %v289 = vld [vmem:[%s192 + $0x150] sm:$0xf]
      %v290 = vld [vmem:[%s192 + $0x154] sm:$0xf]
      %v291 = vld [vmem:[%s192 + $0x158] sm:$0xf]
      %v292 = vld [vmem:[%s192 + $0x15c] sm:$0xf]
      %v293 = vld [vmem:[%s192 + $0x160] sm:$0xf]
      %v294 = vld [vmem:[%s192 + $0x164] sm:$0xf]
      %v295 = vld [vmem:[%s192 + $0x168] sm:$0xf]
      %v296 = vld [vmem:[%s192 + $0x16c] sm:$0xf]
      %v297 = vld [vmem:[%s192 + $0x170] sm:$0xf]
      %v298 = vld [vmem:[%s192 + $0x174] sm:$0xf]
      %v299 = vld [vmem:[%s192 + $0x178] sm:$0xf]
      %v300 = vld [vmem:[%s192 + $0x17c] sm:$0xf]
      %v301 = vld [vmem:[%s192 + $0x180] sm:$0xf]
      %v302 = vld [vmem:[%s192 + $0x184] sm:$0xf]
      %v303 = vld [vmem:[%s192 + $0x188] sm:$0xf]
      %v304 = vld [vmem:[%s192 + $0x18c] sm:$0xf]
      %v305 = vld [vmem:[%s192 + $0x190] sm:$0xf]
      %v306 = vld [vmem:[%s192 + $0x194] sm:$0xf]
      %v307 = vld [vmem:[%s192 + $0x198] sm:$0xf]
      %v308 = vld [vmem:[%s192 + $0x19c] sm:$0xf]
      %v309 = vld [vmem:[%s192 + $0x1a0] sm:$0xf]
      %v310 = vld [vmem:[%s192 + $0x1a4] sm:$0xf]
      %v311 = vld [vmem:[%s192 + $0x1a8] sm:$0xf]
      %v312 = vld [vmem:[%s192 + $0x1ac] sm:$0xf]
      %v313 = vld [vmem:[%s192 + $0x1b0] sm:$0xf]
      %v314 = vld [vmem:[%s192 + $0x1b4] sm:$0xf]
      %v315 = vld [vmem:[%s192 + $0x1b8] sm:$0xf]
      %v316 = vld [vmem:[%s192 + $0x1bc] sm:$0xf]
      %v317 = vld [vmem:[%s192 + $0x1c0] sm:$0xf]
      %v318 = vld [vmem:[%s192 + $0x1c4] sm:$0xf]
      %v319 = vld [vmem:[%s192 + $0x1c8] sm:$0xf]
      %v320 = vld [vmem:[%s192 + $0x1cc] sm:$0xf]
      %v321 = vld [vmem:[%s192 + $0x1d0] sm:$0xf]
      %v322 = vld [vmem:[%s192 + $0x1d4] sm:$0xf]
      %v323 = vld [vmem:[%s192 + $0x1d8] sm:$0xf]
      %v324 = vld [vmem:[%s192 + $0x1dc] sm:$0xf]
      %v325 = vld [vmem:[%s1] sm:$0xf]
      %v326 = vld [vmem:[%s1 + $0x4] sm:$0xf]
      %v327 = vld [vmem:[%s1 + $0x8] sm:$0xf]
      %v328 = vld [vmem:[%s1 + $0xc] sm:$0xf]
      %v329 = vld [vmem:[%s1 + $0x10] sm:$0xf]
      %v330 = vld [vmem:[%s1 + $0x14] sm:$0xf]
      %v331 = vld [vmem:[%s1 + $0x18] sm:$0xf]
      %v332 = vld [vmem:[%s1 + $0x1c] sm:$0xf]
      %v333 = vld [vmem:[%s1 + $0x20] sm:$0xf]
      %v334 = vld [vmem:[%s1 + $0x24] sm:$0xf]
      %v335 = vld [vmem:[%s1 + $0x28] sm:$0xf]
      %v336 = vld [vmem:[%s1 + $0x2c] sm:$0xf]
      %v337 = vld [vmem:[%s1 + $0x30] sm:$0xf]
      %v338 = vld [vmem:[%s1 + $0x34] sm:$0xf]
      %v339 = vld [vmem:[%s1 + $0x38] sm:$0xf]
      %v340 = vld [vmem:[%s1 + $0x3c] sm:$0xf]
      %v341 = vld [vmem:[%s2] sm:$0x1]
      %v342 = vlaneseq
      %v343 = vshrl.u32 %v342, 7
      %v344 = vsub.s32 0, %v343
      %v345 = vrot.slane %v341, %v344
      %v466 = vunpack.c.l.b16 %v205
      %v467 = vunpack.c.l.b16 %v206
      %v468 = vunpack.c.l.b16 %v207
      %v469 = vunpack.c.l.b16 %v208
      %v470 = vunpack.c.l.b16 %v209
      %v471 = vunpack.c.l.b16 %v210
      %v472 = vunpack.c.l.b16 %v211
      %v473 = vunpack.c.l.b16 %v212
      %v474 = vunpack.c.l.b16 %v213
      %v475 = vunpack.c.l.b16 %v214
      %v476 = vunpack.c.l.b16 %v215
      %v477 = vunpack.c.l.b16 %v216
      %v478 = vunpack.c.l.b16 %v217
      %v479 = vunpack.c.l.b16 %v218
      %v480 = vunpack.c.l.b16 %v219
      %v481 = vunpack.c.l.b16 %v220
      %v482 = vunpack.c.l.b16 %v221
      %v483 = vunpack.c.l.b16 %v222
      %v484 = vunpack.c.l.b16 %v223
      %v485 = vunpack.c.l.b16 %v224
      %v486 = vunpack.c.l.b16 %v225
      %v487 = vunpack.c.l.b16 %v226
      %v488 = vunpack.c.l.b16 %v227
      %v489 = vunpack.c.l.b16 %v228
      %v490 = vunpack.c.l.b16 %v229
      %v491 = vunpack.c.l.b16 %v230
      %v492 = vunpack.c.l.b16 %v231
      %v493 = vunpack.c.l.b16 %v232
      %v494 = vunpack.c.l.b16 %v233
      %v495 = vunpack.c.l.b16 %v234
      %v496 = vunpack.c.l.b16 %v235
      %v497 = vunpack.c.l.b16 %v236
      %v498 = vunpack.c.l.b16 %v237
      %v499 = vunpack.c.l.b16 %v238
      %v500 = vunpack.c.l.b16 %v239
      %v501 = vunpack.c.l.b16 %v240
      %v502 = vunpack.c.l.b16 %v241
      %v503 = vunpack.c.l.b16 %v242
      %v504 = vunpack.c.l.b16 %v243
      %v505 = vunpack.c.l.b16 %v244
      %v506 = vunpack.c.l.b16 %v245
      %v507 = vunpack.c.l.b16 %v246
      %v508 = vunpack.c.l.b16 %v247
      %v509 = vunpack.c.l.b16 %v248
      %v510 = vunpack.c.l.b16 %v249
      %v511 = vunpack.c.l.b16 %v250
      %v512 = vunpack.c.l.b16 %v251
      %v513 = vunpack.c.l.b16 %v252
      %v514 = vunpack.c.l.b16 %v253
      %v515 = vunpack.c.l.b16 %v254
      %v516 = vunpack.c.l.b16 %v255
      %v517 = vunpack.c.l.b16 %v256
      %v518 = vunpack.c.l.b16 %v257
      %v519 = vunpack.c.l.b16 %v258
      %v520 = vunpack.c.l.b16 %v259
      %v521 = vunpack.c.l.b16 %v260
      %v522 = vunpack.c.l.b16 %v261
      %v523 = vunpack.c.l.b16 %v262
      %v524 = vunpack.c.l.b16 %v263
      %v525 = vunpack.c.l.b16 %v264
      %v526 = vunpack.c.l.b16 %v265
      %v527 = vunpack.c.l.b16 %v266
      %v528 = vunpack.c.l.b16 %v267
      %v529 = vunpack.c.l.b16 %v268
      %v530 = vunpack.c.l.b16 %v269
      %v531 = vunpack.c.l.b16 %v270
      %v532 = vunpack.c.l.b16 %v271
      %v533 = vunpack.c.l.b16 %v272
      %v534 = vunpack.c.l.b16 %v273
      %v535 = vunpack.c.l.b16 %v274
      %v536 = vunpack.c.l.b16 %v275
      %v537 = vunpack.c.l.b16 %v276
      %v538 = vunpack.c.l.b16 %v277
      %v539 = vunpack.c.l.b16 %v278
      %v540 = vunpack.c.l.b16 %v279
      %v541 = vunpack.c.l.b16 %v280
      %v542 = vunpack.c.l.b16 %v281
      %v543 = vunpack.c.l.b16 %v282
      %v544 = vunpack.c.l.b16 %v283
      %v545 = vunpack.c.l.b16 %v284
      %v546 = vunpack.c.l.b16 %v285
      %v547 = vunpack.c.l.b16 %v286
      %v548 = vunpack.c.l.b16 %v287
      %v549 = vunpack.c.l.b16 %v288
      %v550 = vunpack.c.l.b16 %v289
      %v551 = vunpack.c.l.b16 %v290
      %v552 = vunpack.c.l.b16 %v291
      %v553 = vunpack.c.l.b16 %v292
      %v554 = vunpack.c.l.b16 %v293
      %v555 = vunpack.c.l.b16 %v294
      %v556 = vunpack.c.l.b16 %v295
      %v557 = vunpack.c.l.b16 %v296
      %v558 = vunpack.c.l.b16 %v297
      %v559 = vunpack.c.l.b16 %v298
      %v560 = vunpack.c.l.b16 %v299
      %v561 = vunpack.c.l.b16 %v300
      %v562 = vunpack.c.l.b16 %v301
      %v563 = vunpack.c.l.b16 %v302
      %v564 = vunpack.c.l.b16 %v303
      %v565 = vunpack.c.l.b16 %v304
      %v566 = vunpack.c.l.b16 %v305
      %v567 = vunpack.c.l.b16 %v306
      %v568 = vunpack.c.l.b16 %v307
      %v569 = vunpack.c.l.b16 %v308
      %v570 = vunpack.c.l.b16 %v309
      %v571 = vunpack.c.l.b16 %v310
      %v572 = vunpack.c.l.b16 %v311
      %v573 = vunpack.c.l.b16 %v312
      %v574 = vunpack.c.l.b16 %v313
      %v575 = vunpack.c.l.b16 %v314
      %v576 = vunpack.c.l.b16 %v315
      %v577 = vunpack.c.l.b16 %v316
      %v578 = vunpack.c.l.b16 %v317
      %v579 = vunpack.c.l.b16 %v318
      %v580 = vunpack.c.l.b16 %v319
      %v581 = vunpack.c.l.b16 %v320
      %v582 = vunpack.c.l.b16 %v321
      %v583 = vunpack.c.l.b16 %v322
      %v584 = vunpack.c.l.b16 %v323
      %v585 = vunpack.c.l.b16 %v324
      %v586 = vpack.c.b16 %v467, %v466
      %v587 = vpack.c.b16 %v469, %v468
      %v588 = vpack.c.b16 %v471, %v470
      %v589 = vpack.c.b16 %v473, %v472
      %v590 = vpack.c.b16 %v475, %v474
      %v591 = vpack.c.b16 %v477, %v476
      %v592 = vpack.c.b16 %v479, %v478
      %v593 = vpack.c.b16 %v481, %v480
      %v594 = vpack.c.b16 %v483, %v482
      %v595 = vpack.c.b16 %v485, %v484
      %v596 = vpack.c.b16 %v487, %v486
      %v597 = vpack.c.b16 %v489, %v488
      %v598 = vpack.c.b16 %v491, %v490
      %v599 = vpack.c.b16 %v493, %v492
      %v600 = vpack.c.b16 %v495, %v494
      %v601 = vpack.c.b16 %v497, %v496
      %v602 = vpack.c.b16 %v499, %v498
      %v603 = vpack.c.b16 %v501, %v500
      %v604 = vpack.c.b16 %v503, %v502
      %v605 = vpack.c.b16 %v505, %v504
      %v606 = vpack.c.b16 %v507, %v506
      %v607 = vpack.c.b16 %v509, %v508
      %v608 = vpack.c.b16 %v511, %v510
      %v609 = vpack.c.b16 %v513, %v512
      %v610 = vpack.c.b16 %v515, %v514
      %v611 = vpack.c.b16 %v517, %v516
      %v612 = vpack.c.b16 %v519, %v518
      %v613 = vpack.c.b16 %v521, %v520
      %v614 = vpack.c.b16 %v523, %v522
      %v615 = vpack.c.b16 %v525, %v524
      %v616 = vpack.c.b16 %v527, %v526
      %v617 = vpack.c.b16 %v529, %v528
      %v618 = vpack.c.b16 %v531, %v530
      %v619 = vpack.c.b16 %v533, %v532
      %v620 = vpack.c.b16 %v535, %v534
      %v621 = vpack.c.b16 %v537, %v536
      %v622 = vpack.c.b16 %v539, %v538
      %v623 = vpack.c.b16 %v541, %v540
      %v624 = vpack.c.b16 %v543, %v542
      %v625 = vpack.c.b16 %v545, %v544
      %v626 = vpack.c.b16 %v547, %v546
      %v627 = vpack.c.b16 %v549, %v548
      %v628 = vpack.c.b16 %v551, %v550
      %v629 = vpack.c.b16 %v553, %v552
      %v630 = vpack.c.b16 %v555, %v554
      %v631 = vpack.c.b16 %v557, %v556
      %v632 = vpack.c.b16 %v559, %v558
      %v633 = vpack.c.b16 %v561, %v560
      %v634 = vpack.c.b16 %v563, %v562
      %v635 = vpack.c.b16 %v565, %v564
      %v636 = vpack.c.b16 %v567, %v566
      %v637 = vpack.c.b16 %v569, %v568
      %v638 = vpack.c.b16 %v571, %v570
      %v639 = vpack.c.b16 %v573, %v572
      %v640 = vpack.c.b16 %v575, %v574
      %v641 = vpack.c.b16 %v577, %v576
      %v642 = vpack.c.b16 %v579, %v578
      %v643 = vpack.c.b16 %v581, %v580
      %v644 = vpack.c.b16 %v583, %v582
      %v645 = vpack.c.b16 %v585, %v584
      %v722 = vunpack.c.l.b16 %v325
      %v723 = vunpack.c.l.b16 %v326
      %v724 = vunpack.c.l.b16 %v327
      %v725 = vunpack.c.l.b16 %v328
      %v726 = vunpack.c.l.b16 %v329
      %v727 = vunpack.c.l.b16 %v330
      %v728 = vunpack.c.l.b16 %v331
      %v729 = vunpack.c.l.b16 %v332
      %v730 = vunpack.c.l.b16 %v333
      %v731 = vunpack.c.l.b16 %v334
      %v732 = vunpack.c.l.b16 %v335
      %v733 = vunpack.c.l.b16 %v336
      %v734 = vunpack.c.l.b16 %v337
      %v735 = vunpack.c.l.b16 %v338
      %v736 = vunpack.c.l.b16 %v339
      %v737 = vunpack.c.l.b16 %v340
      %v738 = vpack.c.b16 %v723, %v722
      %v739 = vpack.c.b16 %v725, %v724
      %v740 = vpack.c.b16 %v727, %v726
      %v741 = vpack.c.b16 %v729, %v728
      %v742 = vpack.c.b16 %v731, %v730
      %v743 = vpack.c.b16 %v733, %v732
      %v744 = vpack.c.b16 %v735, %v734
      %v745 = vpack.c.b16 %v737, %v736
      %754 = vmatprep.subr.bf16.mxu0 0
      %755 = vmatpush1.bf16.msra.mxu0 %v745
      %756 = vmatprep.subr.bf16.mxu0 0
      %757 = vmatpush1.bf16.msra.mxu0 %v744
      %758 = vmatprep.subr.bf16.mxu0 0
      %759 = vmatpush1.bf16.msra.mxu0 %v743
      %760 = vmatprep.subr.bf16.mxu0 0
      %761 = vmatpush1.bf16.msra.mxu0 %v742
      %762 = vmatprep.subr.bf16.mxu0 0
      %763 = vmatpush1.bf16.msra.mxu0 %v741
      %764 = vmatprep.subr.bf16.mxu0 0
      %765 = vmatpush1.bf16.msra.mxu0 %v740
      %766 = vmatprep.subr.bf16.mxu0 0
      %767 = vmatpush1.bf16.msra.mxu0 %v739
      %768 = vmatprep.subr.bf16.mxu0 0
      %769 = vmatpush1.bf16.msra.mxu0 %v738
      %770 = vmatprep.subr.bf16.mxu0 0
      %771 = vmatpush2.bf16.msra.mxu0 0
      %772 = vmatprep.subr.bf16.mxu0 0
      %773 = vmatpush2.bf16.msra.mxu0 0
      %774 = vmatprep.subr.bf16.mxu0 0
      %775 = vmatpush2.bf16.msra.mxu0 0
      %776 = vmatprep.subr.bf16.mxu0 0
      %777 = vmatpush2.bf16.msra.mxu0 0
      %778 = vmatprep.subr.bf16.mxu0 0
      %779 = vmatpush2.bf16.msra.mxu0 0
      %780 = vmatprep.subr.bf16.mxu0 0
      %781 = vmatpush2.bf16.msra.mxu0 0
      %782 = vmatprep.subr.bf16.mxu0 0
      %783 = vmatpush2.bf16.msra.mxu0 0
      %784 = vmatprep.subr.bf16.mxu0 0
      %785 = vmatpush2.bf16.msra.mxu0 0
      %786 = vmatprep.mubr.bf16.mxu0 0
      %787 = vmatmul.mubr.bf16.gmra.mxu0 %v586
      %v788 = vpop.f32.mrf.mxu0
      %v789 = vadd.f32 %v345, %v788
      %v790 = vpop.f32.mrf.mxu0
      %v791 = vpop.f32.mrf.mxu0
      %v792 = vadd.f32 %v345, %v791
      %v793 = vpop.f32.mrf.mxu0
      %794 = vmatprep.mubr.bf16.mxu0 0
      %795 = vmatmul.mubr.bf16.gmra.mxu0 %v587
      %v796 = vpop.f32.mrf.mxu0
      %v797 = vadd.f32 %v345, %v796
      %v798 = vpop.f32.mrf.mxu0
      %v799 = vpop.f32.mrf.mxu0
      %v800 = vadd.f32 %v345, %v799
      %v801 = vpop.f32.mrf.mxu0
      %802 = vmatprep.mubr.bf16.mxu0 0
      %803 = vmatmul.mubr.bf16.gmra.mxu0 %v588
      %v804 = vpop.f32.mrf.mxu0
      %v805 = vadd.f32 %v345, %v804
      %v806 = vpop.f32.mrf.mxu0
      %v807 = vpop.f32.mrf.mxu0
      %v808 = vadd.f32 %v345, %v807
      %v809 = vpop.f32.mrf.mxu0
      %810 = vmatprep.mubr.bf16.mxu0 0
      %811 = vmatmul.mubr.bf16.gmra.mxu0 %v589
      %v812 = vpop.f32.mrf.mxu0
      %v813 = vadd.f32 %v345, %v812
      %v814 = vpop.f32.mrf.mxu0
      %v815 = vpop.f32.mrf.mxu0
      %v816 = vadd.f32 %v345, %v815
      %v817 = vpop.f32.mrf.mxu0
      %818 = vmatprep.mubr.bf16.mxu0 0
      %819 = vmatmul.mubr.bf16.gmra.mxu0 %v590
      %v820 = vpop.f32.mrf.mxu0
      %v821 = vadd.f32 %v345, %v820
      %v822 = vpop.f32.mrf.mxu0
      %v823 = vpop.f32.mrf.mxu0
      %v824 = vadd.f32 %v345, %v823
      %v825 = vpop.f32.mrf.mxu0
      %826 = vmatprep.mubr.bf16.mxu0 0
      %827 = vmatmul.mubr.bf16.gmra.mxu0 %v591
      %v828 = vpop.f32.mrf.mxu0
      %v829 = vadd.f32 %v345, %v828
      %v830 = vpop.f32.mrf.mxu0
      %v831 = vpop.f32.mrf.mxu0
      %v832 = vadd.f32 %v345, %v831
      %v833 = vpop.f32.mrf.mxu0
      %834 = vmatprep.mubr.bf16.mxu0 0
      %835 = vmatmul.mubr.bf16.gmra.mxu0 %v592
      %v836 = vpop.f32.mrf.mxu0
      %v837 = vadd.f32 %v345, %v836
      %v838 = vpop.f32.mrf.mxu0
      %v839 = vpop.f32.mrf.mxu0
      %v840 = vadd.f32 %v345, %v839
      %v841 = vpop.f32.mrf.mxu0
      %842 = vmatprep.mubr.bf16.mxu0 0
      %843 = vmatmul.mubr.bf16.gmra.mxu0 %v593
      %v844 = vpop.f32.mrf.mxu0
      %v845 = vadd.f32 %v345, %v844
      %v846 = vpop.f32.mrf.mxu0
      %v847 = vpop.f32.mrf.mxu0
      %v848 = vadd.f32 %v345, %v847
      %v849 = vpop.f32.mrf.mxu0
      %850 = vmatprep.mubr.bf16.mxu0 0
      %851 = vmatmul.mubr.bf16.gmra.mxu0 %v594
      %v852 = vpop.f32.mrf.mxu0
      %v853 = vadd.f32 %v345, %v852
      %v854 = vpop.f32.mrf.mxu0
      %v855 = vpop.f32.mrf.mxu0
      %v856 = vadd.f32 %v345, %v855
      %v857 = vpop.f32.mrf.mxu0
      %858 = vmatprep.mubr.bf16.mxu0 0
      %859 = vmatmul.mubr.bf16.gmra.mxu0 %v595
      %v860 = vpop.f32.mrf.mxu0
      %v861 = vadd.f32 %v345, %v860
      %v862 = vpop.f32.mrf.mxu0
      %v863 = vpop.f32.mrf.mxu0
      %v864 = vadd.f32 %v345, %v863
      %v865 = vpop.f32.mrf.mxu0
      %866 = vmatprep.mubr.bf16.mxu0 0
      %867 = vmatmul.mubr.bf16.gmra.mxu0 %v596
      %v868 = vpop.f32.mrf.mxu0
      %v869 = vadd.f32 %v345, %v868
      %v870 = vpop.f32.mrf.mxu0
      %v871 = vpop.f32.mrf.mxu0
      %v872 = vadd.f32 %v345, %v871
      %v873 = vpop.f32.mrf.mxu0
      %874 = vmatprep.mubr.bf16.mxu0 0
      %875 = vmatmul.mubr.bf16.gmra.mxu0 %v597
      %v876 = vpop.f32.mrf.mxu0
      %v877 = vadd.f32 %v345, %v876
      %v878 = vpop.f32.mrf.mxu0
      %v879 = vpop.f32.mrf.mxu0
      %v880 = vadd.f32 %v345, %v879
      %v881 = vpop.f32.mrf.mxu0
      %882 = vmatprep.mubr.bf16.mxu0 0
      %883 = vmatmul.mubr.bf16.gmra.mxu0 %v598
      %v884 = vpop.f32.mrf.mxu0
      %v885 = vadd.f32 %v345, %v884
      %v886 = vpop.f32.mrf.mxu0
      %v887 = vpop.f32.mrf.mxu0
      %v888 = vadd.f32 %v345, %v887
      %v889 = vpop.f32.mrf.mxu0
      %890 = vmatprep.mubr.bf16.mxu0 0
      %891 = vmatmul.mubr.bf16.gmra.mxu0 %v599
      %v892 = vpop.f32.mrf.mxu0
      %v893 = vadd.f32 %v345, %v892
      %v894 = vpop.f32.mrf.mxu0
      %v895 = vpop.f32.mrf.mxu0
      %v896 = vadd.f32 %v345, %v895
      %v897 = vpop.f32.mrf.mxu0
      %898 = vmatprep.mubr.bf16.mxu0 0
      %899 = vmatmul.mubr.bf16.gmra.mxu0 %v600
      %v900 = vpop.f32.mrf.mxu0
      %v901 = vadd.f32 %v345, %v900
      %v902 = vpop.f32.mrf.mxu0
      %v903 = vpop.f32.mrf.mxu0
      %v904 = vadd.f32 %v345, %v903
      %v905 = vpop.f32.mrf.mxu0
      %906 = vmatprep.mubr.bf16.mxu0 0
      %907 = vmatmul.mubr.bf16.gmra.mxu0 %v601
      %v908 = vpop.f32.mrf.mxu0
      %v909 = vadd.f32 %v345, %v908
      %v910 = vpop.f32.mrf.mxu0
      %v911 = vpop.f32.mrf.mxu0
      %v912 = vadd.f32 %v345, %v911
      %v913 = vpop.f32.mrf.mxu0
      %914 = vmatprep.mubr.bf16.mxu0 0
      %915 = vmatmul.mubr.bf16.gmra.mxu0 %v602
      %v916 = vpop.f32.mrf.mxu0
      %v917 = vadd.f32 %v345, %v916
      %v918 = vpop.f32.mrf.mxu0
      %v919 = vpop.f32.mrf.mxu0
      %v920 = vadd.f32 %v345, %v919
      %v921 = vpop.f32.mrf.mxu0
      %922 = vmatprep.mubr.bf16.mxu0 0
      %923 = vmatmul.mubr.bf16.gmra.mxu0 %v603
      %v924 = vpop.f32.mrf.mxu0
      %v925 = vadd.f32 %v345, %v924
      %v926 = vpop.f32.mrf.mxu0
      %v927 = vpop.f32.mrf.mxu0
      %v928 = vadd.f32 %v345, %v927
      %v929 = vpop.f32.mrf.mxu0
      %930 = vmatprep.mubr.bf16.mxu0 0
      %931 = vmatmul.mubr.bf16.gmra.mxu0 %v604
      %v932 = vpop.f32.mrf.mxu0
      %v933 = vadd.f32 %v345, %v932
      %v934 = vpop.f32.mrf.mxu0
      %v935 = vpop.f32.mrf.mxu0
      %v936 = vadd.f32 %v345, %v935
      %v937 = vpop.f32.mrf.mxu0
      %938 = vmatprep.mubr.bf16.mxu0 0
      %939 = vmatmul.mubr.bf16.gmra.mxu0 %v605
      %v940 = vpop.f32.mrf.mxu0
      %v941 = vadd.f32 %v345, %v940
      %v942 = vpop.f32.mrf.mxu0
      %v943 = vpop.f32.mrf.mxu0
      %v944 = vadd.f32 %v345, %v943
      %v945 = vpop.f32.mrf.mxu0
      %946 = vmatprep.mubr.bf16.mxu0 0
      %947 = vmatmul.mubr.bf16.gmra.mxu0 %v606
      %v948 = vpop.f32.mrf.mxu0
      %v949 = vadd.f32 %v345, %v948
      %v950 = vpop.f32.mrf.mxu0
      %v951 = vpop.f32.mrf.mxu0
      %v952 = vadd.f32 %v345, %v951
      %v953 = vpop.f32.mrf.mxu0
      %954 = vmatprep.mubr.bf16.mxu0 0
      %955 = vmatmul.mubr.bf16.gmra.mxu0 %v607
      %v956 = vpop.f32.mrf.mxu0
      %v957 = vadd.f32 %v345, %v956
      %v958 = vpop.f32.mrf.mxu0
      %v959 = vpop.f32.mrf.mxu0
      %v960 = vadd.f32 %v345, %v959
      %v961 = vpop.f32.mrf.mxu0
      %962 = vmatprep.mubr.bf16.mxu0 0
      %963 = vmatmul.mubr.bf16.gmra.mxu0 %v608
      %v964 = vpop.f32.mrf.mxu0
      %v965 = vadd.f32 %v345, %v964
      %v966 = vpop.f32.mrf.mxu0
      %v967 = vpop.f32.mrf.mxu0
      %v968 = vadd.f32 %v345, %v967
      %v969 = vpop.f32.mrf.mxu0
      %970 = vmatprep.mubr.bf16.mxu0 0
      %971 = vmatmul.mubr.bf16.gmra.mxu0 %v609
      %v972 = vpop.f32.mrf.mxu0
      %v973 = vadd.f32 %v345, %v972
      %v974 = vpop.f32.mrf.mxu0
      %v975 = vpop.f32.mrf.mxu0
      %v976 = vadd.f32 %v345, %v975
      %v977 = vpop.f32.mrf.mxu0
      %978 = vmatprep.mubr.bf16.mxu0 0
      %979 = vmatmul.mubr.bf16.gmra.mxu0 %v610
      %v980 = vpop.f32.mrf.mxu0
      %v981 = vadd.f32 %v345, %v980
      %v982 = vpop.f32.mrf.mxu0
      %v983 = vpop.f32.mrf.mxu0
      %v984 = vadd.f32 %v345, %v983
      %v985 = vpop.f32.mrf.mxu0
      %986 = vmatprep.mubr.bf16.mxu0 0
      %987 = vmatmul.mubr.bf16.gmra.mxu0 %v611
      %v988 = vpop.f32.mrf.mxu0
      %v989 = vadd.f32 %v345, %v988
      %v990 = vpop.f32.mrf.mxu0
      %v991 = vpop.f32.mrf.mxu0
      %v992 = vadd.f32 %v345, %v991
      %v993 = vpop.f32.mrf.mxu0
      %994 = vmatprep.mubr.bf16.mxu0 0
      %995 = vmatmul.mubr.bf16.gmra.mxu0 %v612
      %v996 = vpop.f32.mrf.mxu0
      %v997 = vadd.f32 %v345, %v996
      %v998 = vpop.f32.mrf.mxu0
      %v999 = vpop.f32.mrf.mxu0
      %v1000 = vadd.f32 %v345, %v999
      %v1001 = vpop.f32.mrf.mxu0
      %1002 = vmatprep.mubr.bf16.mxu0 0
      %1003 = vmatmul.mubr.bf16.gmra.mxu0 %v613
      %v1004 = vpop.f32.mrf.mxu0
      %v1005 = vadd.f32 %v345, %v1004
      %v1006 = vpop.f32.mrf.mxu0
      %v1007 = vpop.f32.mrf.mxu0
      %v1008 = vadd.f32 %v345, %v1007
      %v1009 = vpop.f32.mrf.mxu0
      %1010 = vmatprep.mubr.bf16.mxu0 0
      %1011 = vmatmul.mubr.bf16.gmra.mxu0 %v614
      %v1012 = vpop.f32.mrf.mxu0
      %v1013 = vadd.f32 %v345, %v1012
      %v1014 = vpop.f32.mrf.mxu0
      %v1015 = vpop.f32.mrf.mxu0
      %v1016 = vadd.f32 %v345, %v1015
      %v1017 = vpop.f32.mrf.mxu0
      %1018 = vmatprep.mubr.bf16.mxu0 0
      %1019 = vmatmul.mubr.bf16.gmra.mxu0 %v615
      %v1020 = vpop.f32.mrf.mxu0
      %v1021 = vadd.f32 %v345, %v1020
      %v1022 = vpop.f32.mrf.mxu0
      %v1023 = vpop.f32.mrf.mxu0
      %v1024 = vadd.f32 %v345, %v1023
      %v1025 = vpop.f32.mrf.mxu0
      %1026 = vmatprep.mubr.bf16.mxu0 0
      %1027 = vmatmul.mubr.bf16.gmra.mxu0 %v616
      %v1028 = vpop.f32.mrf.mxu0
      %v1029 = vadd.f32 %v345, %v1028
      %v1030 = vpop.f32.mrf.mxu0
      %v1031 = vpop.f32.mrf.mxu0
      %v1032 = vadd.f32 %v345, %v1031
      %v1033 = vpop.f32.mrf.mxu0
      %1034 = vmatprep.mubr.bf16.mxu0 0
      %1035 = vmatmul.mubr.bf16.gmra.mxu0 %v617
      %v1036 = vpop.f32.mrf.mxu0
      %v1037 = vadd.f32 %v345, %v1036
      %v1038 = vpop.f32.mrf.mxu0
      %v1039 = vpop.f32.mrf.mxu0
      %v1040 = vadd.f32 %v345, %v1039
      %v1041 = vpop.f32.mrf.mxu0
      %1042 = vmatprep.mubr.bf16.mxu0 0
      %1043 = vmatmul.mubr.bf16.gmra.mxu0 %v618
      %v1044 = vpop.f32.mrf.mxu0
      %v1045 = vadd.f32 %v345, %v1044
      %v1046 = vpop.f32.mrf.mxu0
      %v1047 = vpop.f32.mrf.mxu0
      %v1048 = vadd.f32 %v345, %v1047
      %v1049 = vpop.f32.mrf.mxu0
      %1050 = vmatprep.mubr.bf16.mxu0 0
      %1051 = vmatmul.mubr.bf16.gmra.mxu0 %v619
      %v1052 = vpop.f32.mrf.mxu0
      %v1053 = vadd.f32 %v345, %v1052
      %v1054 = vpop.f32.mrf.mxu0
      %v1055 = vpop.f32.mrf.mxu0
      %v1056 = vadd.f32 %v345, %v1055
      %v1057 = vpop.f32.mrf.mxu0
      %1058 = vmatprep.mubr.bf16.mxu0 0
      %1059 = vmatmul.mubr.bf16.gmra.mxu0 %v620
      %v1060 = vpop.f32.mrf.mxu0
      %v1061 = vadd.f32 %v345, %v1060
      %v1062 = vpop.f32.mrf.mxu0
      %v1063 = vpop.f32.mrf.mxu0
      %v1064 = vadd.f32 %v345, %v1063
      %v1065 = vpop.f32.mrf.mxu0
      %1066 = vmatprep.mubr.bf16.mxu0 0
      %1067 = vmatmul.mubr.bf16.gmra.mxu0 %v621
      %v1068 = vpop.f32.mrf.mxu0
      %v1069 = vadd.f32 %v345, %v1068
      %v1070 = vpop.f32.mrf.mxu0
      %v1071 = vpop.f32.mrf.mxu0
      %v1072 = vadd.f32 %v345, %v1071
      %v1073 = vpop.f32.mrf.mxu0
      %1074 = vmatprep.mubr.bf16.mxu0 0
      %1075 = vmatmul.mubr.bf16.gmra.mxu0 %v622
      %v1076 = vpop.f32.mrf.mxu0
      %v1077 = vadd.f32 %v345, %v1076
      %v1078 = vpop.f32.mrf.mxu0
      %v1079 = vpop.f32.mrf.mxu0
      %v1080 = vadd.f32 %v345, %v1079
      %v1081 = vpop.f32.mrf.mxu0
      %1082 = vmatprep.mubr.bf16.mxu0 0
      %1083 = vmatmul.mubr.bf16.gmra.mxu0 %v623
      %v1084 = vpop.f32.mrf.mxu0
      %v1085 = vadd.f32 %v345, %v1084
      %v1086 = vpop.f32.mrf.mxu0
      %v1087 = vpop.f32.mrf.mxu0
      %v1088 = vadd.f32 %v345, %v1087
      %v1089 = vpop.f32.mrf.mxu0
      %1090 = vmatprep.mubr.bf16.mxu0 0
      %1091 = vmatmul.mubr.bf16.gmra.mxu0 %v624
      %v1092 = vpop.f32.mrf.mxu0
      %v1093 = vadd.f32 %v345, %v1092
      %v1094 = vpop.f32.mrf.mxu0
      %v1095 = vpop.f32.mrf.mxu0
      %v1096 = vadd.f32 %v345, %v1095
      %v1097 = vpop.f32.mrf.mxu0
      %1098 = vmatprep.mubr.bf16.mxu0 0
      %1099 = vmatmul.mubr.bf16.gmra.mxu0 %v625
      %v1100 = vpop.f32.mrf.mxu0
      %v1101 = vadd.f32 %v345, %v1100
      %v1102 = vpop.f32.mrf.mxu0
      %v1103 = vpop.f32.mrf.mxu0
      %v1104 = vadd.f32 %v345, %v1103
      %v1105 = vpop.f32.mrf.mxu0
      %1106 = vmatprep.mubr.bf16.mxu0 0
      %1107 = vmatmul.mubr.bf16.gmra.mxu0 %v626
      %v1108 = vpop.f32.mrf.mxu0
      %v1109 = vadd.f32 %v345, %v1108
      %v1110 = vpop.f32.mrf.mxu0
      %v1111 = vpop.f32.mrf.mxu0
      %v1112 = vadd.f32 %v345, %v1111
      %v1113 = vpop.f32.mrf.mxu0
      %1114 = vmatprep.mubr.bf16.mxu0 0
      %1115 = vmatmul.mubr.bf16.gmra.mxu0 %v627
      %v1116 = vpop.f32.mrf.mxu0
      %v1117 = vadd.f32 %v345, %v1116
      %v1118 = vpop.f32.mrf.mxu0
      %v1119 = vpop.f32.mrf.mxu0
      %v1120 = vadd.f32 %v345, %v1119
      %v1121 = vpop.f32.mrf.mxu0
      %1122 = vmatprep.mubr.bf16.mxu0 0
      %1123 = vmatmul.mubr.bf16.gmra.mxu0 %v628
      %v1124 = vpop.f32.mrf.mxu0
      %v1125 = vadd.f32 %v345, %v1124
      %v1126 = vpop.f32.mrf.mxu0
      %v1127 = vpop.f32.mrf.mxu0
      %v1128 = vadd.f32 %v345, %v1127
      %v1129 = vpop.f32.mrf.mxu0
      %1130 = vmatprep.mubr.bf16.mxu0 0
      %1131 = vmatmul.mubr.bf16.gmra.mxu0 %v629
      %v1132 = vpop.f32.mrf.mxu0
      %v1133 = vadd.f32 %v345, %v1132
      %v1134 = vpop.f32.mrf.mxu0
      %v1135 = vpop.f32.mrf.mxu0
      %v1136 = vadd.f32 %v345, %v1135
      %v1137 = vpop.f32.mrf.mxu0
      %1138 = vmatprep.mubr.bf16.mxu0 0
      %1139 = vmatmul.mubr.bf16.gmra.mxu0 %v630
      %v1140 = vpop.f32.mrf.mxu0
      %v1141 = vadd.f32 %v345, %v1140
      %v1142 = vpop.f32.mrf.mxu0
      %v1143 = vpop.f32.mrf.mxu0
      %v1144 = vadd.f32 %v345, %v1143
      %v1145 = vpop.f32.mrf.mxu0
      %1146 = vmatprep.mubr.bf16.mxu0 0
      %1147 = vmatmul.mubr.bf16.gmra.mxu0 %v631
      %v1148 = vpop.f32.mrf.mxu0
      %v1149 = vadd.f32 %v345, %v1148
      %v1150 = vpop.f32.mrf.mxu0
      %v1151 = vpop.f32.mrf.mxu0
      %v1152 = vadd.f32 %v345, %v1151
      %v1153 = vpop.f32.mrf.mxu0
      %1154 = vmatprep.mubr.bf16.mxu0 0
      %1155 = vmatmul.mubr.bf16.gmra.mxu0 %v632
      %v1156 = vpop.f32.mrf.mxu0
      %v1157 = vadd.f32 %v345, %v1156
      %v1158 = vpop.f32.mrf.mxu0
      %v1159 = vpop.f32.mrf.mxu0
      %v1160 = vadd.f32 %v345, %v1159
      %v1161 = vpop.f32.mrf.mxu0
      %1162 = vmatprep.mubr.bf16.mxu0 0
      %1163 = vmatmul.mubr.bf16.gmra.mxu0 %v633
      %v1164 = vpop.f32.mrf.mxu0
      %v1165 = vadd.f32 %v345, %v1164
      %v1166 = vpop.f32.mrf.mxu0
      %v1167 = vpop.f32.mrf.mxu0
      %v1168 = vadd.f32 %v345, %v1167
      %v1169 = vpop.f32.mrf.mxu0
      %1170 = vmatprep.mubr.bf16.mxu0 0
      %1171 = vmatmul.mubr.bf16.gmra.mxu0 %v634
      %v1172 = vpop.f32.mrf.mxu0
      %v1173 = vadd.f32 %v345, %v1172
      %v1174 = vpop.f32.mrf.mxu0
      %v1175 = vpop.f32.mrf.mxu0
      %v1176 = vadd.f32 %v345, %v1175
      %v1177 = vpop.f32.mrf.mxu0
      %1178 = vmatprep.mubr.bf16.mxu0 0
      %1179 = vmatmul.mubr.bf16.gmra.mxu0 %v635
      %v1180 = vpop.f32.mrf.mxu0
      %v1181 = vadd.f32 %v345, %v1180
      %v1182 = vpop.f32.mrf.mxu0
      %v1183 = vpop.f32.mrf.mxu0
      %v1184 = vadd.f32 %v345, %v1183
      %v1185 = vpop.f32.mrf.mxu0
      %1186 = vmatprep.mubr.bf16.mxu0 0
      %1187 = vmatmul.mubr.bf16.gmra.mxu0 %v636
      %v1188 = vpop.f32.mrf.mxu0
      %v1189 = vadd.f32 %v345, %v1188
      %v1190 = vpop.f32.mrf.mxu0
      %v1191 = vpop.f32.mrf.mxu0
      %v1192 = vadd.f32 %v345, %v1191
      %v1193 = vpop.f32.mrf.mxu0
      %1194 = vmatprep.mubr.bf16.mxu0 0
      %1195 = vmatmul.mubr.bf16.gmra.mxu0 %v637
      %v1196 = vpop.f32.mrf.mxu0
      %v1197 = vadd.f32 %v345, %v1196
      %v1198 = vpop.f32.mrf.mxu0
      %v1199 = vpop.f32.mrf.mxu0
      %v1200 = vadd.f32 %v345, %v1199
      %v1201 = vpop.f32.mrf.mxu0
      %1202 = vmatprep.mubr.bf16.mxu0 0
      %1203 = vmatmul.mubr.bf16.gmra.mxu0 %v638
      %v1204 = vpop.f32.mrf.mxu0
      %v1205 = vadd.f32 %v345, %v1204
      %v1206 = vpop.f32.mrf.mxu0
      %v1207 = vpop.f32.mrf.mxu0
      %v1208 = vadd.f32 %v345, %v1207
      %v1209 = vpop.f32.mrf.mxu0
      %1210 = vmatprep.mubr.bf16.mxu0 0
      %1211 = vmatmul.mubr.bf16.gmra.mxu0 %v639
      %v1212 = vpop.f32.mrf.mxu0
      %v1213 = vadd.f32 %v345, %v1212
      %v1214 = vpop.f32.mrf.mxu0
      %v1215 = vpop.f32.mrf.mxu0
      %v1216 = vadd.f32 %v345, %v1215
      %v1217 = vpop.f32.mrf.mxu0
      %1218 = vmatprep.mubr.bf16.mxu0 0
      %1219 = vmatmul.mubr.bf16.gmra.mxu0 %v640
      %v1220 = vpop.f32.mrf.mxu0
      %v1221 = vadd.f32 %v345, %v1220
      %v1222 = vpop.f32.mrf.mxu0
      %v1223 = vpop.f32.mrf.mxu0
      %v1224 = vadd.f32 %v345, %v1223
      %v1225 = vpop.f32.mrf.mxu0
      %1226 = vmatprep.mubr.bf16.mxu0 0
      %1227 = vmatmul.mubr.bf16.gmra.mxu0 %v641
      %v1228 = vpop.f32.mrf.mxu0
      %v1229 = vadd.f32 %v345, %v1228
      %v1230 = vpop.f32.mrf.mxu0
      %v1231 = vpop.f32.mrf.mxu0
      %v1232 = vadd.f32 %v345, %v1231
      %v1233 = vpop.f32.mrf.mxu0
      %1234 = vmatprep.mubr.bf16.mxu0 0
      %1235 = vmatmul.mubr.bf16.gmra.mxu0 %v642
      %v1236 = vpop.f32.mrf.mxu0
      %v1237 = vadd.f32 %v345, %v1236
      %v1238 = vpop.f32.mrf.mxu0
      %v1239 = vpop.f32.mrf.mxu0
      %v1240 = vadd.f32 %v345, %v1239
      %v1241 = vpop.f32.mrf.mxu0
      %1242 = vmatprep.mubr.bf16.mxu0 0
      %1243 = vmatmul.mubr.bf16.gmra.mxu0 %v643
      %v1244 = vpop.f32.mrf.mxu0
      %v1245 = vadd.f32 %v345, %v1244
      %v1246 = vpop.f32.mrf.mxu0
      %v1247 = vpop.f32.mrf.mxu0
      %v1248 = vadd.f32 %v345, %v1247
      %v1249 = vpop.f32.mrf.mxu0
      %1250 = vmatprep.mubr.bf16.mxu0 0
      %1251 = vmatmul.mubr.bf16.gmra.mxu0 %v644
      %v1252 = vpop.f32.mrf.mxu0
      %v1253 = vadd.f32 %v345, %v1252
      %v1254 = vpop.f32.mrf.mxu0
      %v1255 = vpop.f32.mrf.mxu0
      %v1256 = vadd.f32 %v345, %v1255
      %v1257 = vpop.f32.mrf.mxu0
      %1258 = vmatprep.mubr.bf16.mxu0 0
      %1259 = vmatmul.mubr.bf16.gmra.mxu0 %v645
      %v1260 = vpop.f32.mrf.mxu0
      %v1261 = vadd.f32 %v345, %v1260
      %v1262 = vpop.f32.mrf.mxu0
      %v1263 = vpop.f32.mrf.mxu0
      %v1264 = vadd.f32 %v345, %v1263
      %v1265 = vpop.f32.mrf.mxu0
      %1266 = vdwg.mxu0
      %v1267 = vmax.f32 %v789, 0.0
      %v1268 = vmax.f32 %v792, 0.0
      %v1269 = vmax.f32 %v797, 0.0
      %v1270 = vmax.f32 %v800, 0.0
      %v1271 = vmax.f32 %v805, 0.0
      %v1272 = vmax.f32 %v808, 0.0
      %v1273 = vmax.f32 %v813, 0.0
      %v1274 = vmax.f32 %v816, 0.0
      %v1275 = vmax.f32 %v821, 0.0
      %v1276 = vmax.f32 %v824, 0.0
      %v1277 = vmax.f32 %v829, 0.0
      %v1278 = vmax.f32 %v832, 0.0
      %v1279 = vmax.f32 %v837, 0.0
      %v1280 = vmax.f32 %v840, 0.0
      %v1281 = vmax.f32 %v845, 0.0
      %v1282 = vmax.f32 %v848, 0.0
      %v1283 = vmax.f32 %v853, 0.0
      %v1284 = vmax.f32 %v856, 0.0
      %v1285 = vmax.f32 %v861, 0.0
      %v1286 = vmax.f32 %v864, 0.0
      %v1287 = vmax.f32 %v869, 0.0
      %v1288 = vmax.f32 %v872, 0.0
      %v1289 = vmax.f32 %v877, 0.0
      %v1290 = vmax.f32 %v880, 0.0
      %v1291 = vmax.f32 %v885, 0.0
      %v1292 = vmax.f32 %v888, 0.0
      %v1293 = vmax.f32 %v893, 0.0
      %v1294 = vmax.f32 %v896, 0.0
      %v1295 = vmax.f32 %v901, 0.0
      %v1296 = vmax.f32 %v904, 0.0
      %v1297 = vmax.f32 %v909, 0.0
      %v1298 = vmax.f32 %v912, 0.0
      %v1299 = vmax.f32 %v917, 0.0
      %v1300 = vmax.f32 %v920, 0.0
      %v1301 = vmax.f32 %v925, 0.0
      %v1302 = vmax.f32 %v928, 0.0
      %v1303 = vmax.f32 %v933, 0.0
      %v1304 = vmax.f32 %v936, 0.0
      %v1305 = vmax.f32 %v941, 0.0
      %v1306 = vmax.f32 %v944, 0.0
      %v1307 = vmax.f32 %v949, 0.0
      %v1308 = vmax.f32 %v952, 0.0
      %v1309 = vmax.f32 %v957, 0.0
      %v1310 = vmax.f32 %v960, 0.0
      %v1311 = vmax.f32 %v965, 0.0
      %v1312 = vmax.f32 %v968, 0.0
      %v1313 = vmax.f32 %v973, 0.0
      %v1314 = vmax.f32 %v976, 0.0
      %v1315 = vmax.f32 %v981, 0.0
      %v1316 = vmax.f32 %v984, 0.0
      %v1317 = vmax.f32 %v989, 0.0
      %v1318 = vmax.f32 %v992, 0.0
      %v1319 = vmax.f32 %v997, 0.0
      %v1320 = vmax.f32 %v1000, 0.0
      %v1321 = vmax.f32 %v1005, 0.0
      %v1322 = vmax.f32 %v1008, 0.0
      %v1323 = vmax.f32 %v1013, 0.0
      %v1324 = vmax.f32 %v1016, 0.0
      %v1325 = vmax.f32 %v1021, 0.0
      %v1326 = vmax.f32 %v1024, 0.0
      %v1327 = vmax.f32 %v1029, 0.0
      %v1328 = vmax.f32 %v1032, 0.0
      %v1329 = vmax.f32 %v1037, 0.0
      %v1330 = vmax.f32 %v1040, 0.0
      %v1331 = vmax.f32 %v1045, 0.0
      %v1332 = vmax.f32 %v1048, 0.0
      %v1333 = vmax.f32 %v1053, 0.0
      %v1334 = vmax.f32 %v1056, 0.0
      %v1335 = vmax.f32 %v1061, 0.0
      %v1336 = vmax.f32 %v1064, 0.0
      %v1337 = vmax.f32 %v1069, 0.0
      %v1338 = vmax.f32 %v1072, 0.0
      %v1339 = vmax.f32 %v1077, 0.0
      %v1340 = vmax.f32 %v1080, 0.0
      %v1341 = vmax.f32 %v1085, 0.0
      %v1342 = vmax.f32 %v1088, 0.0
      %v1343 = vmax.f32 %v1093, 0.0
      %v1344 = vmax.f32 %v1096, 0.0
      %v1345 = vmax.f32 %v1101, 0.0
      %v1346 = vmax.f32 %v1104, 0.0
      %v1347 = vmax.f32 %v1109, 0.0
      %v1348 = vmax.f32 %v1112, 0.0
      %v1349 = vmax.f32 %v1117, 0.0
      %v1350 = vmax.f32 %v1120, 0.0
      %v1351 = vmax.f32 %v1125, 0.0
      %v1352 = vmax.f32 %v1128, 0.0
      %v1353 = vmax.f32 %v1133, 0.0
      %v1354 = vmax.f32 %v1136, 0.0
      %v1355 = vmax.f32 %v1141, 0.0
      %v1356 = vmax.f32 %v1144, 0.0
      %v1357 = vmax.f32 %v1149, 0.0
      %v1358 = vmax.f32 %v1152, 0.0
      %v1359 = vmax.f32 %v1157, 0.0
      %v1360 = vmax.f32 %v1160, 0.0
      %v1361 = vmax.f32 %v1165, 0.0
      %v1362 = vmax.f32 %v1168, 0.0
      %v1363 = vmax.f32 %v1173, 0.0
      %v1364 = vmax.f32 %v1176, 0.0
      %v1365 = vmax.f32 %v1181, 0.0
      %v1366 = vmax.f32 %v1184, 0.0
      %v1367 = vmax.f32 %v1189, 0.0
      %v1368 = vmax.f32 %v1192, 0.0
      %v1369 = vmax.f32 %v1197, 0.0
      %v1370 = vmax.f32 %v1200, 0.0
      %v1371 = vmax.f32 %v1205, 0.0
      %v1372 = vmax.f32 %v1208, 0.0
      %v1373 = vmax.f32 %v1213, 0.0
      %v1374 = vmax.f32 %v1216, 0.0
      %v1375 = vmax.f32 %v1221, 0.0
      %v1376 = vmax.f32 %v1224, 0.0
      %v1377 = vmax.f32 %v1229, 0.0
      %v1378 = vmax.f32 %v1232, 0.0
      %v1379 = vmax.f32 %v1237, 0.0
      %v1380 = vmax.f32 %v1240, 0.0
      %v1381 = vmax.f32 %v1245, 0.0
      %v1382 = vmax.f32 %v1248, 0.0
      %v1383 = vmax.f32 %v1253, 0.0
      %v1384 = vmax.f32 %v1256, 0.0
      %v1385 = vmax.f32 %v1261, 0.0
      %v1386 = vmax.f32 %v1264, 0.0
      %v1387 = vpack.c.bf16 %v1268, %v1267
      %v1388 = vpack.c.bf16 %v1270, %v1269
      %v1389 = vpack.c.bf16 %v1272, %v1271
      %v1390 = vpack.c.bf16 %v1274, %v1273
      %v1391 = vpack.c.bf16 %v1276, %v1275
      %v1392 = vpack.c.bf16 %v1278, %v1277
      %v1393 = vpack.c.bf16 %v1280, %v1279
      %v1394 = vpack.c.bf16 %v1282, %v1281
      %v1395 = vpack.c.bf16 %v1284, %v1283
      %v1396 = vpack.c.bf16 %v1286, %v1285
      %v1397 = vpack.c.bf16 %v1288, %v1287
      %v1398 = vpack.c.bf16 %v1290, %v1289
      %v1399 = vpack.c.bf16 %v1292, %v1291
      %v1400 = vpack.c.bf16 %v1294, %v1293
      %v1401 = vpack.c.bf16 %v1296, %v1295
      %v1402 = vpack.c.bf16 %v1298, %v1297
      %v1403 = vpack.c.bf16 %v1300, %v1299
      %v1404 = vpack.c.bf16 %v1302, %v1301
      %v1405 = vpack.c.bf16 %v1304, %v1303
      %v1406 = vpack.c.bf16 %v1306, %v1305
      %v1407 = vpack.c.bf16 %v1308, %v1307
      %v1408 = vpack.c.bf16 %v1310, %v1309
      %v1409 = vpack.c.bf16 %v1312, %v1311
      %v1410 = vpack.c.bf16 %v1314, %v1313
      %v1411 = vpack.c.bf16 %v1316, %v1315
      %v1412 = vpack.c.bf16 %v1318, %v1317
      %v1413 = vpack.c.bf16 %v1320, %v1319
      %v1414 = vpack.c.bf16 %v1322, %v1321
      %v1415 = vpack.c.bf16 %v1324, %v1323
      %v1416 = vpack.c.bf16 %v1326, %v1325
      %v1417 = vpack.c.bf16 %v1328, %v1327
      %v1418 = vpack.c.bf16 %v1330, %v1329
      %v1419 = vpack.c.bf16 %v1332, %v1331
      %v1420 = vpack.c.bf16 %v1334, %v1333
      %v1421 = vpack.c.bf16 %v1336, %v1335
      %v1422 = vpack.c.bf16 %v1338, %v1337
      %v1423 = vpack.c.bf16 %v1340, %v1339
      %v1424 = vpack.c.bf16 %v1342, %v1341
      %v1425 = vpack.c.bf16 %v1344, %v1343
      %v1426 = vpack.c.bf16 %v1346, %v1345
      %v1427 = vpack.c.bf16 %v1348, %v1347
      %v1428 = vpack.c.bf16 %v1350, %v1349
      %v1429 = vpack.c.bf16 %v1352, %v1351
      %v1430 = vpack.c.bf16 %v1354, %v1353
      %v1431 = vpack.c.bf16 %v1356, %v1355
      %v1432 = vpack.c.bf16 %v1358, %v1357
      %v1433 = vpack.c.bf16 %v1360, %v1359
      %v1434 = vpack.c.bf16 %v1362, %v1361
      %v1435 = vpack.c.bf16 %v1364, %v1363
      %v1436 = vpack.c.bf16 %v1366, %v1365
      %v1437 = vpack.c.bf16 %v1368, %v1367
      %v1438 = vpack.c.bf16 %v1370, %v1369
      %v1439 = vpack.c.bf16 %v1372, %v1371
      %v1440 = vpack.c.bf16 %v1374, %v1373
      %v1441 = vpack.c.bf16 %v1376, %v1375
      %v1442 = vpack.c.bf16 %v1378, %v1377
      %v1443 = vpack.c.bf16 %v1380, %v1379
      %v1444 = vpack.c.bf16 %v1382, %v1381
      %v1445 = vpack.c.bf16 %v1384, %v1383
      %v1446 = vpack.c.bf16 %v1386, %v1385
      %v1447 = vld [vmem:[%s1 + $0x40] sm:$0xf]
      %v1448 = vld [vmem:[%s1 + $0x44] sm:$0xf]
      %v1449 = vld [vmem:[%s1 + $0x48] sm:$0xf]
      %v1450 = vld [vmem:[%s1 + $0x4c] sm:$0xf]
      %v1451 = vld [vmem:[%s1 + $0x50] sm:$0xf]
      %v1452 = vld [vmem:[%s1 + $0x54] sm:$0xf]
      %v1453 = vld [vmem:[%s1 + $0x58] sm:$0xf]
      %v1454 = vld [vmem:[%s1 + $0x5c] sm:$0xf]
      %v1455 = vld [vmem:[%s1 + $0x60] sm:$0xf]
      %v1456 = vld [vmem:[%s1 + $0x64] sm:$0xf]
      %v1457 = vld [vmem:[%s1 + $0x68] sm:$0xf]
      %v1458 = vld [vmem:[%s1 + $0x6c] sm:$0xf]
      %v1459 = vld [vmem:[%s1 + $0x70] sm:$0xf]
      %v1460 = vld [vmem:[%s1 + $0x74] sm:$0xf]
      %v1461 = vld [vmem:[%s1 + $0x78] sm:$0xf]
      %v1462 = vld [vmem:[%s1 + $0x7c] sm:$0xf]
      %v1463 = vld [vmem:[%s2 + $0x1] sm:$0x1]
      %v1464 = vlaneseq
      %v1465 = vshrl.u32 %v1464, 7
      %v1466 = vsub.s32 0, %v1465
      %v1467 = vrot.slane %v1463, %v1466
      %v1484 = vunpack.c.l.b16 %v1447
      %v1485 = vunpack.c.l.b16 %v1448
      %v1486 = vunpack.c.l.b16 %v1449
      %v1487 = vunpack.c.l.b16 %v1450
      %v1488 = vunpack.c.l.b16 %v1451
      %v1489 = vunpack.c.l.b16 %v1452
      %v1490 = vunpack.c.l.b16 %v1453
      %v1491 = vunpack.c.l.b16 %v1454
      %v1492 = vunpack.c.l.b16 %v1455
      %v1493 = vunpack.c.l.b16 %v1456
      %v1494 = vunpack.c.l.b16 %v1457
      %v1495 = vunpack.c.l.b16 %v1458
      %v1496 = vunpack.c.l.b16 %v1459
      %v1497 = vunpack.c.l.b16 %v1460
      %v1498 = vunpack.c.l.b16 %v1461
      %v1499 = vunpack.c.l.b16 %v1462
      %v1500 = vpack.c.b16 %v1485, %v1484
      %v1501 = vpack.c.b16 %v1487, %v1486
      %v1502 = vpack.c.b16 %v1489, %v1488
      %v1503 = vpack.c.b16 %v1491, %v1490
      %v1504 = vpack.c.b16 %v1493, %v1492
      %v1505 = vpack.c.b16 %v1495, %v1494
      %v1506 = vpack.c.b16 %v1497, %v1496
      %v1507 = vpack.c.b16 %v1499, %v1498
      %1516 = vmatprep.subr.bf16.mxu0 0
      %1517 = vmatpush1.bf16.msra.mxu0 %v1507
      %1518 = vmatprep.subr.bf16.mxu0 0
      %1519 = vmatpush1.bf16.msra.mxu0 %v1506
      %1520 = vmatprep.subr.bf16.mxu0 0
      %1521 = vmatpush1.bf16.msra.mxu0 %v1505
      %1522 = vmatprep.subr.bf16.mxu0 0
      %1523 = vmatpush1.bf16.msra.mxu0 %v1504
      %1524 = vmatprep.subr.bf16.mxu0 0
      %1525 = vmatpush1.bf16.msra.mxu0 %v1503
      %1526 = vmatprep.subr.bf16.mxu0 0
      %1527 = vmatpush1.bf16.msra.mxu0 %v1502
      %1528 = vmatprep.subr.bf16.mxu0 0
      %1529 = vmatpush1.bf16.msra.mxu0 %v1501
      %1530 = vmatprep.subr.bf16.mxu0 0
      %1531 = vmatpush1.bf16.msra.mxu0 %v1500
      %1532 = vmatprep.subr.bf16.mxu0 0
      %1533 = vmatpush2.bf16.msra.mxu0 0
      %1534 = vmatprep.subr.bf16.mxu0 0
      %1535 = vmatpush2.bf16.msra.mxu0 0
      %1536 = vmatprep.subr.bf16.mxu0 0
      %1537 = vmatpush2.bf16.msra.mxu0 0
      %1538 = vmatprep.subr.bf16.mxu0 0
      %1539 = vmatpush2.bf16.msra.mxu0 0
      %1540 = vmatprep.subr.bf16.mxu0 0
      %1541 = vmatpush2.bf16.msra.mxu0 0
      %1542 = vmatprep.subr.bf16.mxu0 0
      %1543 = vmatpush2.bf16.msra.mxu0 0
      %1544 = vmatprep.subr.bf16.mxu0 0
      %1545 = vmatpush2.bf16.msra.mxu0 0
      %1546 = vmatprep.subr.bf16.mxu0 0
      %1547 = vmatpush2.bf16.msra.mxu0 0
      %1548 = vmatprep.mubr.bf16.mxu0 0
      %1549 = vmatmul.mubr.bf16.gmra.mxu0 %v1387
      %v1550 = vpop.f32.mrf.mxu0
      %v1551 = vadd.f32 %v1467, %v1550
      %v1552 = vpop.f32.mrf.mxu0
      %v1553 = vpop.f32.mrf.mxu0
      %v1554 = vadd.f32 %v1467, %v1553
      %v1555 = vpop.f32.mrf.mxu0
      %1556 = vmatprep.mubr.bf16.mxu0 0
      %1557 = vmatmul.mubr.bf16.gmra.mxu0 %v1388
      %v1558 = vpop.f32.mrf.mxu0
      %v1559 = vadd.f32 %v1467, %v1558
      %v1560 = vpop.f32.mrf.mxu0
      %v1561 = vpop.f32.mrf.mxu0
      %v1562 = vadd.f32 %v1467, %v1561
      %v1563 = vpop.f32.mrf.mxu0
      %1564 = vmatprep.mubr.bf16.mxu0 0
      %1565 = vmatmul.mubr.bf16.gmra.mxu0 %v1389
      %v1566 = vpop.f32.mrf.mxu0
      %v1567 = vadd.f32 %v1467, %v1566
      %v1568 = vpop.f32.mrf.mxu0
      %v1569 = vpop.f32.mrf.mxu0
      %v1570 = vadd.f32 %v1467, %v1569
      %v1571 = vpop.f32.mrf.mxu0
      %1572 = vmatprep.mubr.bf16.mxu0 0
      %1573 = vmatmul.mubr.bf16.gmra.mxu0 %v1390
      %v1574 = vpop.f32.mrf.mxu0
      %v1575 = vadd.f32 %v1467, %v1574
      %v1576 = vpop.f32.mrf.mxu0
      %v1577 = vpop.f32.mrf.mxu0
      %v1578 = vadd.f32 %v1467, %v1577
      %v1579 = vpop.f32.mrf.mxu0
      %1580 = vmatprep.mubr.bf16.mxu0 0
      %1581 = vmatmul.mubr.bf16.gmra.mxu0 %v1391
      %v1582 = vpop.f32.mrf.mxu0
      %v1583 = vadd.f32 %v1467, %v1582
      %v1584 = vpop.f32.mrf.mxu0
      %v1585 = vpop.f32.mrf.mxu0
      %v1586 = vadd.f32 %v1467, %v1585
      %v1587 = vpop.f32.mrf.mxu0
      %1588 = vmatprep.mubr.bf16.mxu0 0
      %1589 = vmatmul.mubr.bf16.gmra.mxu0 %v1392
      %v1590 = vpop.f32.mrf.mxu0
      %v1591 = vadd.f32 %v1467, %v1590
      %v1592 = vpop.f32.mrf.mxu0
      %v1593 = vpop.f32.mrf.mxu0
      %v1594 = vadd.f32 %v1467, %v1593
      %v1595 = vpop.f32.mrf.mxu0
      %1596 = vmatprep.mubr.bf16.mxu0 0
      %1597 = vmatmul.mubr.bf16.gmra.mxu0 %v1393
      %v1598 = vpop.f32.mrf.mxu0
      %v1599 = vadd.f32 %v1467, %v1598
      %v1600 = vpop.f32.mrf.mxu0
      %v1601 = vpop.f32.mrf.mxu0
      %v1602 = vadd.f32 %v1467, %v1601
      %v1603 = vpop.f32.mrf.mxu0
      %1604 = vmatprep.mubr.bf16.mxu0 0
      %1605 = vmatmul.mubr.bf16.gmra.mxu0 %v1394
      %v1606 = vpop.f32.mrf.mxu0
      %v1607 = vadd.f32 %v1467, %v1606
      %v1608 = vpop.f32.mrf.mxu0
      %v1609 = vpop.f32.mrf.mxu0
      %v1610 = vadd.f32 %v1467, %v1609
      %v1611 = vpop.f32.mrf.mxu0
      %1612 = vmatprep.mubr.bf16.mxu0 0
      %1613 = vmatmul.mubr.bf16.gmra.mxu0 %v1395
      %v1614 = vpop.f32.mrf.mxu0
      %v1615 = vadd.f32 %v1467, %v1614
      %v1616 = vpop.f32.mrf.mxu0
      %v1617 = vpop.f32.mrf.mxu0
      %v1618 = vadd.f32 %v1467, %v1617
      %v1619 = vpop.f32.mrf.mxu0
      %1620 = vmatprep.mubr.bf16.mxu0 0
      %1621 = vmatmul.mubr.bf16.gmra.mxu0 %v1396
      %v1622 = vpop.f32.mrf.mxu0
      %v1623 = vadd.f32 %v1467, %v1622
      %v1624 = vpop.f32.mrf.mxu0
      %v1625 = vpop.f32.mrf.mxu0
      %v1626 = vadd.f32 %v1467, %v1625
      %v1627 = vpop.f32.mrf.mxu0
      %1628 = vmatprep.mubr.bf16.mxu0 0
      %1629 = vmatmul.mubr.bf16.gmra.mxu0 %v1397
      %v1630 = vpop.f32.mrf.mxu0
      %v1631 = vadd.f32 %v1467, %v1630
      %v1632 = vpop.f32.mrf.mxu0
      %v1633 = vpop.f32.mrf.mxu0
      %v1634 = vadd.f32 %v1467, %v1633
      %v1635 = vpop.f32.mrf.mxu0
      %1636 = vmatprep.mubr.bf16.mxu0 0
      %1637 = vmatmul.mubr.bf16.gmra.mxu0 %v1398
      %v1638 = vpop.f32.mrf.mxu0
      %v1639 = vadd.f32 %v1467, %v1638
      %v1640 = vpop.f32.mrf.mxu0
      %v1641 = vpop.f32.mrf.mxu0
      %v1642 = vadd.f32 %v1467, %v1641
      %v1643 = vpop.f32.mrf.mxu0
      %1644 = vmatprep.mubr.bf16.mxu0 0
      %1645 = vmatmul.mubr.bf16.gmra.mxu0 %v1399
      %v1646 = vpop.f32.mrf.mxu0
      %v1647 = vadd.f32 %v1467, %v1646
      %v1648 = vpop.f32.mrf.mxu0
      %v1649 = vpop.f32.mrf.mxu0
      %v1650 = vadd.f32 %v1467, %v1649
      %v1651 = vpop.f32.mrf.mxu0
      %1652 = vmatprep.mubr.bf16.mxu0 0
      %1653 = vmatmul.mubr.bf16.gmra.mxu0 %v1400
      %v1654 = vpop.f32.mrf.mxu0
      %v1655 = vadd.f32 %v1467, %v1654
      %v1656 = vpop.f32.mrf.mxu0
      %v1657 = vpop.f32.mrf.mxu0
      %v1658 = vadd.f32 %v1467, %v1657
      %v1659 = vpop.f32.mrf.mxu0
      %1660 = vmatprep.mubr.bf16.mxu0 0
      %1661 = vmatmul.mubr.bf16.gmra.mxu0 %v1401
      %v1662 = vpop.f32.mrf.mxu0
      %v1663 = vadd.f32 %v1467, %v1662
      %v1664 = vpop.f32.mrf.mxu0
      %v1665 = vpop.f32.mrf.mxu0
      %v1666 = vadd.f32 %v1467, %v1665
      %v1667 = vpop.f32.mrf.mxu0
      %1668 = vmatprep.mubr.bf16.mxu0 0
      %1669 = vmatmul.mubr.bf16.gmra.mxu0 %v1402
      %v1670 = vpop.f32.mrf.mxu0
      %v1671 = vadd.f32 %v1467, %v1670
      %v1672 = vpop.f32.mrf.mxu0
      %v1673 = vpop.f32.mrf.mxu0
      %v1674 = vadd.f32 %v1467, %v1673
      %v1675 = vpop.f32.mrf.mxu0
      %1676 = vmatprep.mubr.bf16.mxu0 0
      %1677 = vmatmul.mubr.bf16.gmra.mxu0 %v1403
      %v1678 = vpop.f32.mrf.mxu0
      %v1679 = vadd.f32 %v1467, %v1678
      %v1680 = vpop.f32.mrf.mxu0
      %v1681 = vpop.f32.mrf.mxu0
      %v1682 = vadd.f32 %v1467, %v1681
      %v1683 = vpop.f32.mrf.mxu0
      %1684 = vmatprep.mubr.bf16.mxu0 0
      %1685 = vmatmul.mubr.bf16.gmra.mxu0 %v1404
      %v1686 = vpop.f32.mrf.mxu0
      %v1687 = vadd.f32 %v1467, %v1686
      %v1688 = vpop.f32.mrf.mxu0
      %v1689 = vpop.f32.mrf.mxu0
      %v1690 = vadd.f32 %v1467, %v1689
      %v1691 = vpop.f32.mrf.mxu0
      %1692 = vmatprep.mubr.bf16.mxu0 0
      %1693 = vmatmul.mubr.bf16.gmra.mxu0 %v1405
      %v1694 = vpop.f32.mrf.mxu0
      %v1695 = vadd.f32 %v1467, %v1694
      %v1696 = vpop.f32.mrf.mxu0
      %v1697 = vpop.f32.mrf.mxu0
      %v1698 = vadd.f32 %v1467, %v1697
      %v1699 = vpop.f32.mrf.mxu0
      %1700 = vmatprep.mubr.bf16.mxu0 0
      %1701 = vmatmul.mubr.bf16.gmra.mxu0 %v1406
      %v1702 = vpop.f32.mrf.mxu0
      %v1703 = vadd.f32 %v1467, %v1702
      %v1704 = vpop.f32.mrf.mxu0
      %v1705 = vpop.f32.mrf.mxu0
      %v1706 = vadd.f32 %v1467, %v1705
      %v1707 = vpop.f32.mrf.mxu0
      %1708 = vmatprep.mubr.bf16.mxu0 0
      %1709 = vmatmul.mubr.bf16.gmra.mxu0 %v1407
      %v1710 = vpop.f32.mrf.mxu0
      %v1711 = vadd.f32 %v1467, %v1710
      %v1712 = vpop.f32.mrf.mxu0
      %v1713 = vpop.f32.mrf.mxu0
      %v1714 = vadd.f32 %v1467, %v1713
      %v1715 = vpop.f32.mrf.mxu0
      %1716 = vmatprep.mubr.bf16.mxu0 0
      %1717 = vmatmul.mubr.bf16.gmra.mxu0 %v1408
      %v1718 = vpop.f32.mrf.mxu0
      %v1719 = vadd.f32 %v1467, %v1718
      %v1720 = vpop.f32.mrf.mxu0
      %v1721 = vpop.f32.mrf.mxu0
      %v1722 = vadd.f32 %v1467, %v1721
      %v1723 = vpop.f32.mrf.mxu0
      %1724 = vmatprep.mubr.bf16.mxu0 0
      %1725 = vmatmul.mubr.bf16.gmra.mxu0 %v1409
      %v1726 = vpop.f32.mrf.mxu0
      %v1727 = vadd.f32 %v1467, %v1726
      %v1728 = vpop.f32.mrf.mxu0
      %v1729 = vpop.f32.mrf.mxu0
      %v1730 = vadd.f32 %v1467, %v1729
      %v1731 = vpop.f32.mrf.mxu0
      %1732 = vmatprep.mubr.bf16.mxu0 0
      %1733 = vmatmul.mubr.bf16.gmra.mxu0 %v1410
      %v1734 = vpop.f32.mrf.mxu0
      %v1735 = vadd.f32 %v1467, %v1734
      %v1736 = vpop.f32.mrf.mxu0
      %v1737 = vpop.f32.mrf.mxu0
      %v1738 = vadd.f32 %v1467, %v1737
      %v1739 = vpop.f32.mrf.mxu0
      %1740 = vmatprep.mubr.bf16.mxu0 0
      %1741 = vmatmul.mubr.bf16.gmra.mxu0 %v1411
      %v1742 = vpop.f32.mrf.mxu0
      %v1743 = vadd.f32 %v1467, %v1742
      %v1744 = vpop.f32.mrf.mxu0
      %v1745 = vpop.f32.mrf.mxu0
      %v1746 = vadd.f32 %v1467, %v1745
      %v1747 = vpop.f32.mrf.mxu0
      %1748 = vmatprep.mubr.bf16.mxu0 0
      %1749 = vmatmul.mubr.bf16.gmra.mxu0 %v1412
      %v1750 = vpop.f32.mrf.mxu0
      %v1751 = vadd.f32 %v1467, %v1750
      %v1752 = vpop.f32.mrf.mxu0
      %v1753 = vpop.f32.mrf.mxu0
      %v1754 = vadd.f32 %v1467, %v1753
      %v1755 = vpop.f32.mrf.mxu0
      %1756 = vmatprep.mubr.bf16.mxu0 0
      %1757 = vmatmul.mubr.bf16.gmra.mxu0 %v1413
      %v1758 = vpop.f32.mrf.mxu0
      %v1759 = vadd.f32 %v1467, %v1758
      %v1760 = vpop.f32.mrf.mxu0
      %v1761 = vpop.f32.mrf.mxu0
      %v1762 = vadd.f32 %v1467, %v1761
      %v1763 = vpop.f32.mrf.mxu0
      %1764 = vmatprep.mubr.bf16.mxu0 0
      %1765 = vmatmul.mubr.bf16.gmra.mxu0 %v1414
      %v1766 = vpop.f32.mrf.mxu0
      %v1767 = vadd.f32 %v1467, %v1766
      %v1768 = vpop.f32.mrf.mxu0
      %v1769 = vpop.f32.mrf.mxu0
      %v1770 = vadd.f32 %v1467, %v1769
      %v1771 = vpop.f32.mrf.mxu0
      %1772 = vmatprep.mubr.bf16.mxu0 0
      %1773 = vmatmul.mubr.bf16.gmra.mxu0 %v1415
      %v1774 = vpop.f32.mrf.mxu0
      %v1775 = vadd.f32 %v1467, %v1774
      %v1776 = vpop.f32.mrf.mxu0
      %v1777 = vpop.f32.mrf.mxu0
      %v1778 = vadd.f32 %v1467, %v1777
      %v1779 = vpop.f32.mrf.mxu0
      %1780 = vmatprep.mubr.bf16.mxu0 0
      %1781 = vmatmul.mubr.bf16.gmra.mxu0 %v1416
      %v1782 = vpop.f32.mrf.mxu0
      %v1783 = vadd.f32 %v1467, %v1782
      %v1784 = vpop.f32.mrf.mxu0
      %v1785 = vpop.f32.mrf.mxu0
      %v1786 = vadd.f32 %v1467, %v1785
      %v1787 = vpop.f32.mrf.mxu0
      %1788 = vmatprep.mubr.bf16.mxu0 0
      %1789 = vmatmul.mubr.bf16.gmra.mxu0 %v1417
      %v1790 = vpop.f32.mrf.mxu0
      %v1791 = vadd.f32 %v1467, %v1790
      %v1792 = vpop.f32.mrf.mxu0
      %v1793 = vpop.f32.mrf.mxu0
      %v1794 = vadd.f32 %v1467, %v1793
      %v1795 = vpop.f32.mrf.mxu0
      %1796 = vmatprep.mubr.bf16.mxu0 0
      %1797 = vmatmul.mubr.bf16.gmra.mxu0 %v1418
      %v1798 = vpop.f32.mrf.mxu0
      %v1799 = vadd.f32 %v1467, %v1798
      %v1800 = vpop.f32.mrf.mxu0
      %v1801 = vpop.f32.mrf.mxu0
      %v1802 = vadd.f32 %v1467, %v1801
      %v1803 = vpop.f32.mrf.mxu0
      %1804 = vmatprep.mubr.bf16.mxu0 0
      %1805 = vmatmul.mubr.bf16.gmra.mxu0 %v1419
      %v1806 = vpop.f32.mrf.mxu0
      %v1807 = vadd.f32 %v1467, %v1806
      %v1808 = vpop.f32.mrf.mxu0
      %v1809 = vpop.f32.mrf.mxu0
      %v1810 = vadd.f32 %v1467, %v1809
      %v1811 = vpop.f32.mrf.mxu0
      %1812 = vmatprep.mubr.bf16.mxu0 0
      %1813 = vmatmul.mubr.bf16.gmra.mxu0 %v1420
      %v1814 = vpop.f32.mrf.mxu0
      %v1815 = vadd.f32 %v1467, %v1814
      %v1816 = vpop.f32.mrf.mxu0
      %v1817 = vpop.f32.mrf.mxu0
      %v1818 = vadd.f32 %v1467, %v1817
      %v1819 = vpop.f32.mrf.mxu0
      %1820 = vmatprep.mubr.bf16.mxu0 0
      %1821 = vmatmul.mubr.bf16.gmra.mxu0 %v1421
      %v1822 = vpop.f32.mrf.mxu0
      %v1823 = vadd.f32 %v1467, %v1822
      %v1824 = vpop.f32.mrf.mxu0
      %v1825 = vpop.f32.mrf.mxu0
      %v1826 = vadd.f32 %v1467, %v1825
      %v1827 = vpop.f32.mrf.mxu0
      %1828 = vmatprep.mubr.bf16.mxu0 0
      %1829 = vmatmul.mubr.bf16.gmra.mxu0 %v1422
      %v1830 = vpop.f32.mrf.mxu0
      %v1831 = vadd.f32 %v1467, %v1830
      %v1832 = vpop.f32.mrf.mxu0
      %v1833 = vpop.f32.mrf.mxu0
      %v1834 = vadd.f32 %v1467, %v1833
      %v1835 = vpop.f32.mrf.mxu0
      %1836 = vmatprep.mubr.bf16.mxu0 0
      %1837 = vmatmul.mubr.bf16.gmra.mxu0 %v1423
      %v1838 = vpop.f32.mrf.mxu0
      %v1839 = vadd.f32 %v1467, %v1838
      %v1840 = vpop.f32.mrf.mxu0
      %v1841 = vpop.f32.mrf.mxu0
      %v1842 = vadd.f32 %v1467, %v1841
      %v1843 = vpop.f32.mrf.mxu0
      %1844 = vmatprep.mubr.bf16.mxu0 0
      %1845 = vmatmul.mubr.bf16.gmra.mxu0 %v1424
      %v1846 = vpop.f32.mrf.mxu0
      %v1847 = vadd.f32 %v1467, %v1846
      %v1848 = vpop.f32.mrf.mxu0
      %v1849 = vpop.f32.mrf.mxu0
      %v1850 = vadd.f32 %v1467, %v1849
      %v1851 = vpop.f32.mrf.mxu0
      %1852 = vmatprep.mubr.bf16.mxu0 0
      %1853 = vmatmul.mubr.bf16.gmra.mxu0 %v1425
      %v1854 = vpop.f32.mrf.mxu0
      %v1855 = vadd.f32 %v1467, %v1854
      %v1856 = vpop.f32.mrf.mxu0
      %v1857 = vpop.f32.mrf.mxu0
      %v1858 = vadd.f32 %v1467, %v1857
      %v1859 = vpop.f32.mrf.mxu0
      %1860 = vmatprep.mubr.bf16.mxu0 0
      %1861 = vmatmul.mubr.bf16.gmra.mxu0 %v1426
      %v1862 = vpop.f32.mrf.mxu0
      %v1863 = vadd.f32 %v1467, %v1862
      %v1864 = vpop.f32.mrf.mxu0
      %v1865 = vpop.f32.mrf.mxu0
      %v1866 = vadd.f32 %v1467, %v1865
      %v1867 = vpop.f32.mrf.mxu0
      %1868 = vmatprep.mubr.bf16.mxu0 0
      %1869 = vmatmul.mubr.bf16.gmra.mxu0 %v1427
      %v1870 = vpop.f32.mrf.mxu0
      %v1871 = vadd.f32 %v1467, %v1870
      %v1872 = vpop.f32.mrf.mxu0
      %v1873 = vpop.f32.mrf.mxu0
      %v1874 = vadd.f32 %v1467, %v1873
      %v1875 = vpop.f32.mrf.mxu0
      %1876 = vmatprep.mubr.bf16.mxu0 0
      %1877 = vmatmul.mubr.bf16.gmra.mxu0 %v1428
      %v1878 = vpop.f32.mrf.mxu0
      %v1879 = vadd.f32 %v1467, %v1878
      %v1880 = vpop.f32.mrf.mxu0
      %v1881 = vpop.f32.mrf.mxu0
      %v1882 = vadd.f32 %v1467, %v1881
      %v1883 = vpop.f32.mrf.mxu0
      %1884 = vmatprep.mubr.bf16.mxu0 0
      %1885 = vmatmul.mubr.bf16.gmra.mxu0 %v1429
      %v1886 = vpop.f32.mrf.mxu0
      %v1887 = vadd.f32 %v1467, %v1886
      %v1888 = vpop.f32.mrf.mxu0
      %v1889 = vpop.f32.mrf.mxu0
      %v1890 = vadd.f32 %v1467, %v1889
      %v1891 = vpop.f32.mrf.mxu0
      %1892 = vmatprep.mubr.bf16.mxu0 0
      %1893 = vmatmul.mubr.bf16.gmra.mxu0 %v1430
      %v1894 = vpop.f32.mrf.mxu0
      %v1895 = vadd.f32 %v1467, %v1894
      %v1896 = vpop.f32.mrf.mxu0
      %v1897 = vpop.f32.mrf.mxu0
      %v1898 = vadd.f32 %v1467, %v1897
      %v1899 = vpop.f32.mrf.mxu0
      %1900 = vmatprep.mubr.bf16.mxu0 0
      %1901 = vmatmul.mubr.bf16.gmra.mxu0 %v1431
      %v1902 = vpop.f32.mrf.mxu0
      %v1903 = vadd.f32 %v1467, %v1902
      %v1904 = vpop.f32.mrf.mxu0
      %v1905 = vpop.f32.mrf.mxu0
      %v1906 = vadd.f32 %v1467, %v1905
      %v1907 = vpop.f32.mrf.mxu0
      %1908 = vmatprep.mubr.bf16.mxu0 0
      %1909 = vmatmul.mubr.bf16.gmra.mxu0 %v1432
      %v1910 = vpop.f32.mrf.mxu0
      %v1911 = vadd.f32 %v1467, %v1910
      %v1912 = vpop.f32.mrf.mxu0
      %v1913 = vpop.f32.mrf.mxu0
      %v1914 = vadd.f32 %v1467, %v1913
      %v1915 = vpop.f32.mrf.mxu0
      %1916 = vmatprep.mubr.bf16.mxu0 0
      %1917 = vmatmul.mubr.bf16.gmra.mxu0 %v1433
      %v1918 = vpop.f32.mrf.mxu0
      %v1919 = vadd.f32 %v1467, %v1918
      %v1920 = vpop.f32.mrf.mxu0
      %v1921 = vpop.f32.mrf.mxu0
      %v1922 = vadd.f32 %v1467, %v1921
      %v1923 = vpop.f32.mrf.mxu0
      %1924 = vmatprep.mubr.bf16.mxu0 0
      %1925 = vmatmul.mubr.bf16.gmra.mxu0 %v1434
      %v1926 = vpop.f32.mrf.mxu0
      %v1927 = vadd.f32 %v1467, %v1926
      %v1928 = vpop.f32.mrf.mxu0
      %v1929 = vpop.f32.mrf.mxu0
      %v1930 = vadd.f32 %v1467, %v1929
      %v1931 = vpop.f32.mrf.mxu0
      %1932 = vmatprep.mubr.bf16.mxu0 0
      %1933 = vmatmul.mubr.bf16.gmra.mxu0 %v1435
      %v1934 = vpop.f32.mrf.mxu0
      %v1935 = vadd.f32 %v1467, %v1934
      %v1936 = vpop.f32.mrf.mxu0
      %v1937 = vpop.f32.mrf.mxu0
      %v1938 = vadd.f32 %v1467, %v1937
      %v1939 = vpop.f32.mrf.mxu0
      %1940 = vmatprep.mubr.bf16.mxu0 0
      %1941 = vmatmul.mubr.bf16.gmra.mxu0 %v1436
      %v1942 = vpop.f32.mrf.mxu0
      %v1943 = vadd.f32 %v1467, %v1942
      %v1944 = vpop.f32.mrf.mxu0
      %v1945 = vpop.f32.mrf.mxu0
      %v1946 = vadd.f32 %v1467, %v1945
      %v1947 = vpop.f32.mrf.mxu0
      %1948 = vmatprep.mubr.bf16.mxu0 0
      %1949 = vmatmul.mubr.bf16.gmra.mxu0 %v1437
      %v1950 = vpop.f32.mrf.mxu0
      %v1951 = vadd.f32 %v1467, %v1950
      %v1952 = vpop.f32.mrf.mxu0
      %v1953 = vpop.f32.mrf.mxu0
      %v1954 = vadd.f32 %v1467, %v1953
      %v1955 = vpop.f32.mrf.mxu0
      %1956 = vmatprep.mubr.bf16.mxu0 0
      %1957 = vmatmul.mubr.bf16.gmra.mxu0 %v1438
      %v1958 = vpop.f32.mrf.mxu0
      %v1959 = vadd.f32 %v1467, %v1958
      %v1960 = vpop.f32.mrf.mxu0
      %v1961 = vpop.f32.mrf.mxu0
      %v1962 = vadd.f32 %v1467, %v1961
      %v1963 = vpop.f32.mrf.mxu0
      %1964 = vmatprep.mubr.bf16.mxu0 0
      %1965 = vmatmul.mubr.bf16.gmra.mxu0 %v1439
      %v1966 = vpop.f32.mrf.mxu0
      %v1967 = vadd.f32 %v1467, %v1966
      %v1968 = vpop.f32.mrf.mxu0
      %v1969 = vpop.f32.mrf.mxu0
      %v1970 = vadd.f32 %v1467, %v1969
      %v1971 = vpop.f32.mrf.mxu0
      %1972 = vmatprep.mubr.bf16.mxu0 0
      %1973 = vmatmul.mubr.bf16.gmra.mxu0 %v1440
      %v1974 = vpop.f32.mrf.mxu0
      %v1975 = vadd.f32 %v1467, %v1974
      %v1976 = vpop.f32.mrf.mxu0
      %v1977 = vpop.f32.mrf.mxu0
      %v1978 = vadd.f32 %v1467, %v1977
      %v1979 = vpop.f32.mrf.mxu0
      %1980 = vmatprep.mubr.bf16.mxu0 0
      %1981 = vmatmul.mubr.bf16.gmra.mxu0 %v1441
      %v1982 = vpop.f32.mrf.mxu0
      %v1983 = vadd.f32 %v1467, %v1982
      %v1984 = vpop.f32.mrf.mxu0
      %v1985 = vpop.f32.mrf.mxu0
      %v1986 = vadd.f32 %v1467, %v1985
      %v1987 = vpop.f32.mrf.mxu0
      %1988 = vmatprep.mubr.bf16.mxu0 0
      %1989 = vmatmul.mubr.bf16.gmra.mxu0 %v1442
      %v1990 = vpop.f32.mrf.mxu0
      %v1991 = vadd.f32 %v1467, %v1990
      %v1992 = vpop.f32.mrf.mxu0
      %v1993 = vpop.f32.mrf.mxu0
      %v1994 = vadd.f32 %v1467, %v1993
      %v1995 = vpop.f32.mrf.mxu0
      %1996 = vmatprep.mubr.bf16.mxu0 0
      %1997 = vmatmul.mubr.bf16.gmra.mxu0 %v1443
      %v1998 = vpop.f32.mrf.mxu0
      %v1999 = vadd.f32 %v1467, %v1998
      %v2000 = vpop.f32.mrf.mxu0
      %v2001 = vpop.f32.mrf.mxu0
      %v2002 = vadd.f32 %v1467, %v2001
      %v2003 = vpop.f32.mrf.mxu0
      %2004 = vmatprep.mubr.bf16.mxu0 0
      %2005 = vmatmul.mubr.bf16.gmra.mxu0 %v1444
      %v2006 = vpop.f32.mrf.mxu0
      %v2007 = vadd.f32 %v1467, %v2006
      %v2008 = vpop.f32.mrf.mxu0
      %v2009 = vpop.f32.mrf.mxu0
      %v2010 = vadd.f32 %v1467, %v2009
      %v2011 = vpop.f32.mrf.mxu0
      %2012 = vmatprep.mubr.bf16.mxu0 0
      %2013 = vmatmul.mubr.bf16.gmra.mxu0 %v1445
      %v2014 = vpop.f32.mrf.mxu0
      %v2015 = vadd.f32 %v1467, %v2014
      %v2016 = vpop.f32.mrf.mxu0
      %v2017 = vpop.f32.mrf.mxu0
      %v2018 = vadd.f32 %v1467, %v2017
      %v2019 = vpop.f32.mrf.mxu0
      %2020 = vmatprep.mubr.bf16.mxu0 0
      %2021 = vmatmul.mubr.bf16.gmra.mxu0 %v1446
      %v2022 = vpop.f32.mrf.mxu0
      %v2023 = vadd.f32 %v1467, %v2022
      %v2024 = vpop.f32.mrf.mxu0
      %v2025 = vpop.f32.mrf.mxu0
      %v2026 = vadd.f32 %v1467, %v2025
      %v2027 = vpop.f32.mrf.mxu0
      %2028 = vdwg.mxu0
      %v2029 = vmax.f32 %v1551, 0.0
      %v2030 = vmax.f32 %v1554, 0.0
      %v2031 = vmax.f32 %v1559, 0.0
      %v2032 = vmax.f32 %v1562, 0.0
      %v2033 = vmax.f32 %v1567, 0.0
      %v2034 = vmax.f32 %v1570, 0.0
      %v2035 = vmax.f32 %v1575, 0.0
      %v2036 = vmax.f32 %v1578, 0.0
      %v2037 = vmax.f32 %v1583, 0.0
      %v2038 = vmax.f32 %v1586, 0.0
      %v2039 = vmax.f32 %v1591, 0.0
      %v2040 = vmax.f32 %v1594, 0.0
      %v2041 = vmax.f32 %v1599, 0.0
      %v2042 = vmax.f32 %v1602, 0.0
      %v2043 = vmax.f32 %v1607, 0.0
      %v2044 = vmax.f32 %v1610, 0.0
      %v2045 = vmax.f32 %v1615, 0.0
      %v2046 = vmax.f32 %v1618, 0.0
      %v2047 = vmax.f32 %v1623, 0.0
      %v2048 = vmax.f32 %v1626, 0.0
      %v2049 = vmax.f32 %v1631, 0.0
      %v2050 = vmax.f32 %v1634, 0.0
      %v2051 = vmax.f32 %v1639, 0.0
      %v2052 = vmax.f32 %v1642, 0.0
      %v2053 = vmax.f32 %v1647, 0.0
      %v2054 = vmax.f32 %v1650, 0.0
      %v2055 = vmax.f32 %v1655, 0.0
      %v2056 = vmax.f32 %v1658, 0.0
      %v2057 = vmax.f32 %v1663, 0.0
      %v2058 = vmax.f32 %v1666, 0.0
      %v2059 = vmax.f32 %v1671, 0.0
      %v2060 = vmax.f32 %v1674, 0.0
      %v2061 = vmax.f32 %v1679, 0.0
      %v2062 = vmax.f32 %v1682, 0.0
      %v2063 = vmax.f32 %v1687, 0.0
      %v2064 = vmax.f32 %v1690, 0.0
      %v2065 = vmax.f32 %v1695, 0.0
      %v2066 = vmax.f32 %v1698, 0.0
      %v2067 = vmax.f32 %v1703, 0.0
      %v2068 = vmax.f32 %v1706, 0.0
      %v2069 = vmax.f32 %v1711, 0.0
      %v2070 = vmax.f32 %v1714, 0.0
      %v2071 = vmax.f32 %v1719, 0.0
      %v2072 = vmax.f32 %v1722, 0.0
      %v2073 = vmax.f32 %v1727, 0.0
      %v2074 = vmax.f32 %v1730, 0.0
      %v2075 = vmax.f32 %v1735, 0.0
      %v2076 = vmax.f32 %v1738, 0.0
      %v2077 = vmax.f32 %v1743, 0.0
      %v2078 = vmax.f32 %v1746, 0.0
      %v2079 = vmax.f32 %v1751, 0.0
      %v2080 = vmax.f32 %v1754, 0.0
      %v2081 = vmax.f32 %v1759, 0.0
      %v2082 = vmax.f32 %v1762, 0.0
      %v2083 = vmax.f32 %v1767, 0.0
      %v2084 = vmax.f32 %v1770, 0.0
      %v2085 = vmax.f32 %v1775, 0.0
      %v2086 = vmax.f32 %v1778, 0.0
      %v2087 = vmax.f32 %v1783, 0.0
      %v2088 = vmax.f32 %v1786, 0.0
      %v2089 = vmax.f32 %v1791, 0.0
      %v2090 = vmax.f32 %v1794, 0.0
      %v2091 = vmax.f32 %v1799, 0.0
      %v2092 = vmax.f32 %v1802, 0.0
      %v2093 = vmax.f32 %v1807, 0.0
      %v2094 = vmax.f32 %v1810, 0.0
      %v2095 = vmax.f32 %v1815, 0.0
      %v2096 = vmax.f32 %v1818, 0.0
      %v2097 = vmax.f32 %v1823, 0.0
      %v2098 = vmax.f32 %v1826, 0.0
      %v2099 = vmax.f32 %v1831, 0.0
      %v2100 = vmax.f32 %v1834, 0.0
      %v2101 = vmax.f32 %v1839, 0.0
      %v2102 = vmax.f32 %v1842, 0.0
      %v2103 = vmax.f32 %v1847, 0.0
      %v2104 = vmax.f32 %v1850, 0.0
      %v2105 = vmax.f32 %v1855, 0.0
      %v2106 = vmax.f32 %v1858, 0.0
      %v2107 = vmax.f32 %v1863, 0.0
      %v2108 = vmax.f32 %v1866, 0.0
      %v2109 = vmax.f32 %v1871, 0.0
      %v2110 = vmax.f32 %v1874, 0.0
      %v2111 = vmax.f32 %v1879, 0.0
      %v2112 = vmax.f32 %v1882, 0.0
      %v2113 = vmax.f32 %v1887, 0.0
      %v2114 = vmax.f32 %v1890, 0.0
      %v2115 = vmax.f32 %v1895, 0.0
      %v2116 = vmax.f32 %v1898, 0.0
      %v2117 = vmax.f32 %v1903, 0.0
      %v2118 = vmax.f32 %v1906, 0.0
      %v2119 = vmax.f32 %v1911, 0.0
      %v2120 = vmax.f32 %v1914, 0.0
      %v2121 = vmax.f32 %v1919, 0.0
      %v2122 = vmax.f32 %v1922, 0.0
      %v2123 = vmax.f32 %v1927, 0.0
      %v2124 = vmax.f32 %v1930, 0.0
      %v2125 = vmax.f32 %v1935, 0.0
      %v2126 = vmax.f32 %v1938, 0.0
      %v2127 = vmax.f32 %v1943, 0.0
      %v2128 = vmax.f32 %v1946, 0.0
      %v2129 = vmax.f32 %v1951, 0.0
      %v2130 = vmax.f32 %v1954, 0.0
      %v2131 = vmax.f32 %v1959, 0.0
      %v2132 = vmax.f32 %v1962, 0.0
      %v2133 = vmax.f32 %v1967, 0.0
      %v2134 = vmax.f32 %v1970, 0.0
      %v2135 = vmax.f32 %v1975, 0.0
      %v2136 = vmax.f32 %v1978, 0.0
      %v2137 = vmax.f32 %v1983, 0.0
      %v2138 = vmax.f32 %v1986, 0.0
      %v2139 = vmax.f32 %v1991, 0.0
      %v2140 = vmax.f32 %v1994, 0.0
      %v2141 = vmax.f32 %v1999, 0.0
      %v2142 = vmax.f32 %v2002, 0.0
      %v2143 = vmax.f32 %v2007, 0.0
      %v2144 = vmax.f32 %v2010, 0.0
      %v2145 = vmax.f32 %v2015, 0.0
      %v2146 = vmax.f32 %v2018, 0.0
      %v2147 = vmax.f32 %v2023, 0.0
      %v2148 = vmax.f32 %v2026, 0.0
      %v2149 = vpack.c.bf16 %v2030, %v2029
      %v2150 = vpack.c.bf16 %v2032, %v2031
      %v2151 = vpack.c.bf16 %v2034, %v2033
      %v2152 = vpack.c.bf16 %v2036, %v2035
      %v2153 = vpack.c.bf16 %v2038, %v2037
      %v2154 = vpack.c.bf16 %v2040, %v2039
      %v2155 = vpack.c.bf16 %v2042, %v2041
      %v2156 = vpack.c.bf16 %v2044, %v2043
      %v2157 = vpack.c.bf16 %v2046, %v2045
      %v2158 = vpack.c.bf16 %v2048, %v2047
      %v2159 = vpack.c.bf16 %v2050, %v2049
      %v2160 = vpack.c.bf16 %v2052, %v2051
      %v2161 = vpack.c.bf16 %v2054, %v2053
      %v2162 = vpack.c.bf16 %v2056, %v2055
      %v2163 = vpack.c.bf16 %v2058, %v2057
      %v2164 = vpack.c.bf16 %v2060, %v2059
      %v2165 = vpack.c.bf16 %v2062, %v2061
      %v2166 = vpack.c.bf16 %v2064, %v2063
      %v2167 = vpack.c.bf16 %v2066, %v2065
      %v2168 = vpack.c.bf16 %v2068, %v2067
      %v2169 = vpack.c.bf16 %v2070, %v2069
      %v2170 = vpack.c.bf16 %v2072, %v2071
      %v2171 = vpack.c.bf16 %v2074, %v2073
      %v2172 = vpack.c.bf16 %v2076, %v2075
      %v2173 = vpack.c.bf16 %v2078, %v2077
      %v2174 = vpack.c.bf16 %v2080, %v2079
      %v2175 = vpack.c.bf16 %v2082, %v2081
      %v2176 = vpack.c.bf16 %v2084, %v2083
      %v2177 = vpack.c.bf16 %v2086, %v2085
      %v2178 = vpack.c.bf16 %v2088, %v2087
      %v2179 = vpack.c.bf16 %v2090, %v2089
      %v2180 = vpack.c.bf16 %v2092, %v2091
      %v2181 = vpack.c.bf16 %v2094, %v2093
      %v2182 = vpack.c.bf16 %v2096, %v2095
      %v2183 = vpack.c.bf16 %v2098, %v2097
      %v2184 = vpack.c.bf16 %v2100, %v2099
      %v2185 = vpack.c.bf16 %v2102, %v2101
      %v2186 = vpack.c.bf16 %v2104, %v2103
      %v2187 = vpack.c.bf16 %v2106, %v2105
      %v2188 = vpack.c.bf16 %v2108, %v2107
      %v2189 = vpack.c.bf16 %v2110, %v2109
      %v2190 = vpack.c.bf16 %v2112, %v2111
      %v2191 = vpack.c.bf16 %v2114, %v2113
      %v2192 = vpack.c.bf16 %v2116, %v2115
      %v2193 = vpack.c.bf16 %v2118, %v2117
      %v2194 = vpack.c.bf16 %v2120, %v2119
      %v2195 = vpack.c.bf16 %v2122, %v2121
      %v2196 = vpack.c.bf16 %v2124, %v2123
      %v2197 = vpack.c.bf16 %v2126, %v2125
      %v2198 = vpack.c.bf16 %v2128, %v2127
      %v2199 = vpack.c.bf16 %v2130, %v2129
      %v2200 = vpack.c.bf16 %v2132, %v2131
      %v2201 = vpack.c.bf16 %v2134, %v2133
      %v2202 = vpack.c.bf16 %v2136, %v2135
      %v2203 = vpack.c.bf16 %v2138, %v2137
      %v2204 = vpack.c.bf16 %v2140, %v2139
      %v2205 = vpack.c.bf16 %v2142, %v2141
      %v2206 = vpack.c.bf16 %v2144, %v2143
      %v2207 = vpack.c.bf16 %v2146, %v2145
      %v2208 = vpack.c.bf16 %v2148, %v2147
      %v2209 = vld [vmem:[%s1 + $0x80] sm:$0xf]
      %v2210 = vld [vmem:[%s1 + $0x84] sm:$0xf]
      %v2211 = vld [vmem:[%s1 + $0x88] sm:$0xf]
      %v2212 = vld [vmem:[%s1 + $0x8c] sm:$0xf]
      %v2213 = vld [vmem:[%s1 + $0x90] sm:$0xf]
      %v2214 = vld [vmem:[%s1 + $0x94] sm:$0xf]
      %v2215 = vld [vmem:[%s1 + $0x98] sm:$0xf]
      %v2216 = vld [vmem:[%s1 + $0x9c] sm:$0xf]
      %v2217 = vld [vmem:[%s1 + $0xa0] sm:$0xf]
      %v2218 = vld [vmem:[%s1 + $0xa4] sm:$0xf]
      %v2219 = vld [vmem:[%s1 + $0xa8] sm:$0xf]
      %v2220 = vld [vmem:[%s1 + $0xac] sm:$0xf]
      %v2221 = vld [vmem:[%s1 + $0xb0] sm:$0xf]
      %v2222 = vld [vmem:[%s1 + $0xb4] sm:$0xf]
      %v2223 = vld [vmem:[%s1 + $0xb8] sm:$0xf]
      %v2224 = vld [vmem:[%s1 + $0xbc] sm:$0xf]
      %v2225 = vld [vmem:[%s2 + $0x2] sm:$0x1]
      %v2226 = vlaneseq
      %v2227 = vshrl.u32 %v2226, 7
      %v2228 = vsub.s32 0, %v2227
      %v2229 = vrot.slane %v2225, %v2228
      %v2246 = vunpack.c.l.b16 %v2209
      %v2247 = vunpack.c.l.b16 %v2210
      %v2248 = vunpack.c.l.b16 %v2211
      %v2249 = vunpack.c.l.b16 %v2212
      %v2250 = vunpack.c.l.b16 %v2213
      %v2251 = vunpack.c.l.b16 %v2214
      %v2252 = vunpack.c.l.b16 %v2215
      %v2253 = vunpack.c.l.b16 %v2216
      %v2254 = vunpack.c.l.b16 %v2217
      %v2255 = vunpack.c.l.b16 %v2218
      %v2256 = vunpack.c.l.b16 %v2219
      %v2257 = vunpack.c.l.b16 %v2220
      %v2258 = vunpack.c.l.b16 %v2221
      %v2259 = vunpack.c.l.b16 %v2222
      %v2260 = vunpack.c.l.b16 %v2223
      %v2261 = vunpack.c.l.b16 %v2224
      %v2262 = vpack.c.b16 %v2247, %v2246
      %v2263 = vpack.c.b16 %v2249, %v2248
      %v2264 = vpack.c.b16 %v2251, %v2250
      %v2265 = vpack.c.b16 %v2253, %v2252
      %v2266 = vpack.c.b16 %v2255, %v2254
      %v2267 = vpack.c.b16 %v2257, %v2256
      %v2268 = vpack.c.b16 %v2259, %v2258
      %v2269 = vpack.c.b16 %v2261, %v2260
      %2278 = vmatprep.subr.bf16.mxu0 0
      %2279 = vmatpush1.bf16.msra.mxu0 %v2269
      %2280 = vmatprep.subr.bf16.mxu0 0
      %2281 = vmatpush1.bf16.msra.mxu0 %v2268
      %2282 = vmatprep.subr.bf16.mxu0 0
      %2283 = vmatpush1.bf16.msra.mxu0 %v2267
      %2284 = vmatprep.subr.bf16.mxu0 0
      %2285 = vmatpush1.bf16.msra.mxu0 %v2266
      %2286 = vmatprep.subr.bf16.mxu0 0
      %2287 = vmatpush1.bf16.msra.mxu0 %v2265
      %2288 = vmatprep.subr.bf16.mxu0 0
      %2289 = vmatpush1.bf16.msra.mxu0 %v2264
      %2290 = vmatprep.subr.bf16.mxu0 0
      %2291 = vmatpush1.bf16.msra.mxu0 %v2263
      %2292 = vmatprep.subr.bf16.mxu0 0
      %2293 = vmatpush1.bf16.msra.mxu0 %v2262
      %2294 = vmatprep.subr.bf16.mxu0 0
      %2295 = vmatpush2.bf16.msra.mxu0 0
      %2296 = vmatprep.subr.bf16.mxu0 0
      %2297 = vmatpush2.bf16.msra.mxu0 0
      %2298 = vmatprep.subr.bf16.mxu0 0
      %2299 = vmatpush2.bf16.msra.mxu0 0
      %2300 = vmatprep.subr.bf16.mxu0 0
      %2301 = vmatpush2.bf16.msra.mxu0 0
      %2302 = vmatprep.subr.bf16.mxu0 0
      %2303 = vmatpush2.bf16.msra.mxu0 0
      %2304 = vmatprep.subr.bf16.mxu0 0
      %2305 = vmatpush2.bf16.msra.mxu0 0
      %2306 = vmatprep.subr.bf16.mxu0 0
      %2307 = vmatpush2.bf16.msra.mxu0 0
      %2308 = vmatprep.subr.bf16.mxu0 0
      %2309 = vmatpush2.bf16.msra.mxu0 0
      %2310 = vmatprep.mubr.bf16.mxu0 0
      %2311 = vmatmul.mubr.bf16.gmra.mxu0 %v2149
      %v2312 = vpop.f32.mrf.mxu0
      %v2313 = vadd.f32 %v2229, %v2312
      %v2314 = vpop.f32.mrf.mxu0
      %v2315 = vpop.f32.mrf.mxu0
      %v2316 = vadd.f32 %v2229, %v2315
      %v2317 = vpop.f32.mrf.mxu0
      %2318 = vmatprep.mubr.bf16.mxu0 0
      %2319 = vmatmul.mubr.bf16.gmra.mxu0 %v2150
      %v2320 = vpop.f32.mrf.mxu0
      %v2321 = vadd.f32 %v2229, %v2320
      %v2322 = vpop.f32.mrf.mxu0
      %v2323 = vpop.f32.mrf.mxu0
      %v2324 = vadd.f32 %v2229, %v2323
      %v2325 = vpop.f32.mrf.mxu0
      %2326 = vmatprep.mubr.bf16.mxu0 0
      %2327 = vmatmul.mubr.bf16.gmra.mxu0 %v2151
      %v2328 = vpop.f32.mrf.mxu0
      %v2329 = vadd.f32 %v2229, %v2328
      %v2330 = vpop.f32.mrf.mxu0
      %v2331 = vpop.f32.mrf.mxu0
      %v2332 = vadd.f32 %v2229, %v2331
      %v2333 = vpop.f32.mrf.mxu0
      %2334 = vmatprep.mubr.bf16.mxu0 0
      %2335 = vmatmul.mubr.bf16.gmra.mxu0 %v2152
      %v2336 = vpop.f32.mrf.mxu0
      %v2337 = vadd.f32 %v2229, %v2336
      %v2338 = vpop.f32.mrf.mxu0
      %v2339 = vpop.f32.mrf.mxu0
      %v2340 = vadd.f32 %v2229, %v2339
      %v2341 = vpop.f32.mrf.mxu0
      %2342 = vmatprep.mubr.bf16.mxu0 0
      %2343 = vmatmul.mubr.bf16.gmra.mxu0 %v2153
      %v2344 = vpop.f32.mrf.mxu0
      %v2345 = vadd.f32 %v2229, %v2344
      %v2346 = vpop.f32.mrf.mxu0
      %v2347 = vpop.f32.mrf.mxu0
      %v2348 = vadd.f32 %v2229, %v2347
      %v2349 = vpop.f32.mrf.mxu0
      %2350 = vmatprep.mubr.bf16.mxu0 0
      %2351 = vmatmul.mubr.bf16.gmra.mxu0 %v2154
      %v2352 = vpop.f32.mrf.mxu0
      %v2353 = vadd.f32 %v2229, %v2352
      %v2354 = vpop.f32.mrf.mxu0
      %v2355 = vpop.f32.mrf.mxu0
      %v2356 = vadd.f32 %v2229, %v2355
      %v2357 = vpop.f32.mrf.mxu0
      %2358 = vmatprep.mubr.bf16.mxu0 0
      %2359 = vmatmul.mubr.bf16.gmra.mxu0 %v2155
      %v2360 = vpop.f32.mrf.mxu0
      %v2361 = vadd.f32 %v2229, %v2360
      %v2362 = vpop.f32.mrf.mxu0
      %v2363 = vpop.f32.mrf.mxu0
      %v2364 = vadd.f32 %v2229, %v2363
      %v2365 = vpop.f32.mrf.mxu0
      %2366 = vmatprep.mubr.bf16.mxu0 0
      %2367 = vmatmul.mubr.bf16.gmra.mxu0 %v2156
      %v2368 = vpop.f32.mrf.mxu0
      %v2369 = vadd.f32 %v2229, %v2368
      %v2370 = vpop.f32.mrf.mxu0
      %v2371 = vpop.f32.mrf.mxu0
      %v2372 = vadd.f32 %v2229, %v2371
      %v2373 = vpop.f32.mrf.mxu0
      %2374 = vmatprep.mubr.bf16.mxu0 0
      %2375 = vmatmul.mubr.bf16.gmra.mxu0 %v2157
      %v2376 = vpop.f32.mrf.mxu0
      %v2377 = vadd.f32 %v2229, %v2376
      %v2378 = vpop.f32.mrf.mxu0
      %v2379 = vpop.f32.mrf.mxu0
      %v2380 = vadd.f32 %v2229, %v2379
      %v2381 = vpop.f32.mrf.mxu0
      %2382 = vmatprep.mubr.bf16.mxu0 0
      %2383 = vmatmul.mubr.bf16.gmra.mxu0 %v2158
      %v2384 = vpop.f32.mrf.mxu0
      %v2385 = vadd.f32 %v2229, %v2384
      %v2386 = vpop.f32.mrf.mxu0
      %v2387 = vpop.f32.mrf.mxu0
      %v2388 = vadd.f32 %v2229, %v2387
      %v2389 = vpop.f32.mrf.mxu0
      %2390 = vmatprep.mubr.bf16.mxu0 0
      %2391 = vmatmul.mubr.bf16.gmra.mxu0 %v2159
      %v2392 = vpop.f32.mrf.mxu0
      %v2393 = vadd.f32 %v2229, %v2392
      %v2394 = vpop.f32.mrf.mxu0
      %v2395 = vpop.f32.mrf.mxu0
      %v2396 = vadd.f32 %v2229, %v2395
      %v2397 = vpop.f32.mrf.mxu0
      %2398 = vmatprep.mubr.bf16.mxu0 0
      %2399 = vmatmul.mubr.bf16.gmra.mxu0 %v2160
      %v2400 = vpop.f32.mrf.mxu0
      %v2401 = vadd.f32 %v2229, %v2400
      %v2402 = vpop.f32.mrf.mxu0
      %v2403 = vpop.f32.mrf.mxu0
      %v2404 = vadd.f32 %v2229, %v2403
      %v2405 = vpop.f32.mrf.mxu0
      %2406 = vmatprep.mubr.bf16.mxu0 0
      %2407 = vmatmul.mubr.bf16.gmra.mxu0 %v2161
      %v2408 = vpop.f32.mrf.mxu0
      %v2409 = vadd.f32 %v2229, %v2408
      %v2410 = vpop.f32.mrf.mxu0
      %v2411 = vpop.f32.mrf.mxu0
      %v2412 = vadd.f32 %v2229, %v2411
      %v2413 = vpop.f32.mrf.mxu0
      %2414 = vmatprep.mubr.bf16.mxu0 0
      %2415 = vmatmul.mubr.bf16.gmra.mxu0 %v2162
      %v2416 = vpop.f32.mrf.mxu0
      %v2417 = vadd.f32 %v2229, %v2416
      %v2418 = vpop.f32.mrf.mxu0
      %v2419 = vpop.f32.mrf.mxu0
      %v2420 = vadd.f32 %v2229, %v2419
      %v2421 = vpop.f32.mrf.mxu0
      %2422 = vmatprep.mubr.bf16.mxu0 0
      %2423 = vmatmul.mubr.bf16.gmra.mxu0 %v2163
      %v2424 = vpop.f32.mrf.mxu0
      %v2425 = vadd.f32 %v2229, %v2424
      %v2426 = vpop.f32.mrf.mxu0
      %v2427 = vpop.f32.mrf.mxu0
      %v2428 = vadd.f32 %v2229, %v2427
      %v2429 = vpop.f32.mrf.mxu0
      %2430 = vmatprep.mubr.bf16.mxu0 0
      %2431 = vmatmul.mubr.bf16.gmra.mxu0 %v2164
      %v2432 = vpop.f32.mrf.mxu0
      %v2433 = vadd.f32 %v2229, %v2432
      %v2434 = vpop.f32.mrf.mxu0
      %v2435 = vpop.f32.mrf.mxu0
      %v2436 = vadd.f32 %v2229, %v2435
      %v2437 = vpop.f32.mrf.mxu0
      %2438 = vmatprep.mubr.bf16.mxu0 0
      %2439 = vmatmul.mubr.bf16.gmra.mxu0 %v2165
      %v2440 = vpop.f32.mrf.mxu0
      %v2441 = vadd.f32 %v2229, %v2440
      %v2442 = vpop.f32.mrf.mxu0
      %v2443 = vpop.f32.mrf.mxu0
      %v2444 = vadd.f32 %v2229, %v2443
      %v2445 = vpop.f32.mrf.mxu0
      %2446 = vmatprep.mubr.bf16.mxu0 0
      %2447 = vmatmul.mubr.bf16.gmra.mxu0 %v2166
      %v2448 = vpop.f32.mrf.mxu0
      %v2449 = vadd.f32 %v2229, %v2448
      %v2450 = vpop.f32.mrf.mxu0
      %v2451 = vpop.f32.mrf.mxu0
      %v2452 = vadd.f32 %v2229, %v2451
      %v2453 = vpop.f32.mrf.mxu0
      %2454 = vmatprep.mubr.bf16.mxu0 0
      %2455 = vmatmul.mubr.bf16.gmra.mxu0 %v2167
      %v2456 = vpop.f32.mrf.mxu0
      %v2457 = vadd.f32 %v2229, %v2456
      %v2458 = vpop.f32.mrf.mxu0
      %v2459 = vpop.f32.mrf.mxu0
      %v2460 = vadd.f32 %v2229, %v2459
      %v2461 = vpop.f32.mrf.mxu0
      %2462 = vmatprep.mubr.bf16.mxu0 0
      %2463 = vmatmul.mubr.bf16.gmra.mxu0 %v2168
      %v2464 = vpop.f32.mrf.mxu0
      %v2465 = vadd.f32 %v2229, %v2464
      %v2466 = vpop.f32.mrf.mxu0
      %v2467 = vpop.f32.mrf.mxu0
      %v2468 = vadd.f32 %v2229, %v2467
      %v2469 = vpop.f32.mrf.mxu0
      %2470 = vmatprep.mubr.bf16.mxu0 0
      %2471 = vmatmul.mubr.bf16.gmra.mxu0 %v2169
      %v2472 = vpop.f32.mrf.mxu0
      %v2473 = vadd.f32 %v2229, %v2472
      %v2474 = vpop.f32.mrf.mxu0
      %v2475 = vpop.f32.mrf.mxu0
      %v2476 = vadd.f32 %v2229, %v2475
      %v2477 = vpop.f32.mrf.mxu0
      %2478 = vmatprep.mubr.bf16.mxu0 0
      %2479 = vmatmul.mubr.bf16.gmra.mxu0 %v2170
      %v2480 = vpop.f32.mrf.mxu0
      %v2481 = vadd.f32 %v2229, %v2480
      %v2482 = vpop.f32.mrf.mxu0
      %v2483 = vpop.f32.mrf.mxu0
      %v2484 = vadd.f32 %v2229, %v2483
      %v2485 = vpop.f32.mrf.mxu0
      %2486 = vmatprep.mubr.bf16.mxu0 0
      %2487 = vmatmul.mubr.bf16.gmra.mxu0 %v2171
      %v2488 = vpop.f32.mrf.mxu0
      %v2489 = vadd.f32 %v2229, %v2488
      %v2490 = vpop.f32.mrf.mxu0
      %v2491 = vpop.f32.mrf.mxu0
      %v2492 = vadd.f32 %v2229, %v2491
      %v2493 = vpop.f32.mrf.mxu0
      %2494 = vmatprep.mubr.bf16.mxu0 0
      %2495 = vmatmul.mubr.bf16.gmra.mxu0 %v2172
      %v2496 = vpop.f32.mrf.mxu0
      %v2497 = vadd.f32 %v2229, %v2496
      %v2498 = vpop.f32.mrf.mxu0
      %v2499 = vpop.f32.mrf.mxu0
      %v2500 = vadd.f32 %v2229, %v2499
      %v2501 = vpop.f32.mrf.mxu0
      %2502 = vmatprep.mubr.bf16.mxu0 0
      %2503 = vmatmul.mubr.bf16.gmra.mxu0 %v2173
      %v2504 = vpop.f32.mrf.mxu0
      %v2505 = vadd.f32 %v2229, %v2504
      %v2506 = vpop.f32.mrf.mxu0
      %v2507 = vpop.f32.mrf.mxu0
      %v2508 = vadd.f32 %v2229, %v2507
      %v2509 = vpop.f32.mrf.mxu0
      %2510 = vmatprep.mubr.bf16.mxu0 0
      %2511 = vmatmul.mubr.bf16.gmra.mxu0 %v2174
      %v2512 = vpop.f32.mrf.mxu0
      %v2513 = vadd.f32 %v2229, %v2512
      %v2514 = vpop.f32.mrf.mxu0
      %v2515 = vpop.f32.mrf.mxu0
      %v2516 = vadd.f32 %v2229, %v2515
      %v2517 = vpop.f32.mrf.mxu0
      %2518 = vmatprep.mubr.bf16.mxu0 0
      %2519 = vmatmul.mubr.bf16.gmra.mxu0 %v2175
      %v2520 = vpop.f32.mrf.mxu0
      %v2521 = vadd.f32 %v2229, %v2520
      %v2522 = vpop.f32.mrf.mxu0
      %v2523 = vpop.f32.mrf.mxu0
      %v2524 = vadd.f32 %v2229, %v2523
      %v2525 = vpop.f32.mrf.mxu0
      %2526 = vmatprep.mubr.bf16.mxu0 0
      %2527 = vmatmul.mubr.bf16.gmra.mxu0 %v2176
      %v2528 = vpop.f32.mrf.mxu0
      %v2529 = vadd.f32 %v2229, %v2528
      %v2530 = vpop.f32.mrf.mxu0
      %v2531 = vpop.f32.mrf.mxu0
      %v2532 = vadd.f32 %v2229, %v2531
      %v2533 = vpop.f32.mrf.mxu0
      %2534 = vmatprep.mubr.bf16.mxu0 0
      %2535 = vmatmul.mubr.bf16.gmra.mxu0 %v2177
      %v2536 = vpop.f32.mrf.mxu0
      %v2537 = vadd.f32 %v2229, %v2536
      %v2538 = vpop.f32.mrf.mxu0
      %v2539 = vpop.f32.mrf.mxu0
      %v2540 = vadd.f32 %v2229, %v2539
      %v2541 = vpop.f32.mrf.mxu0
      %2542 = vmatprep.mubr.bf16.mxu0 0
      %2543 = vmatmul.mubr.bf16.gmra.mxu0 %v2178
      %v2544 = vpop.f32.mrf.mxu0
      %v2545 = vadd.f32 %v2229, %v2544
      %v2546 = vpop.f32.mrf.mxu0
      %v2547 = vpop.f32.mrf.mxu0
      %v2548 = vadd.f32 %v2229, %v2547
      %v2549 = vpop.f32.mrf.mxu0
      %2550 = vmatprep.mubr.bf16.mxu0 0
      %2551 = vmatmul.mubr.bf16.gmra.mxu0 %v2179
      %v2552 = vpop.f32.mrf.mxu0
      %v2553 = vadd.f32 %v2229, %v2552
      %v2554 = vpop.f32.mrf.mxu0
      %v2555 = vpop.f32.mrf.mxu0
      %v2556 = vadd.f32 %v2229, %v2555
      %v2557 = vpop.f32.mrf.mxu0
      %2558 = vmatprep.mubr.bf16.mxu0 0
      %2559 = vmatmul.mubr.bf16.gmra.mxu0 %v2180
      %v2560 = vpop.f32.mrf.mxu0
      %v2561 = vadd.f32 %v2229, %v2560
      %v2562 = vpop.f32.mrf.mxu0
      %v2563 = vpop.f32.mrf.mxu0
      %v2564 = vadd.f32 %v2229, %v2563
      %v2565 = vpop.f32.mrf.mxu0
      %2566 = vmatprep.mubr.bf16.mxu0 0
      %2567 = vmatmul.mubr.bf16.gmra.mxu0 %v2181
      %v2568 = vpop.f32.mrf.mxu0
      %v2569 = vadd.f32 %v2229, %v2568
      %v2570 = vpop.f32.mrf.mxu0
      %v2571 = vpop.f32.mrf.mxu0
      %v2572 = vadd.f32 %v2229, %v2571
      %v2573 = vpop.f32.mrf.mxu0
      %2574 = vmatprep.mubr.bf16.mxu0 0
      %2575 = vmatmul.mubr.bf16.gmra.mxu0 %v2182
      %v2576 = vpop.f32.mrf.mxu0
      %v2577 = vadd.f32 %v2229, %v2576
      %v2578 = vpop.f32.mrf.mxu0
      %v2579 = vpop.f32.mrf.mxu0
      %v2580 = vadd.f32 %v2229, %v2579
      %v2581 = vpop.f32.mrf.mxu0
      %2582 = vmatprep.mubr.bf16.mxu0 0
      %2583 = vmatmul.mubr.bf16.gmra.mxu0 %v2183
      %v2584 = vpop.f32.mrf.mxu0
      %v2585 = vadd.f32 %v2229, %v2584
      %v2586 = vpop.f32.mrf.mxu0
      %v2587 = vpop.f32.mrf.mxu0
      %v2588 = vadd.f32 %v2229, %v2587
      %v2589 = vpop.f32.mrf.mxu0
      %2590 = vmatprep.mubr.bf16.mxu0 0
      %2591 = vmatmul.mubr.bf16.gmra.mxu0 %v2184
      %v2592 = vpop.f32.mrf.mxu0
      %v2593 = vadd.f32 %v2229, %v2592
      %v2594 = vpop.f32.mrf.mxu0
      %v2595 = vpop.f32.mrf.mxu0
      %v2596 = vadd.f32 %v2229, %v2595
      %v2597 = vpop.f32.mrf.mxu0
      %2598 = vmatprep.mubr.bf16.mxu0 0
      %2599 = vmatmul.mubr.bf16.gmra.mxu0 %v2185
      %v2600 = vpop.f32.mrf.mxu0
      %v2601 = vadd.f32 %v2229, %v2600
      %v2602 = vpop.f32.mrf.mxu0
      %v2603 = vpop.f32.mrf.mxu0
      %v2604 = vadd.f32 %v2229, %v2603
      %v2605 = vpop.f32.mrf.mxu0
      %2606 = vmatprep.mubr.bf16.mxu0 0
      %2607 = vmatmul.mubr.bf16.gmra.mxu0 %v2186
      %v2608 = vpop.f32.mrf.mxu0
      %v2609 = vadd.f32 %v2229, %v2608
      %v2610 = vpop.f32.mrf.mxu0
      %v2611 = vpop.f32.mrf.mxu0
      %v2612 = vadd.f32 %v2229, %v2611
      %v2613 = vpop.f32.mrf.mxu0
      %2614 = vmatprep.mubr.bf16.mxu0 0
      %2615 = vmatmul.mubr.bf16.gmra.mxu0 %v2187
      %v2616 = vpop.f32.mrf.mxu0
      %v2617 = vadd.f32 %v2229, %v2616
      %v2618 = vpop.f32.mrf.mxu0
      %v2619 = vpop.f32.mrf.mxu0
      %v2620 = vadd.f32 %v2229, %v2619
      %v2621 = vpop.f32.mrf.mxu0
      %2622 = vmatprep.mubr.bf16.mxu0 0
      %2623 = vmatmul.mubr.bf16.gmra.mxu0 %v2188
      %v2624 = vpop.f32.mrf.mxu0
      %v2625 = vadd.f32 %v2229, %v2624
      %v2626 = vpop.f32.mrf.mxu0
      %v2627 = vpop.f32.mrf.mxu0
      %v2628 = vadd.f32 %v2229, %v2627
      %v2629 = vpop.f32.mrf.mxu0
      %2630 = vmatprep.mubr.bf16.mxu0 0
      %2631 = vmatmul.mubr.bf16.gmra.mxu0 %v2189
      %v2632 = vpop.f32.mrf.mxu0
      %v2633 = vadd.f32 %v2229, %v2632
      %v2634 = vpop.f32.mrf.mxu0
      %v2635 = vpop.f32.mrf.mxu0
      %v2636 = vadd.f32 %v2229, %v2635
      %v2637 = vpop.f32.mrf.mxu0
      %2638 = vmatprep.mubr.bf16.mxu0 0
      %2639 = vmatmul.mubr.bf16.gmra.mxu0 %v2190
      %v2640 = vpop.f32.mrf.mxu0
      %v2641 = vadd.f32 %v2229, %v2640
      %v2642 = vpop.f32.mrf.mxu0
      %v2643 = vpop.f32.mrf.mxu0
      %v2644 = vadd.f32 %v2229, %v2643
      %v2645 = vpop.f32.mrf.mxu0
      %2646 = vmatprep.mubr.bf16.mxu0 0
      %2647 = vmatmul.mubr.bf16.gmra.mxu0 %v2191
      %v2648 = vpop.f32.mrf.mxu0
      %v2649 = vadd.f32 %v2229, %v2648
      %v2650 = vpop.f32.mrf.mxu0
      %v2651 = vpop.f32.mrf.mxu0
      %v2652 = vadd.f32 %v2229, %v2651
      %v2653 = vpop.f32.mrf.mxu0
      %2654 = vmatprep.mubr.bf16.mxu0 0
      %2655 = vmatmul.mubr.bf16.gmra.mxu0 %v2192
      %v2656 = vpop.f32.mrf.mxu0
      %v2657 = vadd.f32 %v2229, %v2656
      %v2658 = vpop.f32.mrf.mxu0
      %v2659 = vpop.f32.mrf.mxu0
      %v2660 = vadd.f32 %v2229, %v2659
      %v2661 = vpop.f32.mrf.mxu0
      %2662 = vmatprep.mubr.bf16.mxu0 0
      %2663 = vmatmul.mubr.bf16.gmra.mxu0 %v2193
      %v2664 = vpop.f32.mrf.mxu0
      %v2665 = vadd.f32 %v2229, %v2664
      %v2666 = vpop.f32.mrf.mxu0
      %v2667 = vpop.f32.mrf.mxu0
      %v2668 = vadd.f32 %v2229, %v2667
      %v2669 = vpop.f32.mrf.mxu0
      %2670 = vmatprep.mubr.bf16.mxu0 0
      %2671 = vmatmul.mubr.bf16.gmra.mxu0 %v2194
      %v2672 = vpop.f32.mrf.mxu0
      %v2673 = vadd.f32 %v2229, %v2672
      %v2674 = vpop.f32.mrf.mxu0
      %v2675 = vpop.f32.mrf.mxu0
      %v2676 = vadd.f32 %v2229, %v2675
      %v2677 = vpop.f32.mrf.mxu0
      %2678 = vmatprep.mubr.bf16.mxu0 0
      %2679 = vmatmul.mubr.bf16.gmra.mxu0 %v2195
      %v2680 = vpop.f32.mrf.mxu0
      %v2681 = vadd.f32 %v2229, %v2680
      %v2682 = vpop.f32.mrf.mxu0
      %v2683 = vpop.f32.mrf.mxu0
      %v2684 = vadd.f32 %v2229, %v2683
      %v2685 = vpop.f32.mrf.mxu0
      %2686 = vmatprep.mubr.bf16.mxu0 0
      %2687 = vmatmul.mubr.bf16.gmra.mxu0 %v2196
      %v2688 = vpop.f32.mrf.mxu0
      %v2689 = vadd.f32 %v2229, %v2688
      %v2690 = vpop.f32.mrf.mxu0
      %v2691 = vpop.f32.mrf.mxu0
      %v2692 = vadd.f32 %v2229, %v2691
      %v2693 = vpop.f32.mrf.mxu0
      %2694 = vmatprep.mubr.bf16.mxu0 0
      %2695 = vmatmul.mubr.bf16.gmra.mxu0 %v2197
      %v2696 = vpop.f32.mrf.mxu0
      %v2697 = vadd.f32 %v2229, %v2696
      %v2698 = vpop.f32.mrf.mxu0
      %v2699 = vpop.f32.mrf.mxu0
      %v2700 = vadd.f32 %v2229, %v2699
      %v2701 = vpop.f32.mrf.mxu0
      %2702 = vmatprep.mubr.bf16.mxu0 0
      %2703 = vmatmul.mubr.bf16.gmra.mxu0 %v2198
      %v2704 = vpop.f32.mrf.mxu0
      %v2705 = vadd.f32 %v2229, %v2704
      %v2706 = vpop.f32.mrf.mxu0
      %v2707 = vpop.f32.mrf.mxu0
      %v2708 = vadd.f32 %v2229, %v2707
      %v2709 = vpop.f32.mrf.mxu0
      %2710 = vmatprep.mubr.bf16.mxu0 0
      %2711 = vmatmul.mubr.bf16.gmra.mxu0 %v2199
      %v2712 = vpop.f32.mrf.mxu0
      %v2713 = vadd.f32 %v2229, %v2712
      %v2714 = vpop.f32.mrf.mxu0
      %v2715 = vpop.f32.mrf.mxu0
      %v2716 = vadd.f32 %v2229, %v2715
      %v2717 = vpop.f32.mrf.mxu0
      %2718 = vmatprep.mubr.bf16.mxu0 0
      %2719 = vmatmul.mubr.bf16.gmra.mxu0 %v2200
      %v2720 = vpop.f32.mrf.mxu0
      %v2721 = vadd.f32 %v2229, %v2720
      %v2722 = vpop.f32.mrf.mxu0
      %v2723 = vpop.f32.mrf.mxu0
      %v2724 = vadd.f32 %v2229, %v2723
      %v2725 = vpop.f32.mrf.mxu0
      %2726 = vmatprep.mubr.bf16.mxu0 0
      %2727 = vmatmul.mubr.bf16.gmra.mxu0 %v2201
      %v2728 = vpop.f32.mrf.mxu0
      %v2729 = vadd.f32 %v2229, %v2728
      %v2730 = vpop.f32.mrf.mxu0
      %v2731 = vpop.f32.mrf.mxu0
      %v2732 = vadd.f32 %v2229, %v2731
      %v2733 = vpop.f32.mrf.mxu0
      %2734 = vmatprep.mubr.bf16.mxu0 0
      %2735 = vmatmul.mubr.bf16.gmra.mxu0 %v2202
      %v2736 = vpop.f32.mrf.mxu0
      %v2737 = vadd.f32 %v2229, %v2736
      %v2738 = vpop.f32.mrf.mxu0
      %v2739 = vpop.f32.mrf.mxu0
      %v2740 = vadd.f32 %v2229, %v2739
      %v2741 = vpop.f32.mrf.mxu0
      %2742 = vmatprep.mubr.bf16.mxu0 0
      %2743 = vmatmul.mubr.bf16.gmra.mxu0 %v2203
      %v2744 = vpop.f32.mrf.mxu0
      %v2745 = vadd.f32 %v2229, %v2744
      %v2746 = vpop.f32.mrf.mxu0
      %v2747 = vpop.f32.mrf.mxu0
      %v2748 = vadd.f32 %v2229, %v2747
      %v2749 = vpop.f32.mrf.mxu0
      %2750 = vmatprep.mubr.bf16.mxu0 0
      %2751 = vmatmul.mubr.bf16.gmra.mxu0 %v2204
      %v2752 = vpop.f32.mrf.mxu0
      %v2753 = vadd.f32 %v2229, %v2752
      %v2754 = vpop.f32.mrf.mxu0
      %v2755 = vpop.f32.mrf.mxu0
      %v2756 = vadd.f32 %v2229, %v2755
      %v2757 = vpop.f32.mrf.mxu0
      %2758 = vmatprep.mubr.bf16.mxu0 0
      %2759 = vmatmul.mubr.bf16.gmra.mxu0 %v2205
      %v2760 = vpop.f32.mrf.mxu0
      %v2761 = vadd.f32 %v2229, %v2760
      %v2762 = vpop.f32.mrf.mxu0
      %v2763 = vpop.f32.mrf.mxu0
      %v2764 = vadd.f32 %v2229, %v2763
      %v2765 = vpop.f32.mrf.mxu0
      %2766 = vmatprep.mubr.bf16.mxu0 0
      %2767 = vmatmul.mubr.bf16.gmra.mxu0 %v2206
      %v2768 = vpop.f32.mrf.mxu0
      %v2769 = vadd.f32 %v2229, %v2768
      %v2770 = vpop.f32.mrf.mxu0
      %v2771 = vpop.f32.mrf.mxu0
      %v2772 = vadd.f32 %v2229, %v2771
      %v2773 = vpop.f32.mrf.mxu0
      %2774 = vmatprep.mubr.bf16.mxu0 0
      %2775 = vmatmul.mubr.bf16.gmra.mxu0 %v2207
      %v2776 = vpop.f32.mrf.mxu0
      %v2777 = vadd.f32 %v2229, %v2776
      %v2778 = vpop.f32.mrf.mxu0
      %v2779 = vpop.f32.mrf.mxu0
      %v2780 = vadd.f32 %v2229, %v2779
      %v2781 = vpop.f32.mrf.mxu0
      %2782 = vmatprep.mubr.bf16.mxu0 0
      %2783 = vmatmul.mubr.bf16.gmra.mxu0 %v2208
      %v2784 = vpop.f32.mrf.mxu0
      %v2785 = vadd.f32 %v2229, %v2784
      %v2786 = vpop.f32.mrf.mxu0
      %v2787 = vpop.f32.mrf.mxu0
      %v2788 = vadd.f32 %v2229, %v2787
      %v2789 = vpop.f32.mrf.mxu0
      %2790 = vdwg.mxu0
      %v2791 = vmax.f32 %v2313, 0.0
      %v2792 = vmax.f32 %v2316, 0.0
      %v2793 = vmax.f32 %v2321, 0.0
      %v2794 = vmax.f32 %v2324, 0.0
      %v2795 = vmax.f32 %v2329, 0.0
      %v2796 = vmax.f32 %v2332, 0.0
      %v2797 = vmax.f32 %v2337, 0.0
      %v2798 = vmax.f32 %v2340, 0.0
      %v2799 = vmax.f32 %v2345, 0.0
      %v2800 = vmax.f32 %v2348, 0.0
      %v2801 = vmax.f32 %v2353, 0.0
      %v2802 = vmax.f32 %v2356, 0.0
      %v2803 = vmax.f32 %v2361, 0.0
      %v2804 = vmax.f32 %v2364, 0.0
      %v2805 = vmax.f32 %v2369, 0.0
      %v2806 = vmax.f32 %v2372, 0.0
      %v2807 = vmax.f32 %v2377, 0.0
      %v2808 = vmax.f32 %v2380, 0.0
      %v2809 = vmax.f32 %v2385, 0.0
      %v2810 = vmax.f32 %v2388, 0.0
      %v2811 = vmax.f32 %v2393, 0.0
      %v2812 = vmax.f32 %v2396, 0.0
      %v2813 = vmax.f32 %v2401, 0.0
      %v2814 = vmax.f32 %v2404, 0.0
      %v2815 = vmax.f32 %v2409, 0.0
      %v2816 = vmax.f32 %v2412, 0.0
      %v2817 = vmax.f32 %v2417, 0.0
      %v2818 = vmax.f32 %v2420, 0.0
      %v2819 = vmax.f32 %v2425, 0.0
      %v2820 = vmax.f32 %v2428, 0.0
      %v2821 = vmax.f32 %v2433, 0.0
      %v2822 = vmax.f32 %v2436, 0.0
      %v2823 = vmax.f32 %v2441, 0.0
      %v2824 = vmax.f32 %v2444, 0.0
      %v2825 = vmax.f32 %v2449, 0.0
      %v2826 = vmax.f32 %v2452, 0.0
      %v2827 = vmax.f32 %v2457, 0.0
      %v2828 = vmax.f32 %v2460, 0.0
      %v2829 = vmax.f32 %v2465, 0.0
      %v2830 = vmax.f32 %v2468, 0.0
      %v2831 = vmax.f32 %v2473, 0.0
      %v2832 = vmax.f32 %v2476, 0.0
      %v2833 = vmax.f32 %v2481, 0.0
      %v2834 = vmax.f32 %v2484, 0.0
      %v2835 = vmax.f32 %v2489, 0.0
      %v2836 = vmax.f32 %v2492, 0.0
      %v2837 = vmax.f32 %v2497, 0.0
      %v2838 = vmax.f32 %v2500, 0.0
      %v2839 = vmax.f32 %v2505, 0.0
      %v2840 = vmax.f32 %v2508, 0.0
      %v2841 = vmax.f32 %v2513, 0.0
      %v2842 = vmax.f32 %v2516, 0.0
      %v2843 = vmax.f32 %v2521, 0.0
      %v2844 = vmax.f32 %v2524, 0.0
      %v2845 = vmax.f32 %v2529, 0.0
      %v2846 = vmax.f32 %v2532, 0.0
      %v2847 = vmax.f32 %v2537, 0.0
      %v2848 = vmax.f32 %v2540, 0.0
      %v2849 = vmax.f32 %v2545, 0.0
      %v2850 = vmax.f32 %v2548, 0.0
      %v2851 = vmax.f32 %v2553, 0.0
      %v2852 = vmax.f32 %v2556, 0.0
      %v2853 = vmax.f32 %v2561, 0.0
      %v2854 = vmax.f32 %v2564, 0.0
      %v2855 = vmax.f32 %v2569, 0.0
      %v2856 = vmax.f32 %v2572, 0.0
      %v2857 = vmax.f32 %v2577, 0.0
      %v2858 = vmax.f32 %v2580, 0.0
      %v2859 = vmax.f32 %v2585, 0.0
      %v2860 = vmax.f32 %v2588, 0.0
      %v2861 = vmax.f32 %v2593, 0.0
      %v2862 = vmax.f32 %v2596, 0.0
      %v2863 = vmax.f32 %v2601, 0.0
      %v2864 = vmax.f32 %v2604, 0.0
      %v2865 = vmax.f32 %v2609, 0.0
      %v2866 = vmax.f32 %v2612, 0.0
      %v2867 = vmax.f32 %v2617, 0.0
      %v2868 = vmax.f32 %v2620, 0.0
      %v2869 = vmax.f32 %v2625, 0.0
      %v2870 = vmax.f32 %v2628, 0.0
      %v2871 = vmax.f32 %v2633, 0.0
      %v2872 = vmax.f32 %v2636, 0.0
      %v2873 = vmax.f32 %v2641, 0.0
      %v2874 = vmax.f32 %v2644, 0.0
      %v2875 = vmax.f32 %v2649, 0.0
      %v2876 = vmax.f32 %v2652, 0.0
      %v2877 = vmax.f32 %v2657, 0.0
      %v2878 = vmax.f32 %v2660, 0.0
      %v2879 = vmax.f32 %v2665, 0.0
      %v2880 = vmax.f32 %v2668, 0.0
      %v2881 = vmax.f32 %v2673, 0.0
      %v2882 = vmax.f32 %v2676, 0.0
      %v2883 = vmax.f32 %v2681, 0.0
      %v2884 = vmax.f32 %v2684, 0.0
      %v2885 = vmax.f32 %v2689, 0.0
      %v2886 = vmax.f32 %v2692, 0.0
      %v2887 = vmax.f32 %v2697, 0.0
      %v2888 = vmax.f32 %v2700, 0.0
      %v2889 = vmax.f32 %v2705, 0.0
      %v2890 = vmax.f32 %v2708, 0.0
      %v2891 = vmax.f32 %v2713, 0.0
      %v2892 = vmax.f32 %v2716, 0.0
      %v2893 = vmax.f32 %v2721, 0.0
      %v2894 = vmax.f32 %v2724, 0.0
      %v2895 = vmax.f32 %v2729, 0.0
      %v2896 = vmax.f32 %v2732, 0.0
      %v2897 = vmax.f32 %v2737, 0.0
      %v2898 = vmax.f32 %v2740, 0.0
      %v2899 = vmax.f32 %v2745, 0.0
      %v2900 = vmax.f32 %v2748, 0.0
      %v2901 = vmax.f32 %v2753, 0.0
      %v2902 = vmax.f32 %v2756, 0.0
      %v2903 = vmax.f32 %v2761, 0.0
      %v2904 = vmax.f32 %v2764, 0.0
      %v2905 = vmax.f32 %v2769, 0.0
      %v2906 = vmax.f32 %v2772, 0.0
      %v2907 = vmax.f32 %v2777, 0.0
      %v2908 = vmax.f32 %v2780, 0.0
      %v2909 = vmax.f32 %v2785, 0.0
      %v2910 = vmax.f32 %v2788, 0.0
      %v2911 = vlaneseq
      %v2912 = vand.u32 %v2911, 127
      %v2913 = vmax.f32 %v2791, %v2795
      %v2914 = vmax.f32 %v2792, %v2796
      %v2915 = vmax.f32 %v2793, %v2797
      %v2916 = vmax.f32 %v2794, %v2798
      %v2917 = vmax.f32 %v2913, %v2915
      %v2918 = vmax.f32 %v2914, %v2916
      %vm2919 = vcmp.ge.s32.totalorder %v2912, 0
      %vm2920 = vcmp.lt.s32.totalorder %v2912, 4
      %vm2921 = vmand %vm2919, %vm2920
      %v2922 = vsel %vm2921, %v2917, 0.0
      %v2923 = vsel %vm2921, %v2918, 0.0
      %v2924 = vmax.f32 %v2799, %v2807
      %v2925 = vmax.f32 %v2800, %v2808
      %v2926 = vmax.f32 %v2801, %v2809
      %v2927 = vmax.f32 %v2802, %v2810
      %v2928 = vmax.f32 %v2803, %v2811
      %v2929 = vmax.f32 %v2804, %v2812
      %v2930 = vmax.f32 %v2805, %v2813
      %v2931 = vmax.f32 %v2806, %v2814
      %v2932 = vmax.f32 %v2924, %v2928
      %v2933 = vmax.f32 %v2925, %v2929
      %v2934 = vmax.f32 %v2926, %v2930
      %v2935 = vmax.f32 %v2927, %v2931
      %v2936 = vmax.f32 %v2932, %v2934
      %v2937 = vmax.f32 %v2933, %v2935
      %vm2938 = vcmp.ge.s32.totalorder %v2912, 4
      %vm2939 = vcmp.lt.s32.totalorder %v2912, 8
      %vm2940 = vmand %vm2938, %vm2939
      %v2941 = vsel %vm2940, %v2936, %v2922
      %v2942 = vsel %vm2940, %v2937, %v2923
      %v2943 = vmax.f32 %v2815, %v2831
      %v2944 = vmax.f32 %v2816, %v2832
      %v2945 = vmax.f32 %v2817, %v2833
      %v2946 = vmax.f32 %v2818, %v2834
      %v2947 = vmax.f32 %v2819, %v2835
      %v2948 = vmax.f32 %v2820, %v2836
      %v2949 = vmax.f32 %v2821, %v2837
      %v2950 = vmax.f32 %v2822, %v2838
      %v2951 = vmax.f32 %v2823, %v2839
      %v2952 = vmax.f32 %v2824, %v2840
      %v2953 = vmax.f32 %v2825, %v2841
      %v2954 = vmax.f32 %v2826, %v2842
      %v2955 = vmax.f32 %v2827, %v2843
      %v2956 = vmax.f32 %v2828, %v2844
      %v2957 = vmax.f32 %v2829, %v2845
      %v2958 = vmax.f32 %v2830, %v2846
      %v2959 = vmax.f32 %v2943, %v2951
      %v2960 = vmax.f32 %v2944, %v2952
      %v2961 = vmax.f32 %v2945, %v2953
      %v2962 = vmax.f32 %v2946, %v2954
      %v2963 = vmax.f32 %v2947, %v2955
      %v2964 = vmax.f32 %v2948, %v2956
      %v2965 = vmax.f32 %v2949, %v2957
      %v2966 = vmax.f32 %v2950, %v2958
      %v2967 = vmax.f32 %v2959, %v2963
      %v2968 = vmax.f32 %v2960, %v2964
      %v2969 = vmax.f32 %v2961, %v2965
      %v2970 = vmax.f32 %v2962, %v2966
      %v2971 = vmax.f32 %v2967, %v2969
      %v2972 = vmax.f32 %v2968, %v2970
      %vm2973 = vcmp.ge.s32.totalorder %v2912, 8
      %vm2974 = vcmp.lt.s32.totalorder %v2912, 12
      %vm2975 = vmand %vm2973, %vm2974
      %v2976 = vsel %vm2975, %v2971, %v2941
      %v2977 = vsel %vm2975, %v2972, %v2942
      %v2978 = vmax.f32 %v2847, %v2879
      %v2979 = vmax.f32 %v2848, %v2880
      %v2980 = vmax.f32 %v2849, %v2881
      %v2981 = vmax.f32 %v2850, %v2882
      %v2982 = vmax.f32 %v2851, %v2883
      %v2983 = vmax.f32 %v2852, %v2884
      %v2984 = vmax.f32 %v2853, %v2885
      %v2985 = vmax.f32 %v2854, %v2886
      %v2986 = vmax.f32 %v2855, %v2887
      %v2987 = vmax.f32 %v2856, %v2888
      %v2988 = vmax.f32 %v2857, %v2889
      %v2989 = vmax.f32 %v2858, %v2890
      %v2990 = vmax.f32 %v2859, %v2891
      %v2991 = vmax.f32 %v2860, %v2892
      %v2992 = vmax.f32 %v2861, %v2893
      %v2993 = vmax.f32 %v2862, %v2894
      %v2994 = vmax.f32 %v2863, %v2895
      %v2995 = vmax.f32 %v2864, %v2896
      %v2996 = vmax.f32 %v2865, %v2897
      %v2997 = vmax.f32 %v2866, %v2898
      %v2998 = vmax.f32 %v2867, %v2899
      %v2999 = vmax.f32 %v2868, %v2900
      %v3000 = vmax.f32 %v2869, %v2901
      %v3001 = vmax.f32 %v2870, %v2902
      %v3002 = vmax.f32 %v2871, %v2903
      %v3003 = vmax.f32 %v2872, %v2904
      %v3004 = vmax.f32 %v2873, %v2905
      %v3005 = vmax.f32 %v2874, %v2906
      %v3006 = vmax.f32 %v2875, %v2907
      %v3007 = vmax.f32 %v2876, %v2908
      %v3008 = vmax.f32 %v2877, %v2909
      %v3009 = vmax.f32 %v2878, %v2910
      %v3010 = vmax.f32 %v2978, %v2994
      %v3011 = vmax.f32 %v2979, %v2995
      %v3012 = vmax.f32 %v2980, %v2996
      %v3013 = vmax.f32 %v2981, %v2997
      %v3014 = vmax.f32 %v2982, %v2998
      %v3015 = vmax.f32 %v2983, %v2999
      %v3016 = vmax.f32 %v2984, %v3000
      %v3017 = vmax.f32 %v2985, %v3001
      %v3018 = vmax.f32 %v2986, %v3002
      %v3019 = vmax.f32 %v2987, %v3003
      %v3020 = vmax.f32 %v2988, %v3004
      %v3021 = vmax.f32 %v2989, %v3005
      %v3022 = vmax.f32 %v2990, %v3006
      %v3023 = vmax.f32 %v2991, %v3007
      %v3024 = vmax.f32 %v2992, %v3008
      %v3025 = vmax.f32 %v2993, %v3009
      %v3026 = vmax.f32 %v3010, %v3018
      %v3027 = vmax.f32 %v3011, %v3019
      %v3028 = vmax.f32 %v3012, %v3020
      %v3029 = vmax.f32 %v3013, %v3021
      %v3030 = vmax.f32 %v3014, %v3022
      %v3031 = vmax.f32 %v3015, %v3023
      %v3032 = vmax.f32 %v3016, %v3024
      %v3033 = vmax.f32 %v3017, %v3025
      %v3034 = vmax.f32 %v3026, %v3030
      %v3035 = vmax.f32 %v3027, %v3031
      %v3036 = vmax.f32 %v3028, %v3032
      %v3037 = vmax.f32 %v3029, %v3033
      %v3038 = vmax.f32 %v3034, %v3036
      %v3039 = vmax.f32 %v3035, %v3037
      %vm3040 = vcmp.ge.s32.totalorder %v2912, 12
      %vm3041 = vcmp.lt.s32.totalorder %v2912, 16
      %vm3042 = vmand %vm3040, %vm3041
      %v3043 = vsel %vm3042, %v3038, %v2976
      %v3044 = vsel %vm3042, %v3039, %v2977
      %v3045 = vpack.c.bf16 %v3044, %v3043
      %v3046 = vld [vmem:[%s1 + $0xc0] sm:$0xf]
      %v3047 = vld [vmem:[%s1 + $0xc4] sm:$0xf]
      %v3048 = vld [vmem:[%s1 + $0xc8] sm:$0xf]
      %v3049 = vld [vmem:[%s1 + $0xcc] sm:$0xf]
      %v3050 = vld [vmem:[%s1 + $0xd0] sm:$0xf]
      %v3051 = vld [vmem:[%s1 + $0xd4] sm:$0xf]
      %v3052 = vld [vmem:[%s1 + $0xd8] sm:$0xf]
      %v3053 = vld [vmem:[%s1 + $0xdc] sm:$0xf]
      %v3054 = vld [vmem:[%s1 + $0xe0] sm:$0xf]
      %v3055 = vld [vmem:[%s1 + $0xe4] sm:$0xf]
      %v3056 = vld [vmem:[%s1 + $0xe8] sm:$0xf]
      %v3057 = vld [vmem:[%s1 + $0xec] sm:$0xf]
      %v3058 = vld [vmem:[%s1 + $0xf0] sm:$0xf]
      %v3059 = vld [vmem:[%s1 + $0xf4] sm:$0xf]
      %v3060 = vld [vmem:[%s1 + $0xf8] sm:$0xf]
      %v3061 = vld [vmem:[%s1 + $0xfc] sm:$0xf]
      %v3062 = vld [vmem:[%s2 + $0x3] sm:$0x1]
      %v3063 = vlaneseq
      %v3064 = vshrl.u32 %v3063, 7
      %v3065 = vsub.s32 0, %v3064
      %v3066 = vrot.slane %v3062, %v3065
      %v3083 = vunpack.c.l.b16 %v3046
      %v3084 = vunpack.c.l.b16 %v3047
      %v3085 = vunpack.c.l.b16 %v3048
      %v3086 = vunpack.c.l.b16 %v3049
      %v3087 = vunpack.c.l.b16 %v3050
      %v3088 = vunpack.c.l.b16 %v3051
      %v3089 = vunpack.c.l.b16 %v3052
      %v3090 = vunpack.c.l.b16 %v3053
      %v3091 = vunpack.c.l.b16 %v3054
      %v3092 = vunpack.c.l.b16 %v3055
      %v3093 = vunpack.c.l.b16 %v3056
      %v3094 = vunpack.c.l.b16 %v3057
      %v3095 = vunpack.c.l.b16 %v3058
      %v3096 = vunpack.c.l.b16 %v3059
      %v3097 = vunpack.c.l.b16 %v3060
      %v3098 = vunpack.c.l.b16 %v3061
      %v3099 = vpack.c.b16 %v3084, %v3083
      %v3100 = vpack.c.b16 %v3086, %v3085
      %v3101 = vpack.c.b16 %v3088, %v3087
      %v3102 = vpack.c.b16 %v3090, %v3089
      %v3103 = vpack.c.b16 %v3092, %v3091
      %v3104 = vpack.c.b16 %v3094, %v3093
      %v3105 = vpack.c.b16 %v3096, %v3095
      %v3106 = vpack.c.b16 %v3098, %v3097
      %3115 = vmatprep.subr.bf16.mxu0 0
      %3116 = vmatpush1.bf16.msra.mxu0 %v3106
      %3117 = vmatprep.subr.bf16.mxu0 0
      %3118 = vmatpush1.bf16.msra.mxu0 %v3105
      %3119 = vmatprep.subr.bf16.mxu0 0
      %3120 = vmatpush1.bf16.msra.mxu0 %v3104
      %3121 = vmatprep.subr.bf16.mxu0 0
      %3122 = vmatpush1.bf16.msra.mxu0 %v3103
      %3123 = vmatprep.subr.bf16.mxu0 0
      %3124 = vmatpush1.bf16.msra.mxu0 %v3102
      %3125 = vmatprep.subr.bf16.mxu0 0
      %3126 = vmatpush1.bf16.msra.mxu0 %v3101
      %3127 = vmatprep.subr.bf16.mxu0 0
      %3128 = vmatpush1.bf16.msra.mxu0 %v3100
      %3129 = vmatprep.subr.bf16.mxu0 0
      %3130 = vmatpush1.bf16.msra.mxu0 %v3099
      %3131 = vmatprep.subr.bf16.mxu0 0
      %3132 = vmatpush2.bf16.msra.mxu0 0
      %3133 = vmatprep.subr.bf16.mxu0 0
      %3134 = vmatpush2.bf16.msra.mxu0 0
      %3135 = vmatprep.subr.bf16.mxu0 0
      %3136 = vmatpush2.bf16.msra.mxu0 0
      %3137 = vmatprep.subr.bf16.mxu0 0
      %3138 = vmatpush2.bf16.msra.mxu0 0
      %3139 = vmatprep.subr.bf16.mxu0 0
      %3140 = vmatpush2.bf16.msra.mxu0 0
      %3141 = vmatprep.subr.bf16.mxu0 0
      %3142 = vmatpush2.bf16.msra.mxu0 0
      %3143 = vmatprep.subr.bf16.mxu0 0
      %3144 = vmatpush2.bf16.msra.mxu0 0
      %3145 = vmatprep.subr.bf16.mxu0 0
      %3146 = vmatpush2.bf16.msra.mxu0 0
      %3147 = vmatprep.mubr.bf16.mxu0 0
      %3148 = vmatmul.mubr.bf16.gmra.mxu0 %v3045
      %v3149 = vpop.f32.mrf.mxu0
      %v3150 = vadd.f32 %v3066, %v3149
      %v3151 = vpop.f32.mrf.mxu0
      %v3152 = vpop.f32.mrf.mxu0
      %v3153 = vadd.f32 %v3066, %v3152
      %v3154 = vpop.f32.mrf.mxu0
      %3155 = vdwg.mxu0
      %v3156 = vmax.f32 %v3150, 0.0
      %v3157 = vmax.f32 %v3153, 0.0
      %v3158 = vpack.c.bf16 %v3157, %v3156
      %v3159 = vld [vmem:[%s1 + $0x100] sm:$0xf]
      %v3160 = vld [vmem:[%s1 + $0x104] sm:$0xf]
      %v3161 = vld [vmem:[%s1 + $0x108] sm:$0xf]
      %v3162 = vld [vmem:[%s1 + $0x10c] sm:$0xf]
      %v3163 = vld [vmem:[%s1 + $0x110] sm:$0xf]
      %v3164 = vld [vmem:[%s1 + $0x114] sm:$0xf]
      %v3165 = vld [vmem:[%s1 + $0x118] sm:$0xf]
      %v3166 = vld [vmem:[%s1 + $0x11c] sm:$0xf]
      %v3167 = vld [vmem:[%s1 + $0x120] sm:$0xf]
      %v3168 = vld [vmem:[%s1 + $0x124] sm:$0xf]
      %v3169 = vld [vmem:[%s1 + $0x128] sm:$0xf]
      %v3170 = vld [vmem:[%s1 + $0x12c] sm:$0xf]
      %v3171 = vld [vmem:[%s1 + $0x130] sm:$0xf]
      %v3172 = vld [vmem:[%s1 + $0x134] sm:$0xf]
      %v3173 = vld [vmem:[%s1 + $0x138] sm:$0xf]
      %v3174 = vld [vmem:[%s1 + $0x13c] sm:$0xf]
      %v3175 = vld [vmem:[%s2 + $0x4] sm:$0x1]
      %v3176 = vlaneseq
      %v3177 = vshrl.u32 %v3176, 7
      %v3178 = vsub.s32 0, %v3177
      %v3179 = vrot.slane %v3175, %v3178
      %v3196 = vunpack.c.l.b16 %v3159
      %v3197 = vunpack.c.l.b16 %v3160
      %v3198 = vunpack.c.l.b16 %v3161
      %v3199 = vunpack.c.l.b16 %v3162
      %v3200 = vunpack.c.l.b16 %v3163
      %v3201 = vunpack.c.l.b16 %v3164
      %v3202 = vunpack.c.l.b16 %v3165
      %v3203 = vunpack.c.l.b16 %v3166
      %v3204 = vunpack.c.l.b16 %v3167
      %v3205 = vunpack.c.l.b16 %v3168
      %v3206 = vunpack.c.l.b16 %v3169
      %v3207 = vunpack.c.l.b16 %v3170
      %v3208 = vunpack.c.l.b16 %v3171
      %v3209 = vunpack.c.l.b16 %v3172
      %v3210 = vunpack.c.l.b16 %v3173
      %v3211 = vunpack.c.l.b16 %v3174
      %v3212 = vpack.c.b16 %v3197, %v3196
      %v3213 = vpack.c.b16 %v3199, %v3198
      %v3214 = vpack.c.b16 %v3201, %v3200
      %v3215 = vpack.c.b16 %v3203, %v3202
      %v3216 = vpack.c.b16 %v3205, %v3204
      %v3217 = vpack.c.b16 %v3207, %v3206
      %v3218 = vpack.c.b16 %v3209, %v3208
      %v3219 = vpack.c.b16 %v3211, %v3210
      %3228 = vmatprep.subr.bf16.mxu0 0
      %3229 = vmatpush1.bf16.msra.mxu0 %v3219
      %3230 = vmatprep.subr.bf16.mxu0 0
      %3231 = vmatpush1.bf16.msra.mxu0 %v3218
      %3232 = vmatprep.subr.bf16.mxu0 0
      %3233 = vmatpush1.bf16.msra.mxu0 %v3217
      %3234 = vmatprep.subr.bf16.mxu0 0
      %3235 = vmatpush1.bf16.msra.mxu0 %v3216
      %3236 = vmatprep.subr.bf16.mxu0 0
      %3237 = vmatpush1.bf16.msra.mxu0 %v3215
      %3238 = vmatprep.subr.bf16.mxu0 0
      %3239 = vmatpush1.bf16.msra.mxu0 %v3214
      %3240 = vmatprep.subr.bf16.mxu0 0
      %3241 = vmatpush1.bf16.msra.mxu0 %v3213
      %3242 = vmatprep.subr.bf16.mxu0 0
      %3243 = vmatpush1.bf16.msra.mxu0 %v3212
      %3244 = vmatprep.subr.bf16.mxu0 0
      %3245 = vmatpush2.bf16.msra.mxu0 0
      %3246 = vmatprep.subr.bf16.mxu0 0
      %3247 = vmatpush2.bf16.msra.mxu0 0
      %3248 = vmatprep.subr.bf16.mxu0 0
      %3249 = vmatpush2.bf16.msra.mxu0 0
      %3250 = vmatprep.subr.bf16.mxu0 0
      %3251 = vmatpush2.bf16.msra.mxu0 0
      %3252 = vmatprep.subr.bf16.mxu0 0
      %3253 = vmatpush2.bf16.msra.mxu0 0
      %3254 = vmatprep.subr.bf16.mxu0 0
      %3255 = vmatpush2.bf16.msra.mxu0 0
      %3256 = vmatprep.subr.bf16.mxu0 0
      %3257 = vmatpush2.bf16.msra.mxu0 0
      %3258 = vmatprep.subr.bf16.mxu0 0
      %3259 = vmatpush2.bf16.msra.mxu0 0
      %3260 = vmatprep.mubr.bf16.mxu0 0
      %3261 = vmatmul.mubr.bf16.gmra.mxu0 %v3158
      %v3262 = vpop.f32.mrf.mxu0
      %v3263 = vadd.f32 %v3179, %v3262
      %v3264 = vpop.f32.mrf.mxu0
      %v3265 = vpop.f32.mrf.mxu0
      %v3266 = vadd.f32 %v3179, %v3265
      %v3267 = vpop.f32.mrf.mxu0
      %3268 = vdwg.mxu0
      %v3269 = vmax.f32 %v3263, 0.0
      %v3270 = vmax.f32 %v3266, 0.0
      %v3271 = vpack.c.bf16 %v3270, %v3269
      %v3272 = vld [vmem:[%s1 + $0x140] sm:$0xf]
      %v3273 = vld [vmem:[%s1 + $0x144] sm:$0xf]
      %v3274 = vld [vmem:[%s1 + $0x148] sm:$0xf]
      %v3275 = vld [vmem:[%s1 + $0x14c] sm:$0xf]
      %v3276 = vld [vmem:[%s1 + $0x150] sm:$0xf]
      %v3277 = vld [vmem:[%s1 + $0x154] sm:$0xf]
      %v3278 = vld [vmem:[%s1 + $0x158] sm:$0xf]
      %v3279 = vld [vmem:[%s1 + $0x15c] sm:$0xf]
      %v3280 = vld [vmem:[%s1 + $0x160] sm:$0xf]
      %v3281 = vld [vmem:[%s1 + $0x164] sm:$0xf]
      %v3282 = vld [vmem:[%s1 + $0x168] sm:$0xf]
      %v3283 = vld [vmem:[%s1 + $0x16c] sm:$0xf]
      %v3284 = vld [vmem:[%s1 + $0x170] sm:$0xf]
      %v3285 = vld [vmem:[%s1 + $0x174] sm:$0xf]
      %v3286 = vld [vmem:[%s1 + $0x178] sm:$0xf]
      %v3287 = vld [vmem:[%s1 + $0x17c] sm:$0xf]
      %v3288 = vld [vmem:[%s2 + $0x5] sm:$0x1]
      %v3289 = vlaneseq
      %v3290 = vshrl.u32 %v3289, 7
      %v3291 = vsub.s32 0, %v3290
      %v3292 = vrot.slane %v3288, %v3291
      %v3309 = vunpack.c.l.b16 %v3272
      %v3310 = vunpack.c.l.b16 %v3273
      %v3311 = vunpack.c.l.b16 %v3274
      %v3312 = vunpack.c.l.b16 %v3275
      %v3313 = vunpack.c.l.b16 %v3276
      %v3314 = vunpack.c.l.b16 %v3277
      %v3315 = vunpack.c.l.b16 %v3278
      %v3316 = vunpack.c.l.b16 %v3279
      %v3317 = vunpack.c.l.b16 %v3280
      %v3318 = vunpack.c.l.b16 %v3281
      %v3319 = vunpack.c.l.b16 %v3282
      %v3320 = vunpack.c.l.b16 %v3283
      %v3321 = vunpack.c.l.b16 %v3284
      %v3322 = vunpack.c.l.b16 %v3285
      %v3323 = vunpack.c.l.b16 %v3286
      %v3324 = vunpack.c.l.b16 %v3287
      %v3325 = vpack.c.b16 %v3310, %v3309
      %v3326 = vpack.c.b16 %v3312, %v3311
      %v3327 = vpack.c.b16 %v3314, %v3313
      %v3328 = vpack.c.b16 %v3316, %v3315
      %v3329 = vpack.c.b16 %v3318, %v3317
      %v3330 = vpack.c.b16 %v3320, %v3319
      %v3331 = vpack.c.b16 %v3322, %v3321
      %v3332 = vpack.c.b16 %v3324, %v3323
      %3341 = vmatprep.subr.bf16.mxu0 0
      %3342 = vmatpush1.bf16.msra.mxu0 %v3332
      %3343 = vmatprep.subr.bf16.mxu0 0
      %3344 = vmatpush1.bf16.msra.mxu0 %v3331
      %3345 = vmatprep.subr.bf16.mxu0 0
      %3346 = vmatpush1.bf16.msra.mxu0 %v3330
      %3347 = vmatprep.subr.bf16.mxu0 0
      %3348 = vmatpush1.bf16.msra.mxu0 %v3329
      %3349 = vmatprep.subr.bf16.mxu0 0
      %3350 = vmatpush1.bf16.msra.mxu0 %v3328
      %3351 = vmatprep.subr.bf16.mxu0 0
      %3352 = vmatpush1.bf16.msra.mxu0 %v3327
      %3353 = vmatprep.subr.bf16.mxu0 0
      %3354 = vmatpush1.bf16.msra.mxu0 %v3326
      %3355 = vmatprep.subr.bf16.mxu0 0
      %3356 = vmatpush1.bf16.msra.mxu0 %v3325
      %3357 = vmatprep.subr.bf16.mxu0 0
      %3358 = vmatpush2.bf16.msra.mxu0 0
      %3359 = vmatprep.subr.bf16.mxu0 0
      %3360 = vmatpush2.bf16.msra.mxu0 0
      %3361 = vmatprep.subr.bf16.mxu0 0
      %3362 = vmatpush2.bf16.msra.mxu0 0
      %3363 = vmatprep.subr.bf16.mxu0 0
      %3364 = vmatpush2.bf16.msra.mxu0 0
      %3365 = vmatprep.subr.bf16.mxu0 0
      %3366 = vmatpush2.bf16.msra.mxu0 0
      %3367 = vmatprep.subr.bf16.mxu0 0
      %3368 = vmatpush2.bf16.msra.mxu0 0
      %3369 = vmatprep.subr.bf16.mxu0 0
      %3370 = vmatpush2.bf16.msra.mxu0 0
      %3371 = vmatprep.subr.bf16.mxu0 0
      %3372 = vmatpush2.bf16.msra.mxu0 0
      %3373 = vmatprep.mubr.bf16.mxu0 0
      %3374 = vmatmul.mubr.bf16.gmra.mxu0 %v3271
      %v3375 = vpop.f32.mrf.mxu0
      %v3376 = vadd.f32 %v3292, %v3375
      %v3377 = vpop.f32.mrf.mxu0
      %v3378 = vpop.f32.mrf.mxu0
      %v3379 = vadd.f32 %v3292, %v3378
      %v3380 = vpop.f32.mrf.mxu0
      %3381 = vdwg.mxu0
      %v3382 = vmax.f32 %v3376, 0.0
      %v3383 = vmax.f32 %v3379, 0.0
      %v3384 = vpack.c.bf16 %v3383, %v3382
      %v3385 = vld [vmem:[%s1 + $0x180] sm:$0xf]
      %v3386 = vld [vmem:[%s1 + $0x184] sm:$0xf]
      %v3387 = vld [vmem:[%s1 + $0x188] sm:$0xf]
      %v3388 = vld [vmem:[%s1 + $0x18c] sm:$0xf]
      %v3389 = vld [vmem:[%s1 + $0x190] sm:$0xf]
      %v3390 = vld [vmem:[%s1 + $0x194] sm:$0xf]
      %v3391 = vld [vmem:[%s1 + $0x198] sm:$0xf]
      %v3392 = vld [vmem:[%s1 + $0x19c] sm:$0xf]
      %v3393 = vld [vmem:[%s1 + $0x1a0] sm:$0xf]
      %v3394 = vld [vmem:[%s1 + $0x1a4] sm:$0xf]
      %v3395 = vld [vmem:[%s1 + $0x1a8] sm:$0xf]
      %v3396 = vld [vmem:[%s1 + $0x1ac] sm:$0xf]
      %v3397 = vld [vmem:[%s1 + $0x1b0] sm:$0xf]
      %v3398 = vld [vmem:[%s1 + $0x1b4] sm:$0xf]
      %v3399 = vld [vmem:[%s1 + $0x1b8] sm:$0xf]
      %v3400 = vld [vmem:[%s1 + $0x1bc] sm:$0xf]
      %v3417 = vunpack.c.l.b16 %v3385
      %v3418 = vunpack.c.l.b16 %v3386
      %v3419 = vunpack.c.l.b16 %v3387
      %v3420 = vunpack.c.l.b16 %v3388
      %v3421 = vunpack.c.l.b16 %v3389
      %v3422 = vunpack.c.l.b16 %v3390
      %v3423 = vunpack.c.l.b16 %v3391
      %v3424 = vunpack.c.l.b16 %v3392
      %v3425 = vunpack.c.l.b16 %v3393
      %v3426 = vunpack.c.l.b16 %v3394
      %v3427 = vunpack.c.l.b16 %v3395
      %v3428 = vunpack.c.l.b16 %v3396
      %v3429 = vunpack.c.l.b16 %v3397
      %v3430 = vunpack.c.l.b16 %v3398
      %v3431 = vunpack.c.l.b16 %v3399
      %v3432 = vunpack.c.l.b16 %v3400
      %v3433 = vpack.c.b16 %v3418, %v3417
      %v3434 = vpack.c.b16 %v3420, %v3419
      %v3435 = vpack.c.b16 %v3422, %v3421
      %v3436 = vpack.c.b16 %v3424, %v3423
      %v3437 = vpack.c.b16 %v3426, %v3425
      %v3438 = vpack.c.b16 %v3428, %v3427
      %v3439 = vpack.c.b16 %v3430, %v3429
      %v3440 = vpack.c.b16 %v3432, %v3431
      %3449 = vmatprep.subr.bf16.mxu0 0
      %3450 = vmatpush1.bf16.msra.mxu0 %v3440
      %3451 = vmatprep.subr.bf16.mxu0 0
      %3452 = vmatpush1.bf16.msra.mxu0 %v3439
      %3453 = vmatprep.subr.bf16.mxu0 0
      %3454 = vmatpush1.bf16.msra.mxu0 %v3438
      %3455 = vmatprep.subr.bf16.mxu0 0
      %3456 = vmatpush1.bf16.msra.mxu0 %v3437
      %3457 = vmatprep.subr.bf16.mxu0 0
      %3458 = vmatpush1.bf16.msra.mxu0 %v3436
      %3459 = vmatprep.subr.bf16.mxu0 0
      %3460 = vmatpush1.bf16.msra.mxu0 %v3435
      %3461 = vmatprep.subr.bf16.mxu0 0
      %3462 = vmatpush1.bf16.msra.mxu0 %v3434
      %3463 = vmatprep.subr.bf16.mxu0 0
      %3464 = vmatpush1.bf16.msra.mxu0 %v3433
      %3465 = vmatprep.subr.bf16.mxu0 0
      %3466 = vmatpush2.bf16.msra.mxu0 0
      %3467 = vmatprep.subr.bf16.mxu0 0
      %3468 = vmatpush2.bf16.msra.mxu0 0
      %3469 = vmatprep.subr.bf16.mxu0 0
      %3470 = vmatpush2.bf16.msra.mxu0 0
      %3471 = vmatprep.subr.bf16.mxu0 0
      %3472 = vmatpush2.bf16.msra.mxu0 0
      %3473 = vmatprep.subr.bf16.mxu0 0
      %3474 = vmatpush2.bf16.msra.mxu0 0
      %3475 = vmatprep.subr.bf16.mxu0 0
      %3476 = vmatpush2.bf16.msra.mxu0 0
      %3477 = vmatprep.subr.bf16.mxu0 0
      %3478 = vmatpush2.bf16.msra.mxu0 0
      %3479 = vmatprep.subr.bf16.mxu0 0
      %3480 = vmatpush2.bf16.msra.mxu0 0
      %3481 = vmatprep.mubr.bf16.mxu0 0
      %3482 = vmatmul.mubr.bf16.gmra.mxu0 %v3384
      %v3483 = vpop.f32.mrf.mxu0
      %v3484 = vadd.f32 0.0, %v3483
      %v3485 = vpop.f32.mrf.mxu0
      %v3486 = vpop.f32.mrf.mxu0
      %v3487 = vadd.f32 0.0, %v3486
      %v3488 = vpop.f32.mrf.mxu0
      %3489 = vdwg.mxu0
      %s3490 = smul.u32 %s19, 16
      %s3491 = scalar_lea.vmem [#allocation2], %s3490
      %3492 = vst [vmem:[%s3491] sm:$0xff] %v3484
      %3493 = vst [vmem:[%s3491 + $0x8] sm:$0xff] %v3487
      %v3494 = vld [vmem:[#allocation3] sm:$0x1]
      %v3495 = vmax.f32 %v3382, %v3383
      %v3496 = vrot.slane %v3495, 4
      %v3497 = vmax.f32 %v3495, %v3496
      %v3498 = vrot.slane %v3497, 2
      %v3499 = vmax.f32 %v3497, %v3498
      %v3500 = vrot.slane %v3499, 1
      %v3501 = vmax.f32 %v3499, %v3500
      %v3502 = vmax.f32 %v3494, %v3501
      %3503 = vst [vmem:[#allocation3] sm:$0x1] %v3502
      %p3504 = scmp.eq.s32.totalorder %s19, 3
      // Predicated region
      $region37: #{flow_decoder_forward.1} parent=31 // pred_check
        %p3505 = pneg %p3504
      $region38: #{flow_decoder_forward.1} parent=31 // pred_check_branch
        %3507 = sbr.rel (%p3505) target = $region40
      $region39: #{flow_decoder_forward.1} parent=31 // pred_region
        %v3508 = vld [vmem:[#allocation3] sm:$0x1]
        %v3509 = vpack.c.bf16 %v3508, %v3508
        %v3510 = vld [vmem:[%s1 + $0x1c0] sm:$0xf]
        %v3511 = vld [vmem:[%s1 + $0x1c4] sm:$0xf]
        %v3512 = vld [vmem:[%s1 + $0x1c8] sm:$0xf]
        %v3513 = vld [vmem:[%s1 + $0x1cc] sm:$0xf]
        %v3514 = vld [vmem:[%s1 + $0x1d0] sm:$0xf]
        %v3515 = vld [vmem:[%s1 + $0x1d4] sm:$0xf]
        %v3516 = vld [vmem:[%s1 + $0x1d8] sm:$0xf]
        %v3517 = vld [vmem:[%s1 + $0x1dc] sm:$0xf]
        %v3518 = vld [vmem:[%s1 + $0x1e0] sm:$0xf]
        %v3519 = vld [vmem:[%s1 + $0x1e4] sm:$0xf]
        %v3520 = vld [vmem:[%s1 + $0x1e8] sm:$0xf]
        %v3521 = vld [vmem:[%s1 + $0x1ec] sm:$0xf]
        %v3522 = vld [vmem:[%s1 + $0x1f0] sm:$0xf]
        %v3523 = vld [vmem:[%s1 + $0x1f4] sm:$0xf]
        %v3524 = vld [vmem:[%s1 + $0x1f8] sm:$0xf]
        %v3525 = vld [vmem:[%s1 + $0x1fc] sm:$0xf]
        %v3542 = vunpack.c.l.b16 %v3510
        %v3543 = vunpack.c.l.b16 %v3511
        %v3544 = vunpack.c.l.b16 %v3512
        %v3545 = vunpack.c.l.b16 %v3513
        %v3546 = vunpack.c.l.b16 %v3514
        %v3547 = vunpack.c.l.b16 %v3515
        %v3548 = vunpack.c.l.b16 %v3516
        %v3549 = vunpack.c.l.b16 %v3517
        %v3550 = vunpack.c.l.b16 %v3518
        %v3551 = vunpack.c.l.b16 %v3519
        %v3552 = vunpack.c.l.b16 %v3520
        %v3553 = vunpack.c.l.b16 %v3521
        %v3554 = vunpack.c.l.b16 %v3522
        %v3555 = vunpack.c.l.b16 %v3523
        %v3556 = vunpack.c.l.b16 %v3524
        %v3557 = vunpack.c.l.b16 %v3525
        %v3558 = vpack.c.b16 %v3543, %v3542
        %v3559 = vpack.c.b16 %v3545, %v3544
        %v3560 = vpack.c.b16 %v3547, %v3546
        %v3561 = vpack.c.b16 %v3549, %v3548
        %v3562 = vpack.c.b16 %v3551, %v3550
        %v3563 = vpack.c.b16 %v3553, %v3552
        %v3564 = vpack.c.b16 %v3555, %v3554
        %v3565 = vpack.c.b16 %v3557, %v3556
        %3574 = vmatprep.subr.bf16.mxu0 0
        %3575 = vmatpush1.bf16.msra.mxu0 %v3565
        %3576 = vmatprep.subr.bf16.mxu0 0
        %3577 = vmatpush1.bf16.msra.mxu0 %v3564
        %3578 = vmatprep.subr.bf16.mxu0 0
        %3579 = vmatpush1.bf16.msra.mxu0 %v3563
        %3580 = vmatprep.subr.bf16.mxu0 0
        %3581 = vmatpush1.bf16.msra.mxu0 %v3562
        %3582 = vmatprep.subr.bf16.mxu0 0
        %3583 = vmatpush1.bf16.msra.mxu0 %v3561
        %3584 = vmatprep.subr.bf16.mxu0 0
        %3585 = vmatpush1.bf16.msra.mxu0 %v3560
        %3586 = vmatprep.subr.bf16.mxu0 0
        %3587 = vmatpush1.bf16.msra.mxu0 %v3559
        %3588 = vmatprep.subr.bf16.mxu0 0
        %3589 = vmatpush1.bf16.msra.mxu0 %v3558
        %3590 = vmatprep.subr.bf16.mxu0 0
        %3591 = vmatpush2.bf16.msra.mxu0 0
        %3592 = vmatprep.subr.bf16.mxu0 0
        %3593 = vmatpush2.bf16.msra.mxu0 0
        %3594 = vmatprep.subr.bf16.mxu0 0
        %3595 = vmatpush2.bf16.msra.mxu0 0
        %3596 = vmatprep.subr.bf16.mxu0 0
        %3597 = vmatpush2.bf16.msra.mxu0 0
        %3598 = vmatprep.subr.bf16.mxu0 0
        %3599 = vmatpush2.bf16.msra.mxu0 0
        %3600 = vmatprep.subr.bf16.mxu0 0
        %3601 = vmatpush2.bf16.msra.mxu0 0
        %3602 = vmatprep.subr.bf16.mxu0 0
        %3603 = vmatpush2.bf16.msra.mxu0 0
        %3604 = vmatprep.subr.bf16.mxu0 0
        %3605 = vmatpush2.bf16.msra.mxu0 0
        %3606 = vmatprep.mubr.bf16.mxu0 0
        %3607 = vmatmul.mubr.bf16.gmra.mxu0 %v3509
        %v3608 = vpop.f32.mrf.mxu0
        %v3609 = vadd.f32 0.0, %v3608
        %v3610 = vpop.f32.mrf.mxu0
        %v3611 = vpop.f32.mrf.mxu0
        %v3612 = vpop.f32.mrf.mxu0
        %3613 = vdwg.mxu0
        %v3614 = vld [vmem:[#allocation2] sm:$0xff]
        %v3615 = vld [vmem:[#allocation2 + $0x8] sm:$0xff]
        %v3616 = vld [vmem:[#allocation2 + $0x10] sm:$0xff]
        %v3617 = vld [vmem:[#allocation2 + $0x18] sm:$0xff]
        %v3618 = vld [vmem:[#allocation2 + $0x20] sm:$0xff]
        %v3619 = vld [vmem:[#allocation2 + $0x28] sm:$0xff]
        %v3620 = vld [vmem:[#allocation2 + $0x30] sm:$0xff]
        %v3621 = vld [vmem:[#allocation2 + $0x38] sm:$0xff]
        %v3622 = vlaneseq
        %v3623 = vshrl.u32 %v3622, 7
        %v3624 = vsub.s32 0, %v3623
        %v3625 = vrot.slane %v3609, %v3624
        %v3626 = vadd.f32 %v3614, %v3625
        %v3627 = vadd.f32 %v3615, %v3625
        %v3628 = vadd.f32 %v3616, %v3625
        %v3629 = vadd.f32 %v3617, %v3625
        %v3630 = vadd.f32 %v3618, %v3625
        %v3631 = vadd.f32 %v3619, %v3625
        %v3632 = vadd.f32 %v3620, %v3625
        %v3633 = vadd.f32 %v3621, %v3625
        %v3634 = vld [vmem:[%s2 + $0x6] sm:$0x1]
        %v3635 = vlaneseq
        %v3636 = vshrl.u32 %v3635, 7
        %v3637 = vsub.s32 0, %v3636
        %v3638 = vrot.slane %v3634, %v3637
        %v3639 = vadd.f32 %v3626, %v3638
        %v3640 = vadd.f32 %v3627, %v3638
        %v3641 = vadd.f32 %v3628, %v3638
        %v3642 = vadd.f32 %v3629, %v3638
        %v3643 = vadd.f32 %v3630, %v3638
        %v3644 = vadd.f32 %v3631, %v3638
        %v3645 = vadd.f32 %v3632, %v3638
        %v3646 = vadd.f32 %v3633, %v3638
        %v3647 = vmax.f32 %v3639, 0.0
        %v3648 = vmax.f32 %v3640, 0.0
        %v3649 = vmax.f32 %v3641, 0.0
        %v3650 = vmax.f32 %v3642, 0.0
        %v3651 = vmax.f32 %v3643, 0.0
        %v3652 = vmax.f32 %v3644, 0.0
        %v3653 = vmax.f32 %v3645, 0.0
        %v3654 = vmax.f32 %v3646, 0.0
        %v3655 = vpack.c.bf16 %v3648, %v3647
        %v3656 = vpack.c.bf16 %v3650, %v3649
        %v3657 = vpack.c.bf16 %v3652, %v3651
        %v3658 = vpack.c.bf16 %v3654, %v3653
        %v3659 = vld [vmem:[%s1 + $0x200] sm:$0xf]
        %v3660 = vld [vmem:[%s1 + $0x204] sm:$0xf]
        %v3661 = vld [vmem:[%s1 + $0x208] sm:$0xf]
        %v3662 = vld [vmem:[%s1 + $0x20c] sm:$0xf]
        %v3663 = vld [vmem:[%s1 + $0x210] sm:$0xf]
        %v3664 = vld [vmem:[%s1 + $0x214] sm:$0xf]
        %v3665 = vld [vmem:[%s1 + $0x218] sm:$0xf]
        %v3666 = vld [vmem:[%s1 + $0x21c] sm:$0xf]
        %v3667 = vld [vmem:[%s1 + $0x220] sm:$0xf]
        %v3668 = vld [vmem:[%s1 + $0x224] sm:$0xf]
        %v3669 = vld [vmem:[%s1 + $0x228] sm:$0xf]
        %v3670 = vld [vmem:[%s1 + $0x22c] sm:$0xf]
        %v3671 = vld [vmem:[%s1 + $0x230] sm:$0xf]
        %v3672 = vld [vmem:[%s1 + $0x234] sm:$0xf]
        %v3673 = vld [vmem:[%s1 + $0x238] sm:$0xf]
        %v3674 = vld [vmem:[%s1 + $0x23c] sm:$0xf]
        %v3675 = vld [vmem:[%s2 + $0x7] sm:$0x1]
        %v3676 = vlaneseq
        %v3677 = vshrl.u32 %v3676, 7
        %v3678 = vsub.s32 0, %v3677
        %v3679 = vrot.slane %v3675, %v3678
        %v3696 = vunpack.c.l.b16 %v3659
        %v3697 = vunpack.c.l.b16 %v3660
        %v3698 = vunpack.c.l.b16 %v3661
        %v3699 = vunpack.c.l.b16 %v3662
        %v3700 = vunpack.c.l.b16 %v3663
        %v3701 = vunpack.c.l.b16 %v3664
        %v3702 = vunpack.c.l.b16 %v3665
        %v3703 = vunpack.c.l.b16 %v3666
        %v3704 = vunpack.c.l.b16 %v3667
        %v3705 = vunpack.c.l.b16 %v3668
        %v3706 = vunpack.c.l.b16 %v3669
        %v3707 = vunpack.c.l.b16 %v3670
        %v3708 = vunpack.c.l.b16 %v3671
        %v3709 = vunpack.c.l.b16 %v3672
        %v3710 = vunpack.c.l.b16 %v3673
        %v3711 = vunpack.c.l.b16 %v3674
        %v3712 = vpack.c.b16 %v3697, %v3696
        %v3713 = vpack.c.b16 %v3699, %v3698
        %v3714 = vpack.c.b16 %v3701, %v3700
        %v3715 = vpack.c.b16 %v3703, %v3702
        %v3716 = vpack.c.b16 %v3705, %v3704
        %v3717 = vpack.c.b16 %v3707, %v3706
        %v3718 = vpack.c.b16 %v3709, %v3708
        %v3719 = vpack.c.b16 %v3711, %v3710
        %3728 = vmatprep.subr.bf16.mxu0 0
        %3729 = vmatpush1.bf16.msra.mxu0 %v3719
        %3730 = vmatprep.subr.bf16.mxu0 0
        %3731 = vmatpush1.bf16.msra.mxu0 %v3718
        %3732 = vmatprep.subr.bf16.mxu0 0
        %3733 = vmatpush1.bf16.msra.mxu0 %v3717
        %3734 = vmatprep.subr.bf16.mxu0 0
        %3735 = vmatpush1.bf16.msra.mxu0 %v3716
        %3736 = vmatprep.subr.bf16.mxu0 0
        %3737 = vmatpush1.bf16.msra.mxu0 %v3715
        %3738 = vmatprep.subr.bf16.mxu0 0
        %3739 = vmatpush1.bf16.msra.mxu0 %v3714
        %3740 = vmatprep.subr.bf16.mxu0 0
        %3741 = vmatpush1.bf16.msra.mxu0 %v3713
        %3742 = vmatprep.subr.bf16.mxu0 0
        %3743 = vmatpush1.bf16.msra.mxu0 %v3712
        %3744 = vmatprep.subr.bf16.mxu0 0
        %3745 = vmatpush2.bf16.msra.mxu0 0
        %3746 = vmatprep.subr.bf16.mxu0 0
        %3747 = vmatpush2.bf16.msra.mxu0 0
        %3748 = vmatprep.subr.bf16.mxu0 0
        %3749 = vmatpush2.bf16.msra.mxu0 0
        %3750 = vmatprep.subr.bf16.mxu0 0
        %3751 = vmatpush2.bf16.msra.mxu0 0
        %3752 = vmatprep.subr.bf16.mxu0 0
        %3753 = vmatpush2.bf16.msra.mxu0 0
        %3754 = vmatprep.subr.bf16.mxu0 0
        %3755 = vmatpush2.bf16.msra.mxu0 0
        %3756 = vmatprep.subr.bf16.mxu0 0
        %3757 = vmatpush2.bf16.msra.mxu0 0
        %3758 = vmatprep.subr.bf16.mxu0 0
        %3759 = vmatpush2.bf16.msra.mxu0 0
        %3760 = vmatprep.mubr.bf16.mxu0 0
        %3761 = vmatmul.mubr.bf16.gmra.mxu0 %v3655
        %v3762 = vpop.f32.mrf.mxu0
        %v3763 = vadd.f32 %v3679, %v3762
        %v3764 = vpop.f32.mrf.mxu0
        %v3765 = vpop.f32.mrf.mxu0
        %v3766 = vadd.f32 %v3679, %v3765
        %v3767 = vpop.f32.mrf.mxu0
        %3768 = vmatprep.mubr.bf16.mxu0 0
        %3769 = vmatmul.mubr.bf16.gmra.mxu0 %v3656
        %v3770 = vpop.f32.mrf.mxu0
        %v3771 = vadd.f32 %v3679, %v3770
        %v3772 = vpop.f32.mrf.mxu0
        %v3773 = vpop.f32.mrf.mxu0
        %v3774 = vadd.f32 %v3679, %v3773
        %v3775 = vpop.f32.mrf.mxu0
        %3776 = vmatprep.mubr.bf16.mxu0 0
        %3777 = vmatmul.mubr.bf16.gmra.mxu0 %v3657
        %v3778 = vpop.f32.mrf.mxu0
        %v3779 = vadd.f32 %v3679, %v3778
        %v3780 = vpop.f32.mrf.mxu0
        %v3781 = vpop.f32.mrf.mxu0
        %v3782 = vadd.f32 %v3679, %v3781
        %v3783 = vpop.f32.mrf.mxu0
        %3784 = vmatprep.mubr.bf16.mxu0 0
        %3785 = vmatmul.mubr.bf16.gmra.mxu0 %v3658
        %v3786 = vpop.f32.mrf.mxu0
        %v3787 = vadd.f32 %v3679, %v3786
        %v3788 = vpop.f32.mrf.mxu0
        %v3789 = vpop.f32.mrf.mxu0
        %v3790 = vadd.f32 %v3679, %v3789
        %v3791 = vpop.f32.mrf.mxu0
        %3792 = vdwg.mxu0
        %v3793 = vmax.f32 %v3763, 0.0
        %v3794 = vmax.f32 %v3766, 0.0
        %v3795 = vmax.f32 %v3771, 0.0
        %v3796 = vmax.f32 %v3774, 0.0
        %v3797 = vmax.f32 %v3779, 0.0
        %v3798 = vmax.f32 %v3782, 0.0
        %v3799 = vmax.f32 %v3787, 0.0
        %v3800 = vmax.f32 %v3790, 0.0
        %v3801 = vpack.c.bf16 %v3794, %v3793
        %v3802 = vpack.c.bf16 %v3796, %v3795
        %v3803 = vpack.c.bf16 %v3798, %v3797
        %v3804 = vpack.c.bf16 %v3800, %v3799
        %v3805 = vld [vmem:[%s1 + $0x240] sm:$0xf]
        %v3806 = vld [vmem:[%s1 + $0x244] sm:$0xf]
        %v3807 = vld [vmem:[%s1 + $0x248] sm:$0xf]
        %v3808 = vld [vmem:[%s1 + $0x24c] sm:$0xf]
        %v3809 = vld [vmem:[%s1 + $0x250] sm:$0xf]
        %v3810 = vld [vmem:[%s1 + $0x254] sm:$0xf]
        %v3811 = vld [vmem:[%s1 + $0x258] sm:$0xf]
        %v3812 = vld [vmem:[%s1 + $0x25c] sm:$0xf]
        %v3813 = vld [vmem:[%s1 + $0x260] sm:$0xf]
        %v3814 = vld [vmem:[%s1 + $0x264] sm:$0xf]
        %v3815 = vld [vmem:[%s1 + $0x268] sm:$0xf]
        %v3816 = vld [vmem:[%s1 + $0x26c] sm:$0xf]
        %v3817 = vld [vmem:[%s1 + $0x270] sm:$0xf]
        %v3818 = vld [vmem:[%s1 + $0x274] sm:$0xf]
        %v3819 = vld [vmem:[%s1 + $0x278] sm:$0xf]
        %v3820 = vld [vmem:[%s1 + $0x27c] sm:$0xf]
        %v3821 = vld [vmem:[%s2 + $0x8] sm:$0x1]
        %v3822 = vlaneseq
        %v3823 = vshrl.u32 %v3822, 7
        %v3824 = vsub.s32 0, %v3823
        %v3825 = vrot.slane %v3821, %v3824
        %v3842 = vunpack.c.l.b16 %v3805
        %v3843 = vunpack.c.l.b16 %v3806
        %v3844 = vunpack.c.l.b16 %v3807
        %v3845 = vunpack.c.l.b16 %v3808
        %v3846 = vunpack.c.l.b16 %v3809
        %v3847 = vunpack.c.l.b16 %v3810
        %v3848 = vunpack.c.l.b16 %v3811
        %v3849 = vunpack.c.l.b16 %v3812
        %v3850 = vunpack.c.l.b16 %v3813
        %v3851 = vunpack.c.l.b16 %v3814
        %v3852 = vunpack.c.l.b16 %v3815
        %v3853 = vunpack.c.l.b16 %v3816
        %v3854 = vunpack.c.l.b16 %v3817
        %v3855 = vunpack.c.l.b16 %v3818
        %v3856 = vunpack.c.l.b16 %v3819
        %v3857 = vunpack.c.l.b16 %v3820
        %v3858 = vpack.c.b16 %v3843, %v3842
        %v3859 = vpack.c.b16 %v3845, %v3844
        %v3860 = vpack.c.b16 %v3847, %v3846
        %v3861 = vpack.c.b16 %v3849, %v3848
        %v3862 = vpack.c.b16 %v3851, %v3850
        %v3863 = vpack.c.b16 %v3853, %v3852
        %v3864 = vpack.c.b16 %v3855, %v3854
        %v3865 = vpack.c.b16 %v3857, %v3856
        %3874 = vmatprep.subr.bf16.mxu0 0
        %3875 = vmatpush1.bf16.msra.mxu0 %v3865
        %3876 = vmatprep.subr.bf16.mxu0 0
        %3877 = vmatpush1.bf16.msra.mxu0 %v3864
        %3878 = vmatprep.subr.bf16.mxu0 0
        %3879 = vmatpush1.bf16.msra.mxu0 %v3863
        %3880 = vmatprep.subr.bf16.mxu0 0
        %3881 = vmatpush1.bf16.msra.mxu0 %v3862
        %3882 = vmatprep.subr.bf16.mxu0 0
        %3883 = vmatpush1.bf16.msra.mxu0 %v3861
        %3884 = vmatprep.subr.bf16.mxu0 0
        %3885 = vmatpush1.bf16.msra.mxu0 %v3860
        %3886 = vmatprep.subr.bf16.mxu0 0
        %3887 = vmatpush1.bf16.msra.mxu0 %v3859
        %3888 = vmatprep.subr.bf16.mxu0 0
        %3889 = vmatpush1.bf16.msra.mxu0 %v3858
        %3890 = vmatprep.subr.bf16.mxu0 0
        %3891 = vmatpush2.bf16.msra.mxu0 0
        %3892 = vmatprep.subr.bf16.mxu0 0
        %3893 = vmatpush2.bf16.msra.mxu0 0
        %3894 = vmatprep.subr.bf16.mxu0 0
        %3895 = vmatpush2.bf16.msra.mxu0 0
        %3896 = vmatprep.subr.bf16.mxu0 0
        %3897 = vmatpush2.bf16.msra.mxu0 0
        %3898 = vmatprep.subr.bf16.mxu0 0
        %3899 = vmatpush2.bf16.msra.mxu0 0
        %3900 = vmatprep.subr.bf16.mxu0 0
        %3901 = vmatpush2.bf16.msra.mxu0 0
        %3902 = vmatprep.subr.bf16.mxu0 0
        %3903 = vmatpush2.bf16.msra.mxu0 0
        %3904 = vmatprep.subr.bf16.mxu0 0
        %3905 = vmatpush2.bf16.msra.mxu0 0
        %3906 = vmatprep.mubr.bf16.mxu0 0
        %3907 = vmatmul.mubr.bf16.gmra.mxu0 %v3801
        %v3908 = vpop.f32.mrf.mxu0
        %v3909 = vadd.f32 %v3825, %v3908
        %v3910 = vpop.f32.mrf.mxu0
        %v3911 = vpop.f32.mrf.mxu0
        %v3912 = vadd.f32 %v3825, %v3911
        %v3913 = vpop.f32.mrf.mxu0
        %3914 = vmatprep.mubr.bf16.mxu0 0
        %3915 = vmatmul.mubr.bf16.gmra.mxu0 %v3802
        %v3916 = vpop.f32.mrf.mxu0
        %v3917 = vadd.f32 %v3825, %v3916
        %v3918 = vpop.f32.mrf.mxu0
        %v3919 = vpop.f32.mrf.mxu0
        %v3920 = vadd.f32 %v3825, %v3919
        %v3921 = vpop.f32.mrf.mxu0
        %3922 = vmatprep.mubr.bf16.mxu0 0
        %3923 = vmatmul.mubr.bf16.gmra.mxu0 %v3803
        %v3924 = vpop.f32.mrf.mxu0
        %v3925 = vadd.f32 %v3825, %v3924
        %v3926 = vpop.f32.mrf.mxu0
        %v3927 = vpop.f32.mrf.mxu0
        %v3928 = vadd.f32 %v3825, %v3927
        %v3929 = vpop.f32.mrf.mxu0
        %3930 = vmatprep.mubr.bf16.mxu0 0
        %3931 = vmatmul.mubr.bf16.gmra.mxu0 %v3804
        %v3932 = vpop.f32.mrf.mxu0
        %v3933 = vadd.f32 %v3825, %v3932
        %v3934 = vpop.f32.mrf.mxu0
        %v3935 = vpop.f32.mrf.mxu0
        %v3936 = vadd.f32 %v3825, %v3935
        %v3937 = vpop.f32.mrf.mxu0
        %3938 = vdwg.mxu0
        %v3939 = vmax.f32 %v3909, 0.0
        %v3940 = vmax.f32 %v3912, 0.0
        %v3941 = vmax.f32 %v3917, 0.0
        %v3942 = vmax.f32 %v3920, 0.0
        %v3943 = vmax.f32 %v3925, 0.0
        %v3944 = vmax.f32 %v3928, 0.0
        %v3945 = vmax.f32 %v3933, 0.0
        %v3946 = vmax.f32 %v3936, 0.0
        %v3947 = vpack.c.bf16 %v3940, %v3939
        %v3948 = vpack.c.bf16 %v3942, %v3941
        %v3949 = vpack.c.bf16 %v3944, %v3943
        %v3950 = vpack.c.bf16 %v3946, %v3945
        %v3951 = vld [vmem:[%s1 + $0x280] sm:$0xf]
        %v3952 = vld [vmem:[%s1 + $0x284] sm:$0xf]
        %v3953 = vld [vmem:[%s1 + $0x288] sm:$0xf]
        %v3954 = vld [vmem:[%s1 + $0x28c] sm:$0xf]
        %v3955 = vld [vmem:[%s1 + $0x290] sm:$0xf]
        %v3956 = vld [vmem:[%s1 + $0x294] sm:$0xf]
        %v3957 = vld [vmem:[%s1 + $0x298] sm:$0xf]
        %v3958 = vld [vmem:[%s1 + $0x29c] sm:$0xf]
        %v3959 = vld [vmem:[%s1 + $0x2a0] sm:$0xf]
        %v3960 = vld [vmem:[%s1 + $0x2a4] sm:$0xf]
        %v3961 = vld [vmem:[%s1 + $0x2a8] sm:$0xf]
        %v3962 = vld [vmem:[%s1 + $0x2ac] sm:$0xf]
        %v3963 = vld [vmem:[%s1 + $0x2b0] sm:$0xf]
        %v3964 = vld [vmem:[%s1 + $0x2b4] sm:$0xf]
        %v3965 = vld [vmem:[%s1 + $0x2b8] sm:$0xf]
        %v3966 = vld [vmem:[%s1 + $0x2bc] sm:$0xf]
        %v3967 = vld [vmem:[%s2 + $0x9] sm:$0x1]
        %v3968 = vlaneseq
        %v3969 = vshrl.u32 %v3968, 7
        %v3970 = vsub.s32 0, %v3969
        %v3971 = vrot.slane %v3967, %v3970
        %v3988 = vunpack.c.l.b16 %v3951
        %v3989 = vunpack.c.l.b16 %v3952
        %v3990 = vunpack.c.l.b16 %v3953
        %v3991 = vunpack.c.l.b16 %v3954
        %v3992 = vunpack.c.l.b16 %v3955
        %v3993 = vunpack.c.l.b16 %v3956
        %v3994 = vunpack.c.l.b16 %v3957
        %v3995 = vunpack.c.l.b16 %v3958
        %v3996 = vunpack.c.l.b16 %v3959
        %v3997 = vunpack.c.l.b16 %v3960
        %v3998 = vunpack.c.l.b16 %v3961
        %v3999 = vunpack.c.l.b16 %v3962
        %v4000 = vunpack.c.l.b16 %v3963
        %v4001 = vunpack.c.l.b16 %v3964
        %v4002 = vunpack.c.l.b16 %v3965
        %v4003 = vunpack.c.l.b16 %v3966
        %v4004 = vpack.c.b16 %v3989, %v3988
        %v4005 = vpack.c.b16 %v3991, %v3990
        %v4006 = vpack.c.b16 %v3993, %v3992
        %v4007 = vpack.c.b16 %v3995, %v3994
        %v4008 = vpack.c.b16 %v3997, %v3996
        %v4009 = vpack.c.b16 %v3999, %v3998
        %v4010 = vpack.c.b16 %v4001, %v4000
        %v4011 = vpack.c.b16 %v4003, %v4002
        %4020 = vmatprep.subr.bf16.mxu0 0
        %4021 = vmatpush1.bf16.msra.mxu0 %v4011
        %4022 = vmatprep.subr.bf16.mxu0 0
        %4023 = vmatpush1.bf16.msra.mxu0 %v4010
        %4024 = vmatprep.subr.bf16.mxu0 0
        %4025 = vmatpush1.bf16.msra.mxu0 %v4009
        %4026 = vmatprep.subr.bf16.mxu0 0
        %4027 = vmatpush1.bf16.msra.mxu0 %v4008
        %4028 = vmatprep.subr.bf16.mxu0 0
        %4029 = vmatpush1.bf16.msra.mxu0 %v4007
        %4030 = vmatprep.subr.bf16.mxu0 0
        %4031 = vmatpush1.bf16.msra.mxu0 %v4006
        %4032 = vmatprep.subr.bf16.mxu0 0
        %4033 = vmatpush1.bf16.msra.mxu0 %v4005
        %4034 = vmatprep.subr.bf16.mxu0 0
        %4035 = vmatpush1.bf16.msra.mxu0 %v4004
        %4036 = vmatprep.subr.bf16.mxu0 0
        %4037 = vmatpush2.bf16.msra.mxu0 0
        %4038 = vmatprep.subr.bf16.mxu0 0
        %4039 = vmatpush2.bf16.msra.mxu0 0
        %4040 = vmatprep.subr.bf16.mxu0 0
        %4041 = vmatpush2.bf16.msra.mxu0 0
        %4042 = vmatprep.subr.bf16.mxu0 0
        %4043 = vmatpush2.bf16.msra.mxu0 0
        %4044 = vmatprep.subr.bf16.mxu0 0
        %4045 = vmatpush2.bf16.msra.mxu0 0
        %4046 = vmatprep.subr.bf16.mxu0 0
        %4047 = vmatpush2.bf16.msra.mxu0 0
        %4048 = vmatprep.subr.bf16.mxu0 0
        %4049 = vmatpush2.bf16.msra.mxu0 0
        %4050 = vmatprep.subr.bf16.mxu0 0
        %4051 = vmatpush2.bf16.msra.mxu0 0
        %4052 = vmatprep.mubr.bf16.mxu0 0
        %4053 = vmatmul.mubr.bf16.gmra.mxu0 %v3947
        %v4054 = vpop.f32.mrf.mxu0
        %v4055 = vadd.f32 %v3971, %v4054
        %v4056 = vpop.f32.mrf.mxu0
        %v4057 = vpop.f32.mrf.mxu0
        %v4058 = vadd.f32 %v3971, %v4057
        %v4059 = vpop.f32.mrf.mxu0
        %4060 = vmatprep.mubr.bf16.mxu0 0
        %4061 = vmatmul.mubr.bf16.gmra.mxu0 %v3948
        %v4062 = vpop.f32.mrf.mxu0
        %v4063 = vadd.f32 %v3971, %v4062
        %v4064 = vpop.f32.mrf.mxu0
        %v4065 = vpop.f32.mrf.mxu0
        %v4066 = vadd.f32 %v3971, %v4065
        %v4067 = vpop.f32.mrf.mxu0
        %4068 = vmatprep.mubr.bf16.mxu0 0
        %4069 = vmatmul.mubr.bf16.gmra.mxu0 %v3949
        %v4070 = vpop.f32.mrf.mxu0
        %v4071 = vadd.f32 %v3971, %v4070
        %v4072 = vpop.f32.mrf.mxu0
        %v4073 = vpop.f32.mrf.mxu0
        %v4074 = vadd.f32 %v3971, %v4073
        %v4075 = vpop.f32.mrf.mxu0
        %4076 = vmatprep.mubr.bf16.mxu0 0
        %4077 = vmatmul.mubr.bf16.gmra.mxu0 %v3950
        %v4078 = vpop.f32.mrf.mxu0
        %v4079 = vadd.f32 %v3971, %v4078
        %v4080 = vpop.f32.mrf.mxu0
        %v4081 = vpop.f32.mrf.mxu0
        %v4082 = vadd.f32 %v3971, %v4081
        %v4083 = vpop.f32.mrf.mxu0
        %4084 = vdwg.mxu0
        %4085 = vst [vmem:[%s198] sm:$0xff] %v4055
        %4086 = vst [vmem:[%s198 + $0x8] sm:$0xff] %v4058
        %4087 = vst [vmem:[%s198 + $0x10] sm:$0xff] %v4063
        %4088 = vst [vmem:[%s198 + $0x18] sm:$0xff] %v4066
        %4089 = vst [vmem:[%s198 + $0x20] sm:$0xff] %v4071
        %4090 = vst [vmem:[%s198 + $0x28] sm:$0xff] %v4074
        %4091 = vst [vmem:[%s198 + $0x30] sm:$0xff] %v4079
        %4092 = vst [vmem:[%s198 + $0x38] sm:$0xff] %v4082
      $region40: #{flow_decoder_forward.1} parent=31 // pred_fallthru
        _
      %p4093 = scmp.lt.s32.totalorder %s18, 1
      %s4094 = scalar_select %p4093, %s18, 1
      %s4095 = smul.addr %s4094, 8
      %s4096 = smul.addr %s4095, 8
      %s4097 = scalar_lea.vmem %s3, %s4096
      // Predicated region
      $region41: #{flow_decoder_forward.1} parent=31 // pred_check
        %p4098 = pneg %p114
      $region42: #{flow_decoder_forward.1} parent=31 // pred_check_branch
        %4100 = sbr.rel (%p4098) target = $region44
      $region43: #{flow_decoder_forward.1} parent=31 // pred_region
        _
      $region44: #{flow_decoder_forward.1} parent=31 // pred_fallthru
        _
    $region32: #{flow_decoder_forward.1} parent=5 // pred_fallthru
      _
    %p4101 = scmp.le.s32.totalorder 2, %s9
    // Predicated region
    $region45: #{flow_decoder_forward.1} parent=5 // pred_check
      %p4102 = pneg %p4101
    $region46: #{flow_decoder_forward.1} parent=5 // pred_check_branch
      %4104 = sbr.rel (%p4102) target = $region48
    $region47: #{flow_decoder_forward.1} parent=5 // pred_region
      %s4105 = ssub.s32 %s9, 2
      // Predicated region
      $region49: #{flow_decoder_forward.1} parent=47 // pred_check
        %p4106 = pneg %p120
      $region50: #{flow_decoder_forward.1} parent=47 // pred_check_branch
        %4108 = sbr.rel (%p4106) target = $region52
      $region51: #{flow_decoder_forward.1} parent=47 // pred_region
        %p4109 = scmp.lt.s32.totalorder %s20, 1
        %s4110 = scalar_select %p4109, %s20, 1
        %s4111 = smul.addr %s4110, 8
        %s4112 = smul.addr %s4111, 8
        %s4113 = scalar_lea.vmem %s3, %s4112
      $region52: #{flow_decoder_forward.1} parent=47 // pred_fallthru
        _
    $region48: #{flow_decoder_forward.1} parent=5 // pred_fallthru
      _
  $region6: #{flow_decoder_forward.1} parent=0 // loop_footer
    %s13 = sadd.s32 1, %s9
  $region7: #{flow_decoder_forward.1} parent=0 // loop_footer_branch
    %8 = sbr.rel target = $region3
  $region8: #{flow_decoder_forward.1} parent=0 // loop_exit
    _

</llo_original>
